<compile_context>
chip_gen: v5e
topology: v5e:2x2
jax: 0.10.0
libtpu: 0.0.40
codegen_flags: <defaults>
</compile_context>

<pallas_src>
import jax
import jax.numpy as jnp
from jax.experimental import pallas as pl
from jax.experimental.pallas import tpu as pltpu


# ----------------------------------------------------------------------------
# Fused kernel: GRU recurrence + 1x1 conv + BatchNorm(batch stats) + ReLU.
# PyTorch GRU gate equations (gate order r, z, n):
#   r = sigmoid(W_ir x + b_ir + W_hr h + b_hr)
#   z = sigmoid(W_iz x + b_iz + W_hz h + b_hz)
#   n = tanh  (W_in x + b_in + r * (W_hn h + b_hn))
#   h' = (1 - z) * n + z * h = n + z * (h - n)
# Layout: x rows are time-major, row index = t * N + n with N = B*F.
# Output is emitted transposed as (O, T*N) so the last dim is lane-dense.
# ----------------------------------------------------------------------------
def tgru_fused_kernel(x_ref, h0_ref, wih_ref, whh_ref, bgi_ref, bhn_ref,
                      cw_ref, gamma_ref, beta_ref,
                      out_ref, hlast_ref,
                      gi_scr, y_scr):
    N, H = h0_ref.shape
    TN = x_ref.shape[0]
    T = TN // N
    H2 = 2 * H

    # --- Hoisted input projection for every (t, n) row (bf16 MXU operands,
    #     f32 accumulate).  bgi already contains b_ih + [b_hr, b_hz, 0]. ------
    gi_scr[...] = (
        jnp.dot(x_ref[...].astype(jnp.bfloat16),
                wih_ref[...].astype(jnp.bfloat16),
                preferred_element_type=jnp.float32)
        + bgi_ref[...])

    whh_bf = whh_ref[...].astype(jnp.bfloat16)     # (H, 3H), hoisted, bf16
    bhn = bhn_ref[...]                             # (1, H), stays per-step (n gate)

    # --- Sequential recurrence over time.  Only the (N,H)x(H,3H) matmul, the
    #     gate nonlinearities and one scratch store sit on the serial path. ---
    def step(t, h_prev):
        row = t * N
        gi = gi_scr[pl.ds(row, N), :]                                    # (N, 3H)
        gh = jnp.dot(h_prev.astype(jnp.bfloat16), whh_bf,
                     preferred_element_type=jnp.float32)                 # (N, 3H)
        rz = jax.nn.sigmoid(gi[:, :H2] + gh[:, :H2])   # one sigmoid for r and z
        r = rz[:, :H]
        z = rz[:, H:H2]
        n = jnp.tanh(gi[:, H2:] + r * (gh[:, H2:] + bhn))
        h_new = n + z * (h_prev - n)
        y_scr[pl.ds(row, N), :] = h_new
        return h_new

    h_last = jax.lax.fori_loop(0, T, step, h0_ref[...], unroll=True)
    hlast_ref[...] = h_last

    # --- Epilogue (off the serial path): one (O,H)x(H,TN) conv matmul into a
    #     lane-dense (O, TN) layout, then BatchNorm with training-mode batch
    #     statistics (eps=1e-5, biased variance) + ReLU on the value. Conv bias
    #     omitted: BN's mean subtraction cancels per-channel constants. -------
    y_bf = y_scr[...].astype(jnp.bfloat16)          # (TN, H)
    cw_bf = cw_ref[...].astype(jnp.bfloat16)        # (O, H)
    zt = jax.lax.dot_general(cw_bf, y_bf, (((1,), (1,)), ((), ())),
                             preferred_element_type=jnp.float32)   # (O, TN)
    mean = jnp.mean(zt, axis=1, keepdims=True)                     # (O, 1)
    var = jnp.mean((zt - mean) ** 2, axis=1, keepdims=True)        # biased var
    zn = (zt - mean) * jax.lax.rsqrt(var + 1e-5)
    out_ref[...] = jnp.maximum(zn * gamma_ref[...] + beta_ref[...], 0.0)


def run_tgru_fused(x_tm, h0, w_ih_t, w_hh_t, bias_gi, b_hn, conv_w,
                   gamma_col, beta_col):
    TN, C = x_tm.shape
    N, H = h0.shape
    O = conv_w.shape[0]
    return pl.pallas_call(
        tgru_fused_kernel,
        out_shape=(jax.ShapeDtypeStruct((O, TN), jnp.float32),   # conv+BN+ReLU (transposed)
                   jax.ShapeDtypeStruct((N, H), jnp.float32)),   # final hidden state
        grid_spec=pltpu.PrefetchScalarGridSpec(
            num_scalar_prefetch=0,
            grid=(1,),
            in_specs=[
                pl.BlockSpec((TN, C), lambda i: (0, 0)),         # x, time-major
                pl.BlockSpec((N, H), lambda i: (0, 0)),          # h0
                pl.BlockSpec((C, 3 * H), lambda i: (0, 0)),      # W_ih^T
                pl.BlockSpec((H, 3 * H), lambda i: (0, 0)),      # W_hh^T
                pl.BlockSpec((1, 3 * H), lambda i: (0, 0)),      # b_ih + [b_hr,b_hz,0]
                pl.BlockSpec((1, H), lambda i: (0, 0)),          # b_hn
                pl.BlockSpec((O, H), lambda i: (0, 0)),          # conv W (O,H)
                pl.BlockSpec((O, 1), lambda i: (0, 0)),          # bn gamma
                pl.BlockSpec((O, 1), lambda i: (0, 0)),          # bn beta
            ],
            out_specs=[
                pl.BlockSpec((O, TN), lambda i: (0, 0)),
                pl.BlockSpec((N, H), lambda i: (0, 0)),
            ],
            scratch_shapes=[pltpu.VMEM((TN, 3 * H), jnp.float32),   # Gi
                            pltpu.VMEM((TN, H), jnp.float32)],      # GRU outputs y
        ),
        compiler_params=pltpu.CompilerParams(
            dimension_semantics=("arbitrary",),
            vmem_limit_bytes=32 * 1024 * 1024),
    )(x_tm, h0, w_ih_t, w_hh_t, bias_gi, b_hn, conv_w, gamma_col, beta_col)


# ----------------------------------------------------------------------------
# Full TGRUBlock forward
# ----------------------------------------------------------------------------
def tgru_block_forward(x, rnn_state, params):
    """x: (B, C, T, F) float32; rnn_state: (1, B*F, H) float32."""
    B, C, T, F = x.shape
    H = params["w_hh_t"].shape[0]
    O = params["conv_w"].shape[0]
    N = B * F

    # (B, C, T, F) -> time-major flattened rows (t-major, n = b*F + f).
    x_tm = jnp.transpose(x, (2, 0, 3, 1)).reshape(T * N, C)
    h0 = rnn_state[0]

    # Fold b_ih and the r/z halves of b_hh into the hoisted projection bias;
    # b_hn must remain separate (applied inside r * (W_hn h + b_hn)).
    bias_gi = params["b_ih"] + jnp.concatenate(
        [params["b_hh"][:, :2 * H], jnp.zeros((1, H), jnp.float32)], axis=1)
    b_hn = params["b_hh"][:, 2 * H:]

    z_t, h_last = run_tgru_fused(
        x_tm, h0, params["w_ih_t"], params["w_hh_t"], bias_gi, b_hn,
        params["conv_w"], params["bn_gamma"], params["bn_beta"])

    # (O, T*N) -> (B, O, T, F); column index = t*(B*F) + b*F + f.
    out = jnp.transpose(z_t.reshape(O, T, B, F), (2, 0, 1, 3))
    return out, h_last[None]


def init_params(key, in_channels, hidden_size, out_channels):
    ks = jax.random.split(key, 6)
    scale = 1.0 / jnp.sqrt(hidden_size)
    # GRU weights, stored pre-transposed for x @ W^T style matmuls.
    w_ih_t = jax.random.uniform(ks[0], (in_channels, 3 * hidden_size),
                                minval=-scale, maxval=scale, dtype=jnp.float32)
    w_hh_t = jax.random.uniform(ks[1], (hidden_size, 3 * hidden_size),
                                minval=-scale, maxval=scale, dtype=jnp.float32)
    b_ih = jax.random.uniform(ks[2], (1, 3 * hidden_size),
                              minval=-scale, maxval=scale, dtype=jnp.float32)
    b_hh = jax.random.uniform(ks[3], (1, 3 * hidden_size),
                              minval=-scale, maxval=scale, dtype=jnp.float32)
    # 1x1 conv: PyTorch weight (O, H, 1, 1) -> (O, H).
    cscale = 1.0 / jnp.sqrt(hidden_size)
    conv_w = jax.random.uniform(ks[4], (out_channels, hidden_size),
                                minval=-cscale, maxval=cscale, dtype=jnp.float32)
    conv_b = jax.random.uniform(ks[5], (1, out_channels),
                                minval=-cscale, maxval=cscale, dtype=jnp.float32)
    # BatchNorm default init: gamma=1, beta=0 (stored as (O,1) columns for the
    # transposed in-kernel layout).
    bn_gamma = jnp.ones((out_channels, 1), jnp.float32)
    bn_beta = jnp.zeros((out_channels, 1), jnp.float32)
    return dict(w_ih_t=w_ih_t, w_hh_t=w_hh_t, b_ih=b_ih, b_hh=b_hh,
                conv_w=conv_w, conv_b=conv_b,
                bn_gamma=bn_gamma, bn_beta=bn_beta)


# ----------------------------------------------------------------------------
# Pure-JAX reference (mirrors the PyTorch module, incl. the conv bias, which
# training-mode BN cancels exactly) for a correctness check.
# ----------------------------------------------------------------------------
def reference_forward(x, rnn_state, params):
    B, C, T, F = x.shape
    H = params["w_hh_t"].shape[0]
    hp = jax.lax.Precision.HIGHEST
    x_ = jnp.transpose(x, (0, 3, 2, 1)).reshape(B * F, T, C)
    h = rnn_state[0]
    ys = []
    for t in range(T):
        gi = jnp.dot(x_[:, t, :], params["w_ih_t"], precision=hp) + params["b_ih"]
        gh = jnp.dot(h, params["w_hh_t"], precision=hp) + params["b_hh"]
        r = jax.nn.sigmoid(gi[:, :H] + gh[:, :H])
        z = jax.nn.sigmoid(gi[:, H:2 * H] + gh[:, H:2 * H])
        n = jnp.tanh(gi[:, 2 * H:] + r * gh[:, 2 * H:])
        h = (1.0 - z) * n + z * h
        ys.append(h)
    y = jnp.stack(ys, axis=1)                                   # (N, T, H)
    y2 = jnp.transpose(y.reshape(B, F, T, H), (0, 3, 2, 1))     # (B, H, T, F)
    z_ = jnp.einsum("bhtf,oh->botf", y2, params["conv_w"], precision=hp)
    z_ = z_ + params["conv_b"].reshape(1, -1, 1, 1)
    mean = jnp.mean(z_, axis=(0, 2, 3), keepdims=True)
    var = jnp.mean((z_ - mean) ** 2, axis=(0, 2, 3), keepdims=True)
    zn = (z_ - mean) * jax.lax.rsqrt(var + 1e-5)
    gamma = params["bn_gamma"].reshape(1, -1, 1, 1)
    beta = params["bn_beta"].reshape(1, -1, 1, 1)
    out = jnp.maximum(zn * gamma + beta, 0.0)
    return out, h[None]


if __name__ == "__main__":
    B, C, T, F = 2, 4, 16, 16
    hidden_size, out_channels = 32, 8

    key = jax.random.PRNGKey(0)
    k_x, k_h, k_p = jax.random.split(key, 3)

    x = jax.random.normal(k_x, (B, C, T, F), dtype=jnp.float32)
    rnn_state = jax.random.normal(k_h, (1, B * F, hidden_size), dtype=jnp.float32)
    params = init_params(k_p, C, hidden_size, out_channels)

    fwd = jax.jit(lambda x, h: tgru_block_forward(x, h, params))
    out, new_state = fwd(x, rnn_state)
    jax.block_until_ready((out, new_state))

    assert out.shape == (B, out_channels, T, F), out.shape
    assert new_state.shape == (1, B * F, hidden_size), new_state.shape

    ref_out, ref_state = reference_forward(x, rnn_state, params)
    err_out = float(jnp.max(jnp.abs(out - ref_out)))
    err_h = float(jnp.max(jnp.abs(new_state - ref_state)))
    # Tolerances: kernel uses bf16 MXU operands (per perf review) vs. an f32
    # Precision.HIGHEST reference; training-mode BN divides by a per-channel
    # std ~0.2-0.6, amplifying the absolute error on the normalized output.
    assert err_h < 3e-2 and err_out < 8e-2, (err_out, err_h)

    print("KERNEL_OK")
</pallas_src>

<mosaic_0001>
module attributes {stable_mosaic.version = 11 : i64} {
  func.func @tgru_fused_kernel(%arg0: i32, %arg1: memref<512x4xf32, #tpu.memory_space<vmem>>, %arg2: memref<32x32xf32, #tpu.memory_space<vmem>>, %arg3: memref<4x96xf32, #tpu.memory_space<vmem>>, %arg4: memref<32x96xf32, #tpu.memory_space<vmem>>, %arg5: memref<1x96xf32, #tpu.memory_space<vmem>>, %arg6: memref<1x32xf32, #tpu.memory_space<vmem>>, %arg7: memref<8x32xf32, #tpu.memory_space<vmem>>, %arg8: memref<8x1xf32, #tpu.memory_space<vmem>>, %arg9: memref<8x1xf32, #tpu.memory_space<vmem>>, %arg10: memref<8x512xf32, #tpu.memory_space<vmem>>, %arg11: memref<32x32xf32, #tpu.memory_space<vmem>>, %arg12: memref<512x96xf32, #tpu.memory_space<vmem>>, %arg13: memref<512x32xf32, #tpu.memory_space<vmem>>) attributes {dimension_semantics = [#tpu.dimension_semantics<arbitrary>], iteration_bounds = array<i64: 1>, scalar_prefetch = 0 : i64, scratch_operands = 2 : i64, tpu.core_type = #tpu.core_type<tc>, window_params = [{pipeline_mode = #tpu.pipeline_mode<synchronous>, transform_indices = @transform_0, window_bounds = array<i64: 512, 4>}, {pipeline_mode = #tpu.pipeline_mode<synchronous>, transform_indices = @transform_1, window_bounds = array<i64: 32, 32>}, {pipeline_mode = #tpu.pipeline_mode<synchronous>, transform_indices = @transform_2, window_bounds = array<i64: 4, 96>}, {pipeline_mode = #tpu.pipeline_mode<synchronous>, transform_indices = @transform_3, window_bounds = array<i64: 32, 96>}, {pipeline_mode = #tpu.pipeline_mode<synchronous>, transform_indices = @transform_4, window_bounds = array<i64: 1, 96>}, {pipeline_mode = #tpu.pipeline_mode<synchronous>, transform_indices = @transform_5, window_bounds = array<i64: 1, 32>}, {pipeline_mode = #tpu.pipeline_mode<synchronous>, transform_indices = @transform_6, window_bounds = array<i64: 8, 32>}, {pipeline_mode = #tpu.pipeline_mode<synchronous>, transform_indices = @transform_7, window_bounds = array<i64: 8, 1>}, {pipeline_mode = #tpu.pipeline_mode<synchronous>, transform_indices = @transform_8, window_bounds = array<i64: 8, 1>}, {pipeline_mode = #tpu.pipeline_mode<synchronous>, transform_indices = @transform_9, window_bounds = array<i64: 8, 512>}, {pipeline_mode = #tpu.pipeline_mode<synchronous>, transform_indices = @transform_10, window_bounds = array<i64: 32, 32>}]} {
    %c0 = arith.constant 0 : index
    %c0_0 = arith.constant 0 : index
    %0 = vector.load %arg1[%c0, %c0_0] : memref<512x4xf32, #tpu.memory_space<vmem>>, vector<512x4xf32>
    %1 = arith.truncf %0 : vector<512x4xf32> to vector<512x4xbf16>
    %c0_1 = arith.constant 0 : index
    %c0_2 = arith.constant 0 : index
    %2 = vector.load %arg3[%c0_1, %c0_2] : memref<4x96xf32, #tpu.memory_space<vmem>>, vector<4x96xf32>
    %3 = arith.truncf %2 : vector<4x96xf32> to vector<4x96xbf16>
    %cst = arith.constant dense<0.000000e+00> : vector<512x96xf32>
    %4 = tpu.matmul %1, %3, %cst {dimension_numbers = #tpu.dot_dimension_numbers<[1], [0], [0], [1], [0, 0, 1, 1], [], []>} : vector<512x4xbf16>, vector<4x96xbf16>, vector<512x96xf32> -> vector<512x96xf32>
    %c0_3 = arith.constant 0 : index
    %c0_4 = arith.constant 0 : index
    %5 = vector.load %arg5[%c0_3, %c0_4] : memref<1x96xf32, #tpu.memory_space<vmem>>, vector<1x96xf32>
    %6 = vector.broadcast %5 : vector<1x96xf32> to vector<512x96xf32>
    %7 = arith.addf %4, %6 : vector<512x96xf32>
    %c0_5 = arith.constant 0 : index
    %c0_6 = arith.constant 0 : index
    %8 = vector.load %arg12[%c0_5, %c0_6] : memref<512x96xf32, #tpu.memory_space<vmem>>, vector<512x96xf32>
    tpu.vector_store %arg12[%c0_5, %c0_6], %7 {strides = array<i32>} : memref<512x96xf32, #tpu.memory_space<vmem>>, vector<512x96xf32>,
    %c0_7 = arith.constant 0 : index
    %c0_8 = arith.constant 0 : index
    %9 = vector.load %arg4[%c0_7, %c0_8] : memref<32x96xf32, #tpu.memory_space<vmem>>, vector<32x96xf32>
    %10 = arith.truncf %9 : vector<32x96xf32> to vector<32x96xbf16>
    %c0_9 = arith.constant 0 : index
    %c0_10 = arith.constant 0 : index
    %11 = vector.load %arg6[%c0_9, %c0_10] : memref<1x32xf32, #tpu.memory_space<vmem>>, vector<1x32xf32>
    %c0_11 = arith.constant 0 : index
    %c0_12 = arith.constant 0 : index
    %12 = vector.load %arg2[%c0_11, %c0_12] : memref<32x32xf32, #tpu.memory_space<vmem>>, vector<32x32xf32>
    %c0_i32 = arith.constant 0 : i32
    %c32_i32 = arith.constant 32 : i32
    %13 = arith.muli %c0_i32, %c32_i32 : i32
    %14 = arith.index_cast %13 : i32 to index
    %c0_13 = arith.constant 0 : index
    %15 = vector.load %arg12[%14, %c0_13] : memref<512x96xf32, #tpu.memory_space<vmem>>, vector<32x96xf32>
    %16 = arith.truncf %12 : vector<32x32xf32> to vector<32x32xbf16>
    %cst_14 = arith.constant dense<0.000000e+00> : vector<32x96xf32>
    %17 = tpu.matmul %16, %10, %cst_14 {dimension_numbers = #tpu.dot_dimension_numbers<[1], [0], [0], [1], [0, 0, 1, 1], [], []>} : vector<32x32xbf16>, vector<32x96xbf16>, vector<32x96xf32> -> vector<32x96xf32>
    %18 = vector.extract_strided_slice %15 {offsets = [0, 0], sizes = [32, 64], strides = [1, 1]} : vector<32x96xf32> to vector<32x64xf32>
    %19 = vector.extract_strided_slice %17 {offsets = [0, 0], sizes = [32, 64], strides = [1, 1]} : vector<32x96xf32> to vector<32x64xf32>
    %20 = arith.addf %18, %19 : vector<32x64xf32>
    %21 = arith.negf %20 : vector<32x64xf32>
    %22 = math.exp %21 : vector<32x64xf32>
    %cst_15 = arith.constant 1.000000e+00 : f32
    %23 = vector.broadcast %cst_15 : f32 to vector<32x64xf32>
    %24 = arith.addf %23, %22 : vector<32x64xf32>
    %25 = arith.divf %23, %24 : vector<32x64xf32>
    %26 = vector.extract_strided_slice %25 {offsets = [0, 0], sizes = [32, 32], strides = [1, 1]} : vector<32x64xf32> to vector<32x32xf32>
    %27 = vector.extract_strided_slice %25 {offsets = [0, 32], sizes = [32, 32], strides = [1, 1]} : vector<32x64xf32> to vector<32x32xf32>
    %28 = vector.extract_strided_slice %15 {offsets = [0, 64], sizes = [32, 32], strides = [1, 1]} : vector<32x96xf32> to vector<32x32xf32>
    %29 = vector.extract_strided_slice %17 {offsets = [0, 64], sizes = [32, 32], strides = [1, 1]} : vector<32x96xf32> to vector<32x32xf32>
    %30 = vector.broadcast %11 : vector<1x32xf32> to vector<32x32xf32>
    %31 = arith.addf %29, %30 : vector<32x32xf32>
    %32 = arith.mulf %26, %31 : vector<32x32xf32>
    %33 = arith.addf %28, %32 : vector<32x32xf32>
    %34 = math.tanh %33 : vector<32x32xf32>
    %35 = arith.subf %12, %34 : vector<32x32xf32>
    %36 = arith.mulf %27, %35 : vector<32x32xf32>
    %37 = arith.addf %34, %36 : vector<32x32xf32>
    %38 = arith.index_cast %13 : i32 to index
    %c0_16 = arith.constant 0 : index
    %39 = vector.load %arg13[%38, %c0_16] : memref<512x32xf32, #tpu.memory_space<vmem>>, vector<32x32xf32>
    tpu.vector_store %arg13[%38, %c0_16], %37 {strides = array<i32>} : memref<512x32xf32, #tpu.memory_space<vmem>>, vector<32x32xf32>,
    %c1_i32 = arith.constant 1 : i32
    %c32_i32_17 = arith.constant 32 : i32
    %40 = arith.muli %c1_i32, %c32_i32_17 : i32
    %41 = arith.index_cast %40 : i32 to index
    %c0_18 = arith.constant 0 : index
    %42 = vector.load %arg12[%41, %c0_18] : memref<512x96xf32, #tpu.memory_space<vmem>>, vector<32x96xf32>
    %43 = arith.truncf %37 : vector<32x32xf32> to vector<32x32xbf16>
    %cst_19 = arith.constant dense<0.000000e+00> : vector<32x96xf32>
    %44 = tpu.matmul %43, %10, %cst_19 {dimension_numbers = #tpu.dot_dimension_numbers<[1], [0], [0], [1], [0, 0, 1, 1], [], []>} : vector<32x32xbf16>, vector<32x96xbf16>, vector<32x96xf32> -> vector<32x96xf32>
    %45 = vector.extract_strided_slice %42 {offsets = [0, 0], sizes = [32, 64], strides = [1, 1]} : vector<32x96xf32> to vector<32x64xf32>
    %46 = vector.extract_strided_slice %44 {offsets = [0, 0], sizes = [32, 64], strides = [1, 1]} : vector<32x96xf32> to vector<32x64xf32>
    %47 = arith.addf %45, %46 : vector<32x64xf32>
    %48 = arith.negf %47 : vector<32x64xf32>
    %49 = math.exp %48 : vector<32x64xf32>
    %cst_20 = arith.constant 1.000000e+00 : f32
    %50 = vector.broadcast %cst_20 : f32 to vector<32x64xf32>
    %51 = arith.addf %50, %49 : vector<32x64xf32>
    %52 = arith.divf %50, %51 : vector<32x64xf32>
    %53 = vector.extract_strided_slice %52 {offsets = [0, 0], sizes = [32, 32], strides = [1, 1]} : vector<32x64xf32> to vector<32x32xf32>
    %54 = vector.extract_strided_slice %52 {offsets = [0, 32], sizes = [32, 32], strides = [1, 1]} : vector<32x64xf32> to vector<32x32xf32>
    %55 = vector.extract_strided_slice %42 {offsets = [0, 64], sizes = [32, 32], strides = [1, 1]} : vector<32x96xf32> to vector<32x32xf32>
    %56 = vector.extract_strided_slice %44 {offsets = [0, 64], sizes = [32, 32], strides = [1, 1]} : vector<32x96xf32> to vector<32x32xf32>
    %57 = vector.broadcast %11 : vector<1x32xf32> to vector<32x32xf32>
    %58 = arith.addf %56, %57 : vector<32x32xf32>
    %59 = arith.mulf %53, %58 : vector<32x32xf32>
    %60 = arith.addf %55, %59 : vector<32x32xf32>
    %61 = math.tanh %60 : vector<32x32xf32>
    %62 = arith.subf %37, %61 : vector<32x32xf32>
    %63 = arith.mulf %54, %62 : vector<32x32xf32>
    %64 = arith.addf %61, %63 : vector<32x32xf32>
    %65 = arith.index_cast %40 : i32 to index
    %c0_21 = arith.constant 0 : index
    %66 = vector.load %arg13[%65, %c0_21] : memref<512x32xf32, #tpu.memory_space<vmem>>, vector<32x32xf32>
    tpu.vector_store %arg13[%65, %c0_21], %64 {strides = array<i32>} : memref<512x32xf32, #tpu.memory_space<vmem>>, vector<32x32xf32>,
    %c2_i32 = arith.constant 2 : i32
    %c32_i32_22 = arith.constant 32 : i32
    %67 = arith.muli %c2_i32, %c32_i32_22 : i32
    %68 = arith.index_cast %67 : i32 to index
    %c0_23 = arith.constant 0 : index
    %69 = vector.load %arg12[%68, %c0_23] : memref<512x96xf32, #tpu.memory_space<vmem>>, vector<32x96xf32>
    %70 = arith.truncf %64 : vector<32x32xf32> to vector<32x32xbf16>
    %cst_24 = arith.constant dense<0.000000e+00> : vector<32x96xf32>
    %71 = tpu.matmul %70, %10, %cst_24 {dimension_numbers = #tpu.dot_dimension_numbers<[1], [0], [0], [1], [0, 0, 1, 1], [], []>} : vector<32x32xbf16>, vector<32x96xbf16>, vector<32x96xf32> -> vector<32x96xf32>
    %72 = vector.extract_strided_slice %69 {offsets = [0, 0], sizes = [32, 64], strides = [1, 1]} : vector<32x96xf32> to vector<32x64xf32>
    %73 = vector.extract_strided_slice %71 {offsets = [0, 0], sizes = [32, 64], strides = [1, 1]} : vector<32x96xf32> to vector<32x64xf32>
    %74 = arith.addf %72, %73 : vector<32x64xf32>
    %75 = arith.negf %74 : vector<32x64xf32>
    %76 = math.exp %75 : vector<32x64xf32>
    %cst_25 = arith.constant 1.000000e+00 : f32
    %77 = vector.broadcast %cst_25 : f32 to vector<32x64xf32>
    %78 = arith.addf %77, %76 : vector<32x64xf32>
    %79 = arith.divf %77, %78 : vector<32x64xf32>
    %80 = vector.extract_strided_slice %79 {offsets = [0, 0], sizes = [32, 32], strides = [1, 1]} : vector<32x64xf32> to vector<32x32xf32>
    %81 = vector.extract_strided_slice %79 {offsets = [0, 32], sizes = [32, 32], strides = [1, 1]} : vector<32x64xf32> to vector<32x32xf32>
    %82 = vector.extract_strided_slice %69 {offsets = [0, 64], sizes = [32, 32], strides = [1, 1]} : vector<32x96xf32> to vector<32x32xf32>
    %83 = vector.extract_strided_slice %71 {offsets = [0, 64], sizes = [32, 32], strides = [1, 1]} : vector<32x96xf32> to vector<32x32xf32>
    %84 = vector.broadcast %11 : vector<1x32xf32> to vector<32x32xf32>
    %85 = arith.addf %83, %84 : vector<32x32xf32>
    %86 = arith.mulf %80, %85 : vector<32x32xf32>
    %87 = arith.addf %82, %86 : vector<32x32xf32>
    %88 = math.tanh %87 : vector<32x32xf32>
    %89 = arith.subf %64, %88 : vector<32x32xf32>
    %90 = arith.mulf %81, %89 : vector<32x32xf32>
    %91 = arith.addf %88, %90 : vector<32x32xf32>
    %92 = arith.index_cast %67 : i32 to index
    %c0_26 = arith.constant 0 : index
    %93 = vector.load %arg13[%92, %c0_26] : memref<512x32xf32, #tpu.memory_space<vmem>>, vector<32x32xf32>
    tpu.vector_store %arg13[%92, %c0_26], %91 {strides = array<i32>} : memref<512x32xf32, #tpu.memory_space<vmem>>, vector<32x32xf32>,
    %c3_i32 = arith.constant 3 : i32
    %c32_i32_27 = arith.constant 32 : i32
    %94 = arith.muli %c3_i32, %c32_i32_27 : i32
    %95 = arith.index_cast %94 : i32 to index
    %c0_28 = arith.constant 0 : index
    %96 = vector.load %arg12[%95, %c0_28] : memref<512x96xf32, #tpu.memory_space<vmem>>, vector<32x96xf32>
    %97 = arith.truncf %91 : vector<32x32xf32> to vector<32x32xbf16>
    %cst_29 = arith.constant dense<0.000000e+00> : vector<32x96xf32>
    %98 = tpu.matmul %97, %10, %cst_29 {dimension_numbers = #tpu.dot_dimension_numbers<[1], [0], [0], [1], [0, 0, 1, 1], [], []>} : vector<32x32xbf16>, vector<32x96xbf16>, vector<32x96xf32> -> vector<32x96xf32>
    %99 = vector.extract_strided_slice %96 {offsets = [0, 0], sizes = [32, 64], strides = [1, 1]} : vector<32x96xf32> to vector<32x64xf32>
    %100 = vector.extract_strided_slice %98 {offsets = [0, 0], sizes = [32, 64], strides = [1, 1]} : vector<32x96xf32> to vector<32x64xf32>
    %101 = arith.addf %99, %100 : vector<32x64xf32>
    %102 = arith.negf %101 : vector<32x64xf32>
    %103 = math.exp %102 : vector<32x64xf32>
    %cst_30 = arith.constant 1.000000e+00 : f32
    %104 = vector.broadcast %cst_30 : f32 to vector<32x64xf32>
    %105 = arith.addf %104, %103 : vector<32x64xf32>
    %106 = arith.divf %104, %105 : vector<32x64xf32>
    %107 = vector.extract_strided_slice %106 {offsets = [0, 0], sizes = [32, 32], strides = [1, 1]} : vector<32x64xf32> to vector<32x32xf32>
    %108 = vector.extract_strided_slice %106 {offsets = [0, 32], sizes = [32, 32], strides = [1, 1]} : vector<32x64xf32> to vector<32x32xf32>
    %109 = vector.extract_strided_slice %96 {offsets = [0, 64], sizes = [32, 32], strides = [1, 1]} : vector<32x96xf32> to vector<32x32xf32>
    %110 = vector.extract_strided_slice %98 {offsets = [0, 64], sizes = [32, 32], strides = [1, 1]} : vector<32x96xf32> to vector<32x32xf32>
    %111 = vector.broadcast %11 : vector<1x32xf32> to vector<32x32xf32>
    %112 = arith.addf %110, %111 : vector<32x32xf32>
    %113 = arith.mulf %107, %112 : vector<32x32xf32>
    %114 = arith.addf %109, %113 : vector<32x32xf32>
    %115 = math.tanh %114 : vector<32x32xf32>
    %116 = arith.subf %91, %115 : vector<32x32xf32>
    %117 = arith.mulf %108, %116 : vector<32x32xf32>
    %118 = arith.addf %115, %117 : vector<32x32xf32>
    %119 = arith.index_cast %94 : i32 to index
    %c0_31 = arith.constant 0 : index
    %120 = vector.load %arg13[%119, %c0_31] : memref<512x32xf32, #tpu.memory_space<vmem>>, vector<32x32xf32>
    tpu.vector_store %arg13[%119, %c0_31], %118 {strides = array<i32>} : memref<512x32xf32, #tpu.memory_space<vmem>>, vector<32x32xf32>,
    %c4_i32 = arith.constant 4 : i32
    %c32_i32_32 = arith.constant 32 : i32
    %121 = arith.muli %c4_i32, %c32_i32_32 : i32
    %122 = arith.index_cast %121 : i32 to index
    %c0_33 = arith.constant 0 : index
    %123 = vector.load %arg12[%122, %c0_33] : memref<512x96xf32, #tpu.memory_space<vmem>>, vector<32x96xf32>
    %124 = arith.truncf %118 : vector<32x32xf32> to vector<32x32xbf16>
    %cst_34 = arith.constant dense<0.000000e+00> : vector<32x96xf32>
    %125 = tpu.matmul %124, %10, %cst_34 {dimension_numbers = #tpu.dot_dimension_numbers<[1], [0], [0], [1], [0, 0, 1, 1], [], []>} : vector<32x32xbf16>, vector<32x96xbf16>, vector<32x96xf32> -> vector<32x96xf32>
    %126 = vector.extract_strided_slice %123 {offsets = [0, 0], sizes = [32, 64], strides = [1, 1]} : vector<32x96xf32> to vector<32x64xf32>
    %127 = vector.extract_strided_slice %125 {offsets = [0, 0], sizes = [32, 64], strides = [1, 1]} : vector<32x96xf32> to vector<32x64xf32>
    %128 = arith.addf %126, %127 : vector<32x64xf32>
    %129 = arith.negf %128 : vector<32x64xf32>
    %130 = math.exp %129 : vector<32x64xf32>
    %cst_35 = arith.constant 1.000000e+00 : f32
    %131 = vector.broadcast %cst_35 : f32 to vector<32x64xf32>
    %132 = arith.addf %131, %130 : vector<32x64xf32>
    %133 = arith.divf %131, %132 : vector<32x64xf32>
    %134 = vector.extract_strided_slice %133 {offsets = [0, 0], sizes = [32, 32], strides = [1, 1]} : vector<32x64xf32> to vector<32x32xf32>
    %135 = vector.extract_strided_slice %133 {offsets = [0, 32], sizes = [32, 32], strides = [1, 1]} : vector<32x64xf32> to vector<32x32xf32>
    %136 = vector.extract_strided_slice %123 {offsets = [0, 64], sizes = [32, 32], strides = [1, 1]} : vector<32x96xf32> to vector<32x32xf32>
    %137 = vector.extract_strided_slice %125 {offsets = [0, 64], sizes = [32, 32], strides = [1, 1]} : vector<32x96xf32> to vector<32x32xf32>
    %138 = vector.broadcast %11 : vector<1x32xf32> to vector<32x32xf32>
    %139 = arith.addf %137, %138 : vector<32x32xf32>
    %140 = arith.mulf %134, %139 : vector<32x32xf32>
    %141 = arith.addf %136, %140 : vector<32x32xf32>
    %142 = math.tanh %141 : vector<32x32xf32>
    %143 = arith.subf %118, %142 : vector<32x32xf32>
    %144 = arith.mulf %135, %143 : vector<32x32xf32>
    %145 = arith.addf %142, %144 : vector<32x32xf32>
    %146 = arith.index_cast %121 : i32 to index
    %c0_36 = arith.constant 0 : index
    %147 = vector.load %arg13[%146, %c0_36] : memref<512x32xf32, #tpu.memory_space<vmem>>, vector<32x32xf32>
    tpu.vector_store %arg13[%146, %c0_36], %145 {strides = array<i32>} : memref<512x32xf32, #tpu.memory_space<vmem>>, vector<32x32xf32>,
    %c5_i32 = arith.constant 5 : i32
    %c32_i32_37 = arith.constant 32 : i32
    %148 = arith.muli %c5_i32, %c32_i32_37 : i32
    %149 = arith.index_cast %148 : i32 to index
    %c0_38 = arith.constant 0 : index
    %150 = vector.load %arg12[%149, %c0_38] : memref<512x96xf32, #tpu.memory_space<vmem>>, vector<32x96xf32>
    %151 = arith.truncf %145 : vector<32x32xf32> to vector<32x32xbf16>
    %cst_39 = arith.constant dense<0.000000e+00> : vector<32x96xf32>
    %152 = tpu.matmul %151, %10, %cst_39 {dimension_numbers = #tpu.dot_dimension_numbers<[1], [0], [0], [1], [0, 0, 1, 1], [], []>} : vector<32x32xbf16>, vector<32x96xbf16>, vector<32x96xf32> -> vector<32x96xf32>
    %153 = vector.extract_strided_slice %150 {offsets = [0, 0], sizes = [32, 64], strides = [1, 1]} : vector<32x96xf32> to vector<32x64xf32>
    %154 = vector.extract_strided_slice %152 {offsets = [0, 0], sizes = [32, 64], strides = [1, 1]} : vector<32x96xf32> to vector<32x64xf32>
    %155 = arith.addf %153, %154 : vector<32x64xf32>
    %156 = arith.negf %155 : vector<32x64xf32>
    %157 = math.exp %156 : vector<32x64xf32>
    %cst_40 = arith.constant 1.000000e+00 : f32
    %158 = vector.broadcast %cst_40 : f32 to vector<32x64xf32>
    %159 = arith.addf %158, %157 : vector<32x64xf32>
    %160 = arith.divf %158, %159 : vector<32x64xf32>
    %161 = vector.extract_strided_slice %160 {offsets = [0, 0], sizes = [32, 32], strides = [1, 1]} : vector<32x64xf32> to vector<32x32xf32>
    %162 = vector.extract_strided_slice %160 {offsets = [0, 32], sizes = [32, 32], strides = [1, 1]} : vector<32x64xf32> to vector<32x32xf32>
    %163 = vector.extract_strided_slice %150 {offsets = [0, 64], sizes = [32, 32], strides = [1, 1]} : vector<32x96xf32> to vector<32x32xf32>
    %164 = vector.extract_strided_slice %152 {offsets = [0, 64], sizes = [32, 32], strides = [1, 1]} : vector<32x96xf32> to vector<32x32xf32>
    %165 = vector.broadcast %11 : vector<1x32xf32> to vector<32x32xf32>
    %166 = arith.addf %164, %165 : vector<32x32xf32>
    %167 = arith.mulf %161, %166 : vector<32x32xf32>
    %168 = arith.addf %163, %167 : vector<32x32xf32>
    %169 = math.tanh %168 : vector<32x32xf32>
    %170 = arith.subf %145, %169 : vector<32x32xf32>
    %171 = arith.mulf %162, %170 : vector<32x32xf32>
    %172 = arith.addf %169, %171 : vector<32x32xf32>
    %173 = arith.index_cast %148 : i32 to index
    %c0_41 = arith.constant 0 : index
    %174 = vector.load %arg13[%173, %c0_41] : memref<512x32xf32, #tpu.memory_space<vmem>>, vector<32x32xf32>
    tpu.vector_store %arg13[%173, %c0_41], %172 {strides = array<i32>} : memref<512x32xf32, #tpu.memory_space<vmem>>, vector<32x32xf32>,
    %c6_i32 = arith.constant 6 : i32
    %c32_i32_42 = arith.constant 32 : i32
    %175 = arith.muli %c6_i32, %c32_i32_42 : i32
    %176 = arith.index_cast %175 : i32 to index
    %c0_43 = arith.constant 0 : index
    %177 = vector.load %arg12[%176, %c0_43] : memref<512x96xf32, #tpu.memory_space<vmem>>, vector<32x96xf32>
    %178 = arith.truncf %172 : vector<32x32xf32> to vector<32x32xbf16>
    %cst_44 = arith.constant dense<0.000000e+00> : vector<32x96xf32>
    %179 = tpu.matmul %178, %10, %cst_44 {dimension_numbers = #tpu.dot_dimension_numbers<[1], [0], [0], [1], [0, 0, 1, 1], [], []>} : vector<32x32xbf16>, vector<32x96xbf16>, vector<32x96xf32> -> vector<32x96xf32>
    %180 = vector.extract_strided_slice %177 {offsets = [0, 0], sizes = [32, 64], strides = [1, 1]} : vector<32x96xf32> to vector<32x64xf32>
    %181 = vector.extract_strided_slice %179 {offsets = [0, 0], sizes = [32, 64], strides = [1, 1]} : vector<32x96xf32> to vector<32x64xf32>
    %182 = arith.addf %180, %181 : vector<32x64xf32>
    %183 = arith.negf %182 : vector<32x64xf32>
    %184 = math.exp %183 : vector<32x64xf32>
    %cst_45 = arith.constant 1.000000e+00 : f32
    %185 = vector.broadcast %cst_45 : f32 to vector<32x64xf32>
    %186 = arith.addf %185, %184 : vector<32x64xf32>
    %187 = arith.divf %185, %186 : vector<32x64xf32>
    %188 = vector.extract_strided_slice %187 {offsets = [0, 0], sizes = [32, 32], strides = [1, 1]} : vector<32x64xf32> to vector<32x32xf32>
    %189 = vector.extract_strided_slice %187 {offsets = [0, 32], sizes = [32, 32], strides = [1, 1]} : vector<32x64xf32> to vector<32x32xf32>
    %190 = vector.extract_strided_slice %177 {offsets = [0, 64], sizes = [32, 32], strides = [1, 1]} : vector<32x96xf32> to vector<32x32xf32>
    %191 = vector.extract_strided_slice %179 {offsets = [0, 64], sizes = [32, 32], strides = [1, 1]} : vector<32x96xf32> to vector<32x32xf32>
    %192 = vector.broadcast %11 : vector<1x32xf32> to vector<32x32xf32>
    %193 = arith.addf %191, %192 : vector<32x32xf32>
    %194 = arith.mulf %188, %193 : vector<32x32xf32>
    %195 = arith.addf %190, %194 : vector<32x32xf32>
    %196 = math.tanh %195 : vector<32x32xf32>
    %197 = arith.subf %172, %196 : vector<32x32xf32>
    %198 = arith.mulf %189, %197 : vector<32x32xf32>
    %199 = arith.addf %196, %198 : vector<32x32xf32>
    %200 = arith.index_cast %175 : i32 to index
    %c0_46 = arith.constant 0 : index
    %201 = vector.load %arg13[%200, %c0_46] : memref<512x32xf32, #tpu.memory_space<vmem>>, vector<32x32xf32>
    tpu.vector_store %arg13[%200, %c0_46], %199 {strides = array<i32>} : memref<512x32xf32, #tpu.memory_space<vmem>>, vector<32x32xf32>,
    %c7_i32 = arith.constant 7 : i32
    %c32_i32_47 = arith.constant 32 : i32
    %202 = arith.muli %c7_i32, %c32_i32_47 : i32
    %203 = arith.index_cast %202 : i32 to index
    %c0_48 = arith.constant 0 : index
    %204 = vector.load %arg12[%203, %c0_48] : memref<512x96xf32, #tpu.memory_space<vmem>>, vector<32x96xf32>
    %205 = arith.truncf %199 : vector<32x32xf32> to vector<32x32xbf16>
    %cst_49 = arith.constant dense<0.000000e+00> : vector<32x96xf32>
    %206 = tpu.matmul %205, %10, %cst_49 {dimension_numbers = #tpu.dot_dimension_numbers<[1], [0], [0], [1], [0, 0, 1, 1], [], []>} : vector<32x32xbf16>, vector<32x96xbf16>, vector<32x96xf32> -> vector<32x96xf32>
    %207 = vector.extract_strided_slice %204 {offsets = [0, 0], sizes = [32, 64], strides = [1, 1]} : vector<32x96xf32> to vector<32x64xf32>
    %208 = vector.extract_strided_slice %206 {offsets = [0, 0], sizes = [32, 64], strides = [1, 1]} : vector<32x96xf32> to vector<32x64xf32>
    %209 = arith.addf %207, %208 : vector<32x64xf32>
    %210 = arith.negf %209 : vector<32x64xf32>
    %211 = math.exp %210 : vector<32x64xf32>
    %cst_50 = arith.constant 1.000000e+00 : f32
    %212 = vector.broadcast %cst_50 : f32 to vector<32x64xf32>
    %213 = arith.addf %212, %211 : vector<32x64xf32>
    %214 = arith.divf %212, %213 : vector<32x64xf32>
    %215 = vector.extract_strided_slice %214 {offsets = [0, 0], sizes = [32, 32], strides = [1, 1]} : vector<32x64xf32> to vector<32x32xf32>
    %216 = vector.extract_strided_slice %214 {offsets = [0, 32], sizes = [32, 32], strides = [1, 1]} : vector<32x64xf32> to vector<32x32xf32>
    %217 = vector.extract_strided_slice %204 {offsets = [0, 64], sizes = [32, 32], strides = [1, 1]} : vector<32x96xf32> to vector<32x32xf32>
    %218 = vector.extract_strided_slice %206 {offsets = [0, 64], sizes = [32, 32], strides = [1, 1]} : vector<32x96xf32> to vector<32x32xf32>
    %219 = vector.broadcast %11 : vector<1x32xf32> to vector<32x32xf32>
    %220 = arith.addf %218, %219 : vector<32x32xf32>
    %221 = arith.mulf %215, %220 : vector<32x32xf32>
    %222 = arith.addf %217, %221 : vector<32x32xf32>
    %223 = math.tanh %222 : vector<32x32xf32>
    %224 = arith.subf %199, %223 : vector<32x32xf32>
    %225 = arith.mulf %216, %224 : vector<32x32xf32>
    %226 = arith.addf %223, %225 : vector<32x32xf32>
    %227 = arith.index_cast %202 : i32 to index
    %c0_51 = arith.constant 0 : index
    %228 = vector.load %arg13[%227, %c0_51] : memref<512x32xf32, #tpu.memory_space<vmem>>, vector<32x32xf32>
    tpu.vector_store %arg13[%227, %c0_51], %226 {strides = array<i32>} : memref<512x32xf32, #tpu.memory_space<vmem>>, vector<32x32xf32>,
    %c8_i32 = arith.constant 8 : i32
    %c32_i32_52 = arith.constant 32 : i32
    %229 = arith.muli %c8_i32, %c32_i32_52 : i32
    %230 = arith.index_cast %229 : i32 to index
    %c0_53 = arith.constant 0 : index
    %231 = vector.load %arg12[%230, %c0_53] : memref<512x96xf32, #tpu.memory_space<vmem>>, vector<32x96xf32>
    %232 = arith.truncf %226 : vector<32x32xf32> to vector<32x32xbf16>
    %cst_54 = arith.constant dense<0.000000e+00> : vector<32x96xf32>
    %233 = tpu.matmul %232, %10, %cst_54 {dimension_numbers = #tpu.dot_dimension_numbers<[1], [0], [0], [1], [0, 0, 1, 1], [], []>} : vector<32x32xbf16>, vector<32x96xbf16>, vector<32x96xf32> -> vector<32x96xf32>
    %234 = vector.extract_strided_slice %231 {offsets = [0, 0], sizes = [32, 64], strides = [1, 1]} : vector<32x96xf32> to vector<32x64xf32>
    %235 = vector.extract_strided_slice %233 {offsets = [0, 0], sizes = [32, 64], strides = [1, 1]} : vector<32x96xf32> to vector<32x64xf32>
    %236 = arith.addf %234, %235 : vector<32x64xf32>
    %237 = arith.negf %236 : vector<32x64xf32>
    %238 = math.exp %237 : vector<32x64xf32>
    %cst_55 = arith.constant 1.000000e+00 : f32
    %239 = vector.broadcast %cst_55 : f32 to vector<32x64xf32>
    %240 = arith.addf %239, %238 : vector<32x64xf32>
    %241 = arith.divf %239, %240 : vector<32x64xf32>
    %242 = vector.extract_strided_slice %241 {offsets = [0, 0], sizes = [32, 32], strides = [1, 1]} : vector<32x64xf32> to vector<32x32xf32>
    %243 = vector.extract_strided_slice %241 {offsets = [0, 32], sizes = [32, 32], strides = [1, 1]} : vector<32x64xf32> to vector<32x32xf32>
    %244 = vector.extract_strided_slice %231 {offsets = [0, 64], sizes = [32, 32], strides = [1, 1]} : vector<32x96xf32> to vector<32x32xf32>
    %245 = vector.extract_strided_slice %233 {offsets = [0, 64], sizes = [32, 32], strides = [1, 1]} : vector<32x96xf32> to vector<32x32xf32>
    %246 = vector.broadcast %11 : vector<1x32xf32> to vector<32x32xf32>
    %247 = arith.addf %245, %246 : vector<32x32xf32>
    %248 = arith.mulf %242, %247 : vector<32x32xf32>
    %249 = arith.addf %244, %248 : vector<32x32xf32>
    %250 = math.tanh %249 : vector<32x32xf32>
    %251 = arith.subf %226, %250 : vector<32x32xf32>
    %252 = arith.mulf %243, %251 : vector<32x32xf32>
    %253 = arith.addf %250, %252 : vector<32x32xf32>
    %254 = arith.index_cast %229 : i32 to index
    %c0_56 = arith.constant 0 : index
    %255 = vector.load %arg13[%254, %c0_56] : memref<512x32xf32, #tpu.memory_space<vmem>>, vector<32x32xf32>
    tpu.vector_store %arg13[%254, %c0_56], %253 {strides = array<i32>} : memref<512x32xf32, #tpu.memory_space<vmem>>, vector<32x32xf32>,
    %c9_i32 = arith.constant 9 : i32
    %c32_i32_57 = arith.constant 32 : i32
    %256 = arith.muli %c9_i32, %c32_i32_57 : i32
    %257 = arith.index_cast %256 : i32 to index
    %c0_58 = arith.constant 0 : index
    %258 = vector.load %arg12[%257, %c0_58] : memref<512x96xf32, #tpu.memory_space<vmem>>, vector<32x96xf32>
    %259 = arith.truncf %253 : vector<32x32xf32> to vector<32x32xbf16>
    %cst_59 = arith.constant dense<0.000000e+00> : vector<32x96xf32>
    %260 = tpu.matmul %259, %10, %cst_59 {dimension_numbers = #tpu.dot_dimension_numbers<[1], [0], [0], [1], [0, 0, 1, 1], [], []>} : vector<32x32xbf16>, vector<32x96xbf16>, vector<32x96xf32> -> vector<32x96xf32>
    %261 = vector.extract_strided_slice %258 {offsets = [0, 0], sizes = [32, 64], strides = [1, 1]} : vector<32x96xf32> to vector<32x64xf32>
    %262 = vector.extract_strided_slice %260 {offsets = [0, 0], sizes = [32, 64], strides = [1, 1]} : vector<32x96xf32> to vector<32x64xf32>
    %263 = arith.addf %261, %262 : vector<32x64xf32>
    %264 = arith.negf %263 : vector<32x64xf32>
    %265 = math.exp %264 : vector<32x64xf32>
    %cst_60 = arith.constant 1.000000e+00 : f32
    %266 = vector.broadcast %cst_60 : f32 to vector<32x64xf32>
    %267 = arith.addf %266, %265 : vector<32x64xf32>
    %268 = arith.divf %266, %267 : vector<32x64xf32>
    %269 = vector.extract_strided_slice %268 {offsets = [0, 0], sizes = [32, 32], strides = [1, 1]} : vector<32x64xf32> to vector<32x32xf32>
    %270 = vector.extract_strided_slice %268 {offsets = [0, 32], sizes = [32, 32], strides = [1, 1]} : vector<32x64xf32> to vector<32x32xf32>
    %271 = vector.extract_strided_slice %258 {offsets = [0, 64], sizes = [32, 32], strides = [1, 1]} : vector<32x96xf32> to vector<32x32xf32>
    %272 = vector.extract_strided_slice %260 {offsets = [0, 64], sizes = [32, 32], strides = [1, 1]} : vector<32x96xf32> to vector<32x32xf32>
    %273 = vector.broadcast %11 : vector<1x32xf32> to vector<32x32xf32>
    %274 = arith.addf %272, %273 : vector<32x32xf32>
    %275 = arith.mulf %269, %274 : vector<32x32xf32>
    %276 = arith.addf %271, %275 : vector<32x32xf32>
    %277 = math.tanh %276 : vector<32x32xf32>
    %278 = arith.subf %253, %277 : vector<32x32xf32>
    %279 = arith.mulf %270, %278 : vector<32x32xf32>
    %280 = arith.addf %277, %279 : vector<32x32xf32>
    %281 = arith.index_cast %256 : i32 to index
    %c0_61 = arith.constant 0 : index
    %282 = vector.load %arg13[%281, %c0_61] : memref<512x32xf32, #tpu.memory_space<vmem>>, vector<32x32xf32>
    tpu.vector_store %arg13[%281, %c0_61], %280 {strides = array<i32>} : memref<512x32xf32, #tpu.memory_space<vmem>>, vector<32x32xf32>,
    %c10_i32 = arith.constant 10 : i32
    %c32_i32_62 = arith.constant 32 : i32
    %283 = arith.muli %c10_i32, %c32_i32_62 : i32
    %284 = arith.index_cast %283 : i32 to index
    %c0_63 = arith.constant 0 : index
    %285 = vector.load %arg12[%284, %c0_63] : memref<512x96xf32, #tpu.memory_space<vmem>>, vector<32x96xf32>
    %286 = arith.truncf %280 : vector<32x32xf32> to vector<32x32xbf16>
    %cst_64 = arith.constant dense<0.000000e+00> : vector<32x96xf32>
    %287 = tpu.matmul %286, %10, %cst_64 {dimension_numbers = #tpu.dot_dimension_numbers<[1], [0], [0], [1], [0, 0, 1, 1], [], []>} : vector<32x32xbf16>, vector<32x96xbf16>, vector<32x96xf32> -> vector<32x96xf32>
    %288 = vector.extract_strided_slice %285 {offsets = [0, 0], sizes = [32, 64], strides = [1, 1]} : vector<32x96xf32> to vector<32x64xf32>
    %289 = vector.extract_strided_slice %287 {offsets = [0, 0], sizes = [32, 64], strides = [1, 1]} : vector<32x96xf32> to vector<32x64xf32>
    %290 = arith.addf %288, %289 : vector<32x64xf32>
    %291 = arith.negf %290 : vector<32x64xf32>
    %292 = math.exp %291 : vector<32x64xf32>
    %cst_65 = arith.constant 1.000000e+00 : f32
    %293 = vector.broadcast %cst_65 : f32 to vector<32x64xf32>
    %294 = arith.addf %293, %292 : vector<32x64xf32>
    %295 = arith.divf %293, %294 : vector<32x64xf32>
    %296 = vector.extract_strided_slice %295 {offsets = [0, 0], sizes = [32, 32], strides = [1, 1]} : vector<32x64xf32> to vector<32x32xf32>
    %297 = vector.extract_strided_slice %295 {offsets = [0, 32], sizes = [32, 32], strides = [1, 1]} : vector<32x64xf32> to vector<32x32xf32>
    %298 = vector.extract_strided_slice %285 {offsets = [0, 64], sizes = [32, 32], strides = [1, 1]} : vector<32x96xf32> to vector<32x32xf32>
    %299 = vector.extract_strided_slice %287 {offsets = [0, 64], sizes = [32, 32], strides = [1, 1]} : vector<32x96xf32> to vector<32x32xf32>
    %300 = vector.broadcast %11 : vector<1x32xf32> to vector<32x32xf32>
    %301 = arith.addf %299, %300 : vector<32x32xf32>
    %302 = arith.mulf %296, %301 : vector<32x32xf32>
    %303 = arith.addf %298, %302 : vector<32x32xf32>
    %304 = math.tanh %303 : vector<32x32xf32>
    %305 = arith.subf %280, %304 : vector<32x32xf32>
    %306 = arith.mulf %297, %305 : vector<32x32xf32>
    %307 = arith.addf %304, %306 : vector<32x32xf32>
    %308 = arith.index_cast %283 : i32 to index
    %c0_66 = arith.constant 0 : index
    %309 = vector.load %arg13[%308, %c0_66] : memref<512x32xf32, #tpu.memory_space<vmem>>, vector<32x32xf32>
    tpu.vector_store %arg13[%308, %c0_66], %307 {strides = array<i32>} : memref<512x32xf32, #tpu.memory_space<vmem>>, vector<32x32xf32>,
    %c11_i32 = arith.constant 11 : i32
    %c32_i32_67 = arith.constant 32 : i32
    %310 = arith.muli %c11_i32, %c32_i32_67 : i32
    %311 = arith.index_cast %310 : i32 to index
    %c0_68 = arith.constant 0 : index
    %312 = vector.load %arg12[%311, %c0_68] : memref<512x96xf32, #tpu.memory_space<vmem>>, vector<32x96xf32>
    %313 = arith.truncf %307 : vector<32x32xf32> to vector<32x32xbf16>
    %cst_69 = arith.constant dense<0.000000e+00> : vector<32x96xf32>
    %314 = tpu.matmul %313, %10, %cst_69 {dimension_numbers = #tpu.dot_dimension_numbers<[1], [0], [0], [1], [0, 0, 1, 1], [], []>} : vector<32x32xbf16>, vector<32x96xbf16>, vector<32x96xf32> -> vector<32x96xf32>
    %315 = vector.extract_strided_slice %312 {offsets = [0, 0], sizes = [32, 64], strides = [1, 1]} : vector<32x96xf32> to vector<32x64xf32>
    %316 = vector.extract_strided_slice %314 {offsets = [0, 0], sizes = [32, 64], strides = [1, 1]} : vector<32x96xf32> to vector<32x64xf32>
    %317 = arith.addf %315, %316 : vector<32x64xf32>
    %318 = arith.negf %317 : vector<32x64xf32>
    %319 = math.exp %318 : vector<32x64xf32>
    %cst_70 = arith.constant 1.000000e+00 : f32
    %320 = vector.broadcast %cst_70 : f32 to vector<32x64xf32>
    %321 = arith.addf %320, %319 : vector<32x64xf32>
    %322 = arith.divf %320, %321 : vector<32x64xf32>
    %323 = vector.extract_strided_slice %322 {offsets = [0, 0], sizes = [32, 32], strides = [1, 1]} : vector<32x64xf32> to vector<32x32xf32>
    %324 = vector.extract_strided_slice %322 {offsets = [0, 32], sizes = [32, 32], strides = [1, 1]} : vector<32x64xf32> to vector<32x32xf32>
    %325 = vector.extract_strided_slice %312 {offsets = [0, 64], sizes = [32, 32], strides = [1, 1]} : vector<32x96xf32> to vector<32x32xf32>
    %326 = vector.extract_strided_slice %314 {offsets = [0, 64], sizes = [32, 32], strides = [1, 1]} : vector<32x96xf32> to vector<32x32xf32>
    %327 = vector.broadcast %11 : vector<1x32xf32> to vector<32x32xf32>
    %328 = arith.addf %326, %327 : vector<32x32xf32>
    %329 = arith.mulf %323, %328 : vector<32x32xf32>
    %330 = arith.addf %325, %329 : vector<32x32xf32>
    %331 = math.tanh %330 : vector<32x32xf32>
    %332 = arith.subf %307, %331 : vector<32x32xf32>
    %333 = arith.mulf %324, %332 : vector<32x32xf32>
    %334 = arith.addf %331, %333 : vector<32x32xf32>
    %335 = arith.index_cast %310 : i32 to index
    %c0_71 = arith.constant 0 : index
    %336 = vector.load %arg13[%335, %c0_71] : memref<512x32xf32, #tpu.memory_space<vmem>>, vector<32x32xf32>
    tpu.vector_store %arg13[%335, %c0_71], %334 {strides = array<i32>} : memref<512x32xf32, #tpu.memory_space<vmem>>, vector<32x32xf32>,
    %c12_i32 = arith.constant 12 : i32
    %c32_i32_72 = arith.constant 32 : i32
    %337 = arith.muli %c12_i32, %c32_i32_72 : i32
    %338 = arith.index_cast %337 : i32 to index
    %c0_73 = arith.constant 0 : index
    %339 = vector.load %arg12[%338, %c0_73] : memref<512x96xf32, #tpu.memory_space<vmem>>, vector<32x96xf32>
    %340 = arith.truncf %334 : vector<32x32xf32> to vector<32x32xbf16>
    %cst_74 = arith.constant dense<0.000000e+00> : vector<32x96xf32>
    %341 = tpu.matmul %340, %10, %cst_74 {dimension_numbers = #tpu.dot_dimension_numbers<[1], [0], [0], [1], [0, 0, 1, 1], [], []>} : vector<32x32xbf16>, vector<32x96xbf16>, vector<32x96xf32> -> vector<32x96xf32>
    %342 = vector.extract_strided_slice %339 {offsets = [0, 0], sizes = [32, 64], strides = [1, 1]} : vector<32x96xf32> to vector<32x64xf32>
    %343 = vector.extract_strided_slice %341 {offsets = [0, 0], sizes = [32, 64], strides = [1, 1]} : vector<32x96xf32> to vector<32x64xf32>
    %344 = arith.addf %342, %343 : vector<32x64xf32>
    %345 = arith.negf %344 : vector<32x64xf32>
    %346 = math.exp %345 : vector<32x64xf32>
    %cst_75 = arith.constant 1.000000e+00 : f32
    %347 = vector.broadcast %cst_75 : f32 to vector<32x64xf32>
    %348 = arith.addf %347, %346 : vector<32x64xf32>
    %349 = arith.divf %347, %348 : vector<32x64xf32>
    %350 = vector.extract_strided_slice %349 {offsets = [0, 0], sizes = [32, 32], strides = [1, 1]} : vector<32x64xf32> to vector<32x32xf32>
    %351 = vector.extract_strided_slice %349 {offsets = [0, 32], sizes = [32, 32], strides = [1, 1]} : vector<32x64xf32> to vector<32x32xf32>
    %352 = vector.extract_strided_slice %339 {offsets = [0, 64], sizes = [32, 32], strides = [1, 1]} : vector<32x96xf32> to vector<32x32xf32>
    %353 = vector.extract_strided_slice %341 {offsets = [0, 64], sizes = [32, 32], strides = [1, 1]} : vector<32x96xf32> to vector<32x32xf32>
    %354 = vector.broadcast %11 : vector<1x32xf32> to vector<32x32xf32>
    %355 = arith.addf %353, %354 : vector<32x32xf32>
    %356 = arith.mulf %350, %355 : vector<32x32xf32>
    %357 = arith.addf %352, %356 : vector<32x32xf32>
    %358 = math.tanh %357 : vector<32x32xf32>
    %359 = arith.subf %334, %358 : vector<32x32xf32>
    %360 = arith.mulf %351, %359 : vector<32x32xf32>
    %361 = arith.addf %358, %360 : vector<32x32xf32>
    %362 = arith.index_cast %337 : i32 to index
    %c0_76 = arith.constant 0 : index
    %363 = vector.load %arg13[%362, %c0_76] : memref<512x32xf32, #tpu.memory_space<vmem>>, vector<32x32xf32>
    tpu.vector_store %arg13[%362, %c0_76], %361 {strides = array<i32>} : memref<512x32xf32, #tpu.memory_space<vmem>>, vector<32x32xf32>,
    %c13_i32 = arith.constant 13 : i32
    %c32_i32_77 = arith.constant 32 : i32
    %364 = arith.muli %c13_i32, %c32_i32_77 : i32
    %365 = arith.index_cast %364 : i32 to index
    %c0_78 = arith.constant 0 : index
    %366 = vector.load %arg12[%365, %c0_78] : memref<512x96xf32, #tpu.memory_space<vmem>>, vector<32x96xf32>
    %367 = arith.truncf %361 : vector<32x32xf32> to vector<32x32xbf16>
    %cst_79 = arith.constant dense<0.000000e+00> : vector<32x96xf32>
    %368 = tpu.matmul %367, %10, %cst_79 {dimension_numbers = #tpu.dot_dimension_numbers<[1], [0], [0], [1], [0, 0, 1, 1], [], []>} : vector<32x32xbf16>, vector<32x96xbf16>, vector<32x96xf32> -> vector<32x96xf32>
    %369 = vector.extract_strided_slice %366 {offsets = [0, 0], sizes = [32, 64], strides = [1, 1]} : vector<32x96xf32> to vector<32x64xf32>
    %370 = vector.extract_strided_slice %368 {offsets = [0, 0], sizes = [32, 64], strides = [1, 1]} : vector<32x96xf32> to vector<32x64xf32>
    %371 = arith.addf %369, %370 : vector<32x64xf32>
    %372 = arith.negf %371 : vector<32x64xf32>
    %373 = math.exp %372 : vector<32x64xf32>
    %cst_80 = arith.constant 1.000000e+00 : f32
    %374 = vector.broadcast %cst_80 : f32 to vector<32x64xf32>
    %375 = arith.addf %374, %373 : vector<32x64xf32>
    %376 = arith.divf %374, %375 : vector<32x64xf32>
    %377 = vector.extract_strided_slice %376 {offsets = [0, 0], sizes = [32, 32], strides = [1, 1]} : vector<32x64xf32> to vector<32x32xf32>
    %378 = vector.extract_strided_slice %376 {offsets = [0, 32], sizes = [32, 32], strides = [1, 1]} : vector<32x64xf32> to vector<32x32xf32>
    %379 = vector.extract_strided_slice %366 {offsets = [0, 64], sizes = [32, 32], strides = [1, 1]} : vector<32x96xf32> to vector<32x32xf32>
    %380 = vector.extract_strided_slice %368 {offsets = [0, 64], sizes = [32, 32], strides = [1, 1]} : vector<32x96xf32> to vector<32x32xf32>
    %381 = vector.broadcast %11 : vector<1x32xf32> to vector<32x32xf32>
    %382 = arith.addf %380, %381 : vector<32x32xf32>
    %383 = arith.mulf %377, %382 : vector<32x32xf32>
    %384 = arith.addf %379, %383 : vector<32x32xf32>
    %385 = math.tanh %384 : vector<32x32xf32>
    %386 = arith.subf %361, %385 : vector<32x32xf32>
    %387 = arith.mulf %378, %386 : vector<32x32xf32>
    %388 = arith.addf %385, %387 : vector<32x32xf32>
    %389 = arith.index_cast %364 : i32 to index
    %c0_81 = arith.constant 0 : index
    %390 = vector.load %arg13[%389, %c0_81] : memref<512x32xf32, #tpu.memory_space<vmem>>, vector<32x32xf32>
    tpu.vector_store %arg13[%389, %c0_81], %388 {strides = array<i32>} : memref<512x32xf32, #tpu.memory_space<vmem>>, vector<32x32xf32>,
    %c14_i32 = arith.constant 14 : i32
    %c32_i32_82 = arith.constant 32 : i32
    %391 = arith.muli %c14_i32, %c32_i32_82 : i32
    %392 = arith.index_cast %391 : i32 to index
    %c0_83 = arith.constant 0 : index
    %393 = vector.load %arg12[%392, %c0_83] : memref<512x96xf32, #tpu.memory_space<vmem>>, vector<32x96xf32>
    %394 = arith.truncf %388 : vector<32x32xf32> to vector<32x32xbf16>
    %cst_84 = arith.constant dense<0.000000e+00> : vector<32x96xf32>
    %395 = tpu.matmul %394, %10, %cst_84 {dimension_numbers = #tpu.dot_dimension_numbers<[1], [0], [0], [1], [0, 0, 1, 1], [], []>} : vector<32x32xbf16>, vector<32x96xbf16>, vector<32x96xf32> -> vector<32x96xf32>
    %396 = vector.extract_strided_slice %393 {offsets = [0, 0], sizes = [32, 64], strides = [1, 1]} : vector<32x96xf32> to vector<32x64xf32>
    %397 = vector.extract_strided_slice %395 {offsets = [0, 0], sizes = [32, 64], strides = [1, 1]} : vector<32x96xf32> to vector<32x64xf32>
    %398 = arith.addf %396, %397 : vector<32x64xf32>
    %399 = arith.negf %398 : vector<32x64xf32>
    %400 = math.exp %399 : vector<32x64xf32>
    %cst_85 = arith.constant 1.000000e+00 : f32
    %401 = vector.broadcast %cst_85 : f32 to vector<32x64xf32>
    %402 = arith.addf %401, %400 : vector<32x64xf32>
    %403 = arith.divf %401, %402 : vector<32x64xf32>
    %404 = vector.extract_strided_slice %403 {offsets = [0, 0], sizes = [32, 32], strides = [1, 1]} : vector<32x64xf32> to vector<32x32xf32>
    %405 = vector.extract_strided_slice %403 {offsets = [0, 32], sizes = [32, 32], strides = [1, 1]} : vector<32x64xf32> to vector<32x32xf32>
    %406 = vector.extract_strided_slice %393 {offsets = [0, 64], sizes = [32, 32], strides = [1, 1]} : vector<32x96xf32> to vector<32x32xf32>
    %407 = vector.extract_strided_slice %395 {offsets = [0, 64], sizes = [32, 32], strides = [1, 1]} : vector<32x96xf32> to vector<32x32xf32>
    %408 = vector.broadcast %11 : vector<1x32xf32> to vector<32x32xf32>
    %409 = arith.addf %407, %408 : vector<32x32xf32>
    %410 = arith.mulf %404, %409 : vector<32x32xf32>
    %411 = arith.addf %406, %410 : vector<32x32xf32>
    %412 = math.tanh %411 : vector<32x32xf32>
    %413 = arith.subf %388, %412 : vector<32x32xf32>
    %414 = arith.mulf %405, %413 : vector<32x32xf32>
    %415 = arith.addf %412, %414 : vector<32x32xf32>
    %416 = arith.index_cast %391 : i32 to index
    %c0_86 = arith.constant 0 : index
    %417 = vector.load %arg13[%416, %c0_86] : memref<512x32xf32, #tpu.memory_space<vmem>>, vector<32x32xf32>
    tpu.vector_store %arg13[%416, %c0_86], %415 {strides = array<i32>} : memref<512x32xf32, #tpu.memory_space<vmem>>, vector<32x32xf32>,
    %c15_i32 = arith.constant 15 : i32
    %c32_i32_87 = arith.constant 32 : i32
    %418 = arith.muli %c15_i32, %c32_i32_87 : i32
    %419 = arith.index_cast %418 : i32 to index
    %c0_88 = arith.constant 0 : index
    %420 = vector.load %arg12[%419, %c0_88] : memref<512x96xf32, #tpu.memory_space<vmem>>, vector<32x96xf32>
    %421 = arith.truncf %415 : vector<32x32xf32> to vector<32x32xbf16>
    %cst_89 = arith.constant dense<0.000000e+00> : vector<32x96xf32>
    %422 = tpu.matmul %421, %10, %cst_89 {dimension_numbers = #tpu.dot_dimension_numbers<[1], [0], [0], [1], [0, 0, 1, 1], [], []>} : vector<32x32xbf16>, vector<32x96xbf16>, vector<32x96xf32> -> vector<32x96xf32>
    %423 = vector.extract_strided_slice %420 {offsets = [0, 0], sizes = [32, 64], strides = [1, 1]} : vector<32x96xf32> to vector<32x64xf32>
    %424 = vector.extract_strided_slice %422 {offsets = [0, 0], sizes = [32, 64], strides = [1, 1]} : vector<32x96xf32> to vector<32x64xf32>
    %425 = arith.addf %423, %424 : vector<32x64xf32>
    %426 = arith.negf %425 : vector<32x64xf32>
    %427 = math.exp %426 : vector<32x64xf32>
    %cst_90 = arith.constant 1.000000e+00 : f32
    %428 = vector.broadcast %cst_90 : f32 to vector<32x64xf32>
    %429 = arith.addf %428, %427 : vector<32x64xf32>
    %430 = arith.divf %428, %429 : vector<32x64xf32>
    %431 = vector.extract_strided_slice %430 {offsets = [0, 0], sizes = [32, 32], strides = [1, 1]} : vector<32x64xf32> to vector<32x32xf32>
    %432 = vector.extract_strided_slice %430 {offsets = [0, 32], sizes = [32, 32], strides = [1, 1]} : vector<32x64xf32> to vector<32x32xf32>
    %433 = vector.extract_strided_slice %420 {offsets = [0, 64], sizes = [32, 32], strides = [1, 1]} : vector<32x96xf32> to vector<32x32xf32>
    %434 = vector.extract_strided_slice %422 {offsets = [0, 64], sizes = [32, 32], strides = [1, 1]} : vector<32x96xf32> to vector<32x32xf32>
    %435 = vector.broadcast %11 : vector<1x32xf32> to vector<32x32xf32>
    %436 = arith.addf %434, %435 : vector<32x32xf32>
    %437 = arith.mulf %431, %436 : vector<32x32xf32>
    %438 = arith.addf %433, %437 : vector<32x32xf32>
    %439 = math.tanh %438 : vector<32x32xf32>
    %440 = arith.subf %415, %439 : vector<32x32xf32>
    %441 = arith.mulf %432, %440 : vector<32x32xf32>
    %442 = arith.addf %439, %441 : vector<32x32xf32>
    %443 = arith.index_cast %418 : i32 to index
    %c0_91 = arith.constant 0 : index
    %444 = vector.load %arg13[%443, %c0_91] : memref<512x32xf32, #tpu.memory_space<vmem>>, vector<32x32xf32>
    tpu.vector_store %arg13[%443, %c0_91], %442 {strides = array<i32>} : memref<512x32xf32, #tpu.memory_space<vmem>>, vector<32x32xf32>,
    %c16_i32 = arith.constant 16 : i32
    %c0_92 = arith.constant 0 : index
    %c0_93 = arith.constant 0 : index
    %445 = vector.load %arg11[%c0_92, %c0_93] : memref<32x32xf32, #tpu.memory_space<vmem>>, vector<32x32xf32>
    tpu.vector_store %arg11[%c0_92, %c0_93], %442 {strides = array<i32>} : memref<32x32xf32, #tpu.memory_space<vmem>>, vector<32x32xf32>,
    %c0_94 = arith.constant 0 : index
    %c0_95 = arith.constant 0 : index
    %446 = vector.load %arg13[%c0_94, %c0_95] : memref<512x32xf32, #tpu.memory_space<vmem>>, vector<512x32xf32>
    %447 = arith.truncf %446 : vector<512x32xf32> to vector<512x32xbf16>
    %c0_96 = arith.constant 0 : index
    %c0_97 = arith.constant 0 : index
    %448 = vector.load %arg7[%c0_96, %c0_97] : memref<8x32xf32, #tpu.memory_space<vmem>>, vector<8x32xf32>
    %449 = arith.truncf %448 : vector<8x32xf32> to vector<8x32xbf16>
    %cst_98 = arith.constant dense<0.000000e+00> : vector<8x512xf32>
    %450 = tpu.matmul %449, %447, %cst_98 {dimension_numbers = #tpu.dot_dimension_numbers<[1], [1], [0], [0], [0, 0, 1, 0], [], []>} : vector<8x32xbf16>, vector<512x32xbf16>, vector<8x512xf32> -> vector<8x512xf32>
    %cst_99 = arith.constant dense<0.000000e+00> : vector<8xf32>
    %451 = vector.multi_reduction <add>, %450, %cst_99 [1] : vector<8x512xf32> to vector<8xf32>
    %452 = vector.shape_cast %451 : vector<8xf32> to vector<8x1xf32>
    %cst_100 = arith.constant 5.120000e+02 : f32
    %453 = vector.broadcast %cst_100 : f32 to vector<8x1xf32>
    %454 = arith.divf %452, %453 : vector<8x1xf32>
    %455 = vector.broadcast %454 : vector<8x1xf32> to vector<8x512xf32>
    %456 = arith.subf %450, %455 : vector<8x512xf32>
    %457 = arith.mulf %456, %456 : vector<8x512xf32>
    %cst_101 = arith.constant dense<0.000000e+00> : vector<8xf32>
    %458 = vector.multi_reduction <add>, %457, %cst_101 [1] : vector<8x512xf32> to vector<8xf32>
    %459 = vector.shape_cast %458 : vector<8xf32> to vector<8x1xf32>
    %cst_102 = arith.constant 5.120000e+02 : f32
    %460 = vector.broadcast %cst_102 : f32 to vector<8x1xf32>
    %461 = arith.divf %459, %460 : vector<8x1xf32>
    %462 = vector.broadcast %454 : vector<8x1xf32> to vector<8x512xf32>
    %463 = arith.subf %450, %462 : vector<8x512xf32>
    %cst_103 = arith.constant 9.99999974E-6 : f32
    %464 = vector.broadcast %cst_103 : f32 to vector<8x1xf32>
    %465 = arith.addf %461, %464 : vector<8x1xf32>
    %466 = math.rsqrt %465 : vector<8x1xf32>
    %467 = vector.broadcast %466 : vector<8x1xf32> to vector<8x512xf32>
    %468 = arith.mulf %463, %467 : vector<8x512xf32>
    %c0_104 = arith.constant 0 : index
    %c0_105 = arith.constant 0 : index
    %469 = vector.load %arg8[%c0_104, %c0_105] : memref<8x1xf32, #tpu.memory_space<vmem>>, vector<8x1xf32>
    %470 = vector.broadcast %469 : vector<8x1xf32> to vector<8x512xf32>
    %471 = arith.mulf %468, %470 : vector<8x512xf32>
    %c0_106 = arith.constant 0 : index
    %c0_107 = arith.constant 0 : index
    %472 = vector.load %arg9[%c0_106, %c0_107] : memref<8x1xf32, #tpu.memory_space<vmem>>, vector<8x1xf32>
    %473 = vector.broadcast %472 : vector<8x1xf32> to vector<8x512xf32>
    %474 = arith.addf %471, %473 : vector<8x512xf32>
    %cst_108 = arith.constant 0.000000e+00 : f32
    %475 = vector.broadcast %cst_108 : f32 to vector<8x512xf32>
    %476 = arith.maximumf %474, %475 : vector<8x512xf32>
    %c0_109 = arith.constant 0 : index
    %c0_110 = arith.constant 0 : index
    %477 = vector.load %arg10[%c0_109, %c0_110] : memref<8x512xf32, #tpu.memory_space<vmem>>, vector<8x512xf32>
    tpu.vector_store %arg10[%c0_109, %c0_110], %476 {strides = array<i32>} : memref<8x512xf32, #tpu.memory_space<vmem>>, vector<8x512xf32>,
    return
  }
  func.func @transform_0(%arg0: i32) -> (i32, i32) {
    %c0_i32 = arith.constant 0 : i32
    %c0_i32_0 = arith.constant 0 : i32
    %c0_i32_1 = arith.constant 0 : i32
    return %c0_i32, %c0_i32_0 : i32, i32
  }
  func.func @transform_1(%arg0: i32) -> (i32, i32) {
    %c0_i32 = arith.constant 0 : i32
    %c0_i32_0 = arith.constant 0 : i32
    %c0_i32_1 = arith.constant 0 : i32
    return %c0_i32, %c0_i32_0 : i32, i32
  }
  func.func @transform_2(%arg0: i32) -> (i32, i32) {
    %c0_i32 = arith.constant 0 : i32
    %c0_i32_0 = arith.constant 0 : i32
    %c0_i32_1 = arith.constant 0 : i32
    return %c0_i32, %c0_i32_0 : i32, i32
  }
  func.func @transform_3(%arg0: i32) -> (i32, i32) {
    %c0_i32 = arith.constant 0 : i32
    %c0_i32_0 = arith.constant 0 : i32
    %c0_i32_1 = arith.constant 0 : i32
    return %c0_i32, %c0_i32_0 : i32, i32
  }
  func.func @transform_4(%arg0: i32) -> (i32, i32) {
    %c0_i32 = arith.constant 0 : i32
    %c0_i32_0 = arith.constant 0 : i32
    %c0_i32_1 = arith.constant 0 : i32
    return %c0_i32, %c0_i32_0 : i32, i32
  }
  func.func @transform_5(%arg0: i32) -> (i32, i32) {
    %c0_i32 = arith.constant 0 : i32
    %c0_i32_0 = arith.constant 0 : i32
    %c0_i32_1 = arith.constant 0 : i32
    return %c0_i32, %c0_i32_0 : i32, i32
  }
  func.func @transform_6(%arg0: i32) -> (i32, i32) {
    %c0_i32 = arith.constant 0 : i32
    %c0_i32_0 = arith.constant 0 : i32
    %c0_i32_1 = arith.constant 0 : i32
    return %c0_i32, %c0_i32_0 : i32, i32
  }
  func.func @transform_7(%arg0: i32) -> (i32, i32) {
    %c0_i32 = arith.constant 0 : i32
    %c0_i32_0 = arith.constant 0 : i32
    %c0_i32_1 = arith.constant 0 : i32
    return %c0_i32, %c0_i32_0 : i32, i32
  }
  func.func @transform_8(%arg0: i32) -> (i32, i32) {
    %c0_i32 = arith.constant 0 : i32
    %c0_i32_0 = arith.constant 0 : i32
    %c0_i32_1 = arith.constant 0 : i32
    return %c0_i32, %c0_i32_0 : i32, i32
  }
  func.func @transform_9(%arg0: i32) -> (i32, i32) {
    %c0_i32 = arith.constant 0 : i32
    %c0_i32_0 = arith.constant 0 : i32
    %c0_i32_1 = arith.constant 0 : i32
    return %c0_i32, %c0_i32_0 : i32, i32
  }
  func.func @transform_10(%arg0: i32) -> (i32, i32) {
    %c0_i32 = arith.constant 0 : i32
    %c0_i32_0 = arith.constant 0 : i32
    %c0_i32_1 = arith.constant 0 : i32
    return %c0_i32, %c0_i32_0 : i32, i32
  }
}

</mosaic_0001>

<llo_original>
// kernel: _lambda_.1
$region0: #{_lambda_.1}
  #allocation0 [shape = 'u32[]', space=smem, size = 0x4, offset = 0x4, fixed_abs, tag = 'smem constant byte address 0x4 - core index']
  #allocation1 [shape = 'u32[72,128]{1,0:T(1,128)}', space=vmem, size = 0x9000, scoped, tag = 'internal scratch']
  #allocation2 [shape = 'f32[512,96]{1,0:T(8,128)}', space=vmem, size = 0x40000, scoped, tag = 'scratch operand']
  #allocation3 [shape = 'f32[512,32]{1,0:T(8,128)}', space=vmem, size = 0x40000, scoped, tag = 'scratch operand']
  %s0 = inlined_call_operand.vmem [shape: f32[512,4], index: 0, kind: input, shape index: {}]
  %s1 = inlined_call_operand.vmem [shape: f32[32,32], index: 1, kind: input, shape index: {}]
  %s2 = inlined_call_operand.vmem [shape: f32[4,96], index: 2, kind: input, shape index: {}]
  %s3 = inlined_call_operand.vmem [shape: f32[32,96], index: 3, kind: input, shape index: {}]
  %s4 = inlined_call_operand.vmem [shape: f32[1,96], index: 4, kind: input, shape index: {}]
  %s5 = inlined_call_operand.vmem [shape: f32[1,32], index: 5, kind: input, shape index: {}]
  %s6 = inlined_call_operand.vmem [shape: f32[8,32], index: 6, kind: input, shape index: {}]
  %s7 = inlined_call_operand.vmem [shape: f32[8,1], index: 7, kind: input, shape index: {}]
  %s8 = inlined_call_operand.vmem [shape: f32[8,1], index: 8, kind: input, shape index: {}]
  %s9 = inlined_call_operand.vmem [shape: f32[8,512], index: 9, kind: output, shape index: {0}]
  %s10 = inlined_call_operand.hbm [shape: f32[32,32], index: 10, kind: output, shape index: {1}]
  %11 = xla_tuple %s9, %s10
  %s12 = sld [smem:[#allocation0]]
  $region54: #{_lambda_.1} parent=0
    _
  %s14 = ssub.s32 1, %s12
  %s15 = scalar_select 0, %s14, %s12
  $region1: #{_lambda_.1} parent=0
    #allocation4 [shape = 'u8[16384]{0}', space=vmem, size = 0x4000, scoped, tag = 'output window, operand 1, single buffered']
    #allocation5 [shape = 's32[1]{0}', space=sflag, size = 0x4, scoped, tag = 'scoped memory for _lambda_.1']
    %16 = vsyncpa [#allocation5], 0
    // Predicated region
    $region2: #{_lambda_.1} parent=1 // pred_check
      _
    $region3: #{_lambda_.1} parent=1 // pred_check_branch
      %18 = sbr.rel (0) target = $region5
    $region4: #{_lambda_.1} parent=1 // pred_region
      _
    $region5: #{_lambda_.1} parent=1 // pred_fallthru
      _
    // Predicated region
    $region6: #{_lambda_.1} parent=1 // pred_check
      _
    $region7: #{_lambda_.1} parent=1 // pred_check_branch
      %20 = sbr.rel (0) target = $region9
    $region8: #{_lambda_.1} parent=1 // pred_region
      _
    $region9: #{_lambda_.1} parent=1 // pred_fallthru
      _
    // Predicated region
    $region10: #{_lambda_.1} parent=1 // pred_check
      _
    $region11: #{_lambda_.1} parent=1 // pred_check_branch
      %22 = sbr.rel (0) target = $region13
    $region12: #{_lambda_.1} parent=1 // pred_region
      _
    $region13: #{_lambda_.1} parent=1 // pred_fallthru
      _
    // Predicated region
    $region14: #{_lambda_.1} parent=1 // pred_check
      _
    $region15: #{_lambda_.1} parent=1 // pred_check_branch
      %24 = sbr.rel (0) target = $region17
    $region16: #{_lambda_.1} parent=1 // pred_region
      _
    $region17: #{_lambda_.1} parent=1 // pred_fallthru
      _
    // Predicated region
    $region18: #{_lambda_.1} parent=1 // pred_check
      _
    $region19: #{_lambda_.1} parent=1 // pred_check_branch
      %26 = sbr.rel (0) target = $region21
    $region20: #{_lambda_.1} parent=1 // pred_region
      _
    $region21: #{_lambda_.1} parent=1 // pred_fallthru
      _
    // Predicated region
    $region22: #{_lambda_.1} parent=1 // pred_check
      _
    $region23: #{_lambda_.1} parent=1 // pred_check_branch
      %28 = sbr.rel (0) target = $region25
    $region24: #{_lambda_.1} parent=1 // pred_region
      _
    $region25: #{_lambda_.1} parent=1 // pred_fallthru
      _
    // Predicated region
    $region26: #{_lambda_.1} parent=1 // pred_check
      _
    $region27: #{_lambda_.1} parent=1 // pred_check_branch
      %30 = sbr.rel (0) target = $region29
    $region28: #{_lambda_.1} parent=1 // pred_region
      _
    $region29: #{_lambda_.1} parent=1 // pred_fallthru
      _
    // Predicated region
    $region30: #{_lambda_.1} parent=1 // pred_check
      _
    $region31: #{_lambda_.1} parent=1 // pred_check_branch
      %32 = sbr.rel (0) target = $region33
    $region32: #{_lambda_.1} parent=1 // pred_region
      _
    $region33: #{_lambda_.1} parent=1 // pred_fallthru
      _
    // Predicated region
    $region34: #{_lambda_.1} parent=1 // pred_check
      _
    $region35: #{_lambda_.1} parent=1 // pred_check_branch
      %34 = sbr.rel (0) target = $region37
    $region36: #{_lambda_.1} parent=1 // pred_region
      _
    $region37: #{_lambda_.1} parent=1 // pred_fallthru
      _
    %v36 = vld [vmem:[%s0] sm:$0xff]
    %v37 = vld [vmem:[%s0 + $0x8] sm:$0xff]
    %v38 = vld [vmem:[%s0 + $0x10] sm:$0xff]
    %v39 = vld [vmem:[%s0 + $0x18] sm:$0xff]
    %v40 = vld [vmem:[%s0 + $0x20] sm:$0xff]
    %v41 = vld [vmem:[%s0 + $0x28] sm:$0xff]
    %v42 = vld [vmem:[%s0 + $0x30] sm:$0xff]
    %v43 = vld [vmem:[%s0 + $0x38] sm:$0xff]
    %v44 = vld [vmem:[%s0 + $0x40] sm:$0xff]
    %v45 = vld [vmem:[%s0 + $0x48] sm:$0xff]
    %v46 = vld [vmem:[%s0 + $0x50] sm:$0xff]
    %v47 = vld [vmem:[%s0 + $0x58] sm:$0xff]
    %v48 = vld [vmem:[%s0 + $0x60] sm:$0xff]
    %v49 = vld [vmem:[%s0 + $0x68] sm:$0xff]
    %v50 = vld [vmem:[%s0 + $0x70] sm:$0xff]
    %v51 = vld [vmem:[%s0 + $0x78] sm:$0xff]
    %v52 = vld [vmem:[%s0 + $0x80] sm:$0xff]
    %v53 = vld [vmem:[%s0 + $0x88] sm:$0xff]
    %v54 = vld [vmem:[%s0 + $0x90] sm:$0xff]
    %v55 = vld [vmem:[%s0 + $0x98] sm:$0xff]
    %v56 = vld [vmem:[%s0 + $0xa0] sm:$0xff]
    %v57 = vld [vmem:[%s0 + $0xa8] sm:$0xff]
    %v58 = vld [vmem:[%s0 + $0xb0] sm:$0xff]
    %v59 = vld [vmem:[%s0 + $0xb8] sm:$0xff]
    %v60 = vld [vmem:[%s0 + $0xc0] sm:$0xff]
    %v61 = vld [vmem:[%s0 + $0xc8] sm:$0xff]
    %v62 = vld [vmem:[%s0 + $0xd0] sm:$0xff]
    %v63 = vld [vmem:[%s0 + $0xd8] sm:$0xff]
    %v64 = vld [vmem:[%s0 + $0xe0] sm:$0xff]
    %v65 = vld [vmem:[%s0 + $0xe8] sm:$0xff]
    %v66 = vld [vmem:[%s0 + $0xf0] sm:$0xff]
    %v67 = vld [vmem:[%s0 + $0xf8] sm:$0xff]
    %v68 = vld [vmem:[%s0 + $0x100] sm:$0xff]
    %v69 = vld [vmem:[%s0 + $0x108] sm:$0xff]
    %v70 = vld [vmem:[%s0 + $0x110] sm:$0xff]
    %v71 = vld [vmem:[%s0 + $0x118] sm:$0xff]
    %v72 = vld [vmem:[%s0 + $0x120] sm:$0xff]
    %v73 = vld [vmem:[%s0 + $0x128] sm:$0xff]
    %v74 = vld [vmem:[%s0 + $0x130] sm:$0xff]
    %v75 = vld [vmem:[%s0 + $0x138] sm:$0xff]
    %v76 = vld [vmem:[%s0 + $0x140] sm:$0xff]
    %v77 = vld [vmem:[%s0 + $0x148] sm:$0xff]
    %v78 = vld [vmem:[%s0 + $0x150] sm:$0xff]
    %v79 = vld [vmem:[%s0 + $0x158] sm:$0xff]
    %v80 = vld [vmem:[%s0 + $0x160] sm:$0xff]
    %v81 = vld [vmem:[%s0 + $0x168] sm:$0xff]
    %v82 = vld [vmem:[%s0 + $0x170] sm:$0xff]
    %v83 = vld [vmem:[%s0 + $0x178] sm:$0xff]
    %v84 = vld [vmem:[%s0 + $0x180] sm:$0xff]
    %v85 = vld [vmem:[%s0 + $0x188] sm:$0xff]
    %v86 = vld [vmem:[%s0 + $0x190] sm:$0xff]
    %v87 = vld [vmem:[%s0 + $0x198] sm:$0xff]
    %v88 = vld [vmem:[%s0 + $0x1a0] sm:$0xff]
    %v89 = vld [vmem:[%s0 + $0x1a8] sm:$0xff]
    %v90 = vld [vmem:[%s0 + $0x1b0] sm:$0xff]
    %v91 = vld [vmem:[%s0 + $0x1b8] sm:$0xff]
    %v92 = vld [vmem:[%s0 + $0x1c0] sm:$0xff]
    %v93 = vld [vmem:[%s0 + $0x1c8] sm:$0xff]
    %v94 = vld [vmem:[%s0 + $0x1d0] sm:$0xff]
    %v95 = vld [vmem:[%s0 + $0x1d8] sm:$0xff]
    %v96 = vld [vmem:[%s0 + $0x1e0] sm:$0xff]
    %v97 = vld [vmem:[%s0 + $0x1e8] sm:$0xff]
    %v98 = vld [vmem:[%s0 + $0x1f0] sm:$0xff]
    %v99 = vld [vmem:[%s0 + $0x1f8] sm:$0xff]
    %v100 = vpack.c.bf16 %v37, %v36
    %v101 = vpack.c.bf16 %v39, %v38
    %v102 = vpack.c.bf16 %v41, %v40
    %v103 = vpack.c.bf16 %v43, %v42
    %v104 = vpack.c.bf16 %v45, %v44
    %v105 = vpack.c.bf16 %v47, %v46
    %v106 = vpack.c.bf16 %v49, %v48
    %v107 = vpack.c.bf16 %v51, %v50
    %v108 = vpack.c.bf16 %v53, %v52
    %v109 = vpack.c.bf16 %v55, %v54
    %v110 = vpack.c.bf16 %v57, %v56
    %v111 = vpack.c.bf16 %v59, %v58
    %v112 = vpack.c.bf16 %v61, %v60
    %v113 = vpack.c.bf16 %v63, %v62
    %v114 = vpack.c.bf16 %v65, %v64
    %v115 = vpack.c.bf16 %v67, %v66
    %v116 = vpack.c.bf16 %v69, %v68
    %v117 = vpack.c.bf16 %v71, %v70
    %v118 = vpack.c.bf16 %v73, %v72
    %v119 = vpack.c.bf16 %v75, %v74
    %v120 = vpack.c.bf16 %v77, %v76
    %v121 = vpack.c.bf16 %v79, %v78
    %v122 = vpack.c.bf16 %v81, %v80
    %v123 = vpack.c.bf16 %v83, %v82
    %v124 = vpack.c.bf16 %v85, %v84
    %v125 = vpack.c.bf16 %v87, %v86
    %v126 = vpack.c.bf16 %v89, %v88
    %v127 = vpack.c.bf16 %v91, %v90
    %v128 = vpack.c.bf16 %v93, %v92
    %v129 = vpack.c.bf16 %v95, %v94
    %v130 = vpack.c.bf16 %v97, %v96
    %v131 = vpack.c.bf16 %v99, %v98
    %v132 = vld [vmem:[%s2] sm:$0xf]
    %v133 = vpack.c.bf16 %v132, %v132
    %v134 = vld [vmem:[%s4] sm:$0x1]
    %v136 = vperm.slane %v134, 0
    %vm138 = vcmask 31744
    %v140 = vsel %vm138, %v100, 0
    %v143 = vsel %vm138, %v101, 0
    %v146 = vsel %vm138, %v102, 0
    %v149 = vsel %vm138, %v103, 0
    %v152 = vsel %vm138, %v104, 0
    %v155 = vsel %vm138, %v105, 0
    %v158 = vsel %vm138, %v106, 0
    %v161 = vsel %vm138, %v107, 0
    %v164 = vsel %vm138, %v108, 0
    %v167 = vsel %vm138, %v109, 0
    %v170 = vsel %vm138, %v110, 0
    %v173 = vsel %vm138, %v111, 0
    %v176 = vsel %vm138, %v112, 0
    %v179 = vsel %vm138, %v113, 0
    %v182 = vsel %vm138, %v114, 0
    %v185 = vsel %vm138, %v115, 0
    %v188 = vsel %vm138, %v116, 0
    %v191 = vsel %vm138, %v117, 0
    %v194 = vsel %vm138, %v118, 0
    %v197 = vsel %vm138, %v119, 0
    %v200 = vsel %vm138, %v120, 0
    %v203 = vsel %vm138, %v121, 0
    %v206 = vsel %vm138, %v122, 0
    %v209 = vsel %vm138, %v123, 0
    %v212 = vsel %vm138, %v124, 0
    %v215 = vsel %vm138, %v125, 0
    %v218 = vsel %vm138, %v126, 0
    %v221 = vsel %vm138, %v127, 0
    %v224 = vsel %vm138, %v128, 0
    %v227 = vsel %vm138, %v129, 0
    %v230 = vsel %vm138, %v130, 0
    %v233 = vsel %vm138, %v131, 0
    %vm235 = vcmask 1041408
    %v237 = vsel %vm235, %v133, 0
    %239 = vmatpush.bf16.msra.mxu0 0
    %240 = vmatpush.bf16.msra.mxu0 0
    %241 = vmatpush.bf16.msra.mxu0 0
    %242 = vmatpush.bf16.msra.mxu0 0
    %243 = vmatpush.bf16.msra.mxu0 0
    %244 = vmatpush.bf16.msra.mxu0 0
    %245 = vmatpush.bf16.msra.mxu0 0
    %246 = vmatpush.bf16.msra.mxu0 %v237
    %247 = vmatmul.bf16.gmra.mxu0 %v140
    %v248 = vpop.f32.mrf.mxu0
    %v249 = vadd.f32 %v136, %v248
    %v250 = vpop.f32.mrf.mxu0
    %v251 = vadd.f32 %v136, %v250
    %252 = vmatmul.bf16.gmra.mxu0 %v143
    %v253 = vpop.f32.mrf.mxu0
    %v254 = vadd.f32 %v136, %v253
    %v255 = vpop.f32.mrf.mxu0
    %v256 = vadd.f32 %v136, %v255
    %257 = vmatmul.bf16.gmra.mxu0 %v146
    %v258 = vpop.f32.mrf.mxu0
    %v259 = vadd.f32 %v136, %v258
    %v260 = vpop.f32.mrf.mxu0
    %v261 = vadd.f32 %v136, %v260
    %262 = vmatmul.bf16.gmra.mxu0 %v149
    %v263 = vpop.f32.mrf.mxu0
    %v264 = vadd.f32 %v136, %v263
    %v265 = vpop.f32.mrf.mxu0
    %v266 = vadd.f32 %v136, %v265
    %267 = vmatmul.bf16.gmra.mxu0 %v152
    %v268 = vpop.f32.mrf.mxu0
    %v269 = vadd.f32 %v136, %v268
    %v270 = vpop.f32.mrf.mxu0
    %v271 = vadd.f32 %v136, %v270
    %272 = vmatmul.bf16.gmra.mxu0 %v155
    %v273 = vpop.f32.mrf.mxu0
    %v274 = vadd.f32 %v136, %v273
    %v275 = vpop.f32.mrf.mxu0
    %v276 = vadd.f32 %v136, %v275
    %277 = vmatmul.bf16.gmra.mxu0 %v158
    %v278 = vpop.f32.mrf.mxu0
    %v279 = vadd.f32 %v136, %v278
    %v280 = vpop.f32.mrf.mxu0
    %v281 = vadd.f32 %v136, %v280
    %282 = vmatmul.bf16.gmra.mxu0 %v161
    %v283 = vpop.f32.mrf.mxu0
    %v284 = vadd.f32 %v136, %v283
    %v285 = vpop.f32.mrf.mxu0
    %v286 = vadd.f32 %v136, %v285
    %287 = vmatmul.bf16.gmra.mxu0 %v164
    %v288 = vpop.f32.mrf.mxu0
    %v289 = vadd.f32 %v136, %v288
    %v290 = vpop.f32.mrf.mxu0
    %v291 = vadd.f32 %v136, %v290
    %292 = vmatmul.bf16.gmra.mxu0 %v167
    %v293 = vpop.f32.mrf.mxu0
    %v294 = vadd.f32 %v136, %v293
    %v295 = vpop.f32.mrf.mxu0
    %v296 = vadd.f32 %v136, %v295
    %297 = vmatmul.bf16.gmra.mxu0 %v170
    %v298 = vpop.f32.mrf.mxu0
    %v299 = vadd.f32 %v136, %v298
    %v300 = vpop.f32.mrf.mxu0
    %v301 = vadd.f32 %v136, %v300
    %302 = vmatmul.bf16.gmra.mxu0 %v173
    %v303 = vpop.f32.mrf.mxu0
    %v304 = vadd.f32 %v136, %v303
    %v305 = vpop.f32.mrf.mxu0
    %v306 = vadd.f32 %v136, %v305
    %307 = vmatmul.bf16.gmra.mxu0 %v176
    %v308 = vpop.f32.mrf.mxu0
    %v309 = vadd.f32 %v136, %v308
    %v310 = vpop.f32.mrf.mxu0
    %v311 = vadd.f32 %v136, %v310
    %312 = vmatmul.bf16.gmra.mxu0 %v179
    %v313 = vpop.f32.mrf.mxu0
    %v314 = vadd.f32 %v136, %v313
    %v315 = vpop.f32.mrf.mxu0
    %v316 = vadd.f32 %v136, %v315
    %317 = vmatmul.bf16.gmra.mxu0 %v182
    %v318 = vpop.f32.mrf.mxu0
    %v319 = vadd.f32 %v136, %v318
    %v320 = vpop.f32.mrf.mxu0
    %v321 = vadd.f32 %v136, %v320
    %322 = vmatmul.bf16.gmra.mxu0 %v185
    %v323 = vpop.f32.mrf.mxu0
    %v324 = vadd.f32 %v136, %v323
    %v325 = vpop.f32.mrf.mxu0
    %v326 = vadd.f32 %v136, %v325
    %327 = vmatmul.bf16.gmra.mxu0 %v188
    %v328 = vpop.f32.mrf.mxu0
    %v329 = vadd.f32 %v136, %v328
    %v330 = vpop.f32.mrf.mxu0
    %v331 = vadd.f32 %v136, %v330
    %332 = vmatmul.bf16.gmra.mxu0 %v191
    %v333 = vpop.f32.mrf.mxu0
    %v334 = vadd.f32 %v136, %v333
    %v335 = vpop.f32.mrf.mxu0
    %v336 = vadd.f32 %v136, %v335
    %337 = vmatmul.bf16.gmra.mxu0 %v194
    %v338 = vpop.f32.mrf.mxu0
    %v339 = vadd.f32 %v136, %v338
    %v340 = vpop.f32.mrf.mxu0
    %v341 = vadd.f32 %v136, %v340
    %342 = vmatmul.bf16.gmra.mxu0 %v197
    %v343 = vpop.f32.mrf.mxu0
    %v344 = vadd.f32 %v136, %v343
    %v345 = vpop.f32.mrf.mxu0
    %v346 = vadd.f32 %v136, %v345
    %347 = vmatmul.bf16.gmra.mxu0 %v200
    %v348 = vpop.f32.mrf.mxu0
    %v349 = vadd.f32 %v136, %v348
    %v350 = vpop.f32.mrf.mxu0
    %v351 = vadd.f32 %v136, %v350
    %352 = vmatmul.bf16.gmra.mxu0 %v203
    %v353 = vpop.f32.mrf.mxu0
    %v354 = vadd.f32 %v136, %v353
    %v355 = vpop.f32.mrf.mxu0
    %v356 = vadd.f32 %v136, %v355
    %357 = vmatmul.bf16.gmra.mxu0 %v206
    %v358 = vpop.f32.mrf.mxu0
    %v359 = vadd.f32 %v136, %v358
    %v360 = vpop.f32.mrf.mxu0
    %v361 = vadd.f32 %v136, %v360
    %362 = vmatmul.bf16.gmra.mxu0 %v209
    %v363 = vpop.f32.mrf.mxu0
    %v364 = vadd.f32 %v136, %v363
    %v365 = vpop.f32.mrf.mxu0
    %v366 = vadd.f32 %v136, %v365
    %367 = vmatmul.bf16.gmra.mxu0 %v212
    %v368 = vpop.f32.mrf.mxu0
    %v369 = vadd.f32 %v136, %v368
    %v370 = vpop.f32.mrf.mxu0
    %v371 = vadd.f32 %v136, %v370
    %372 = vmatmul.bf16.gmra.mxu0 %v215
    %v373 = vpop.f32.mrf.mxu0
    %v374 = vadd.f32 %v136, %v373
    %v375 = vpop.f32.mrf.mxu0
    %v376 = vadd.f32 %v136, %v375
    %377 = vmatmul.bf16.gmra.mxu0 %v218
    %v378 = vpop.f32.mrf.mxu0
    %v379 = vadd.f32 %v136, %v378
    %v380 = vpop.f32.mrf.mxu0
    %v381 = vadd.f32 %v136, %v380
    %382 = vmatmul.bf16.gmra.mxu0 %v221
    %v383 = vpop.f32.mrf.mxu0
    %v384 = vadd.f32 %v136, %v383
    %v385 = vpop.f32.mrf.mxu0
    %v386 = vadd.f32 %v136, %v385
    %387 = vmatmul.bf16.gmra.mxu0 %v224
    %v388 = vpop.f32.mrf.mxu0
    %v389 = vadd.f32 %v136, %v388
    %v390 = vpop.f32.mrf.mxu0
    %v391 = vadd.f32 %v136, %v390
    %392 = vmatmul.bf16.gmra.mxu0 %v227
    %v393 = vpop.f32.mrf.mxu0
    %v394 = vadd.f32 %v136, %v393
    %v395 = vpop.f32.mrf.mxu0
    %v396 = vadd.f32 %v136, %v395
    %397 = vmatmul.bf16.gmra.mxu0 %v230
    %v398 = vpop.f32.mrf.mxu0
    %v399 = vadd.f32 %v136, %v398
    %v400 = vpop.f32.mrf.mxu0
    %v401 = vadd.f32 %v136, %v400
    %402 = vmatmul.bf16.gmra.mxu0 %v233
    %v403 = vpop.f32.mrf.mxu0
    %v404 = vadd.f32 %v136, %v403
    %v405 = vpop.f32.mrf.mxu0
    %v406 = vadd.f32 %v136, %v405
    %407 = vdwg.mxu0
    %vm408 = vcmask 785408
    %409 = vst.msk [vmem:[#allocation2] sm:$0xff] %vm408, %v249
    %410 = vst.msk [vmem:[#allocation2 + $0x8] sm:$0xff] %vm408, %v251
    %411 = vst.msk [vmem:[#allocation2 + $0x10] sm:$0xff] %vm408, %v254
    %412 = vst.msk [vmem:[#allocation2 + $0x18] sm:$0xff] %vm408, %v256
    %413 = vst.msk [vmem:[#allocation2 + $0x20] sm:$0xff] %vm408, %v259
    %414 = vst.msk [vmem:[#allocation2 + $0x28] sm:$0xff] %vm408, %v261
    %415 = vst.msk [vmem:[#allocation2 + $0x30] sm:$0xff] %vm408, %v264
    %416 = vst.msk [vmem:[#allocation2 + $0x38] sm:$0xff] %vm408, %v266
    %417 = vst.msk [vmem:[#allocation2 + $0x40] sm:$0xff] %vm408, %v269
    %418 = vst.msk [vmem:[#allocation2 + $0x48] sm:$0xff] %vm408, %v271
    %419 = vst.msk [vmem:[#allocation2 + $0x50] sm:$0xff] %vm408, %v274
    %420 = vst.msk [vmem:[#allocation2 + $0x58] sm:$0xff] %vm408, %v276
    %421 = vst.msk [vmem:[#allocation2 + $0x60] sm:$0xff] %vm408, %v279
    %422 = vst.msk [vmem:[#allocation2 + $0x68] sm:$0xff] %vm408, %v281
    %423 = vst.msk [vmem:[#allocation2 + $0x70] sm:$0xff] %vm408, %v284
    %424 = vst.msk [vmem:[#allocation2 + $0x78] sm:$0xff] %vm408, %v286
    %425 = vst.msk [vmem:[#allocation2 + $0x80] sm:$0xff] %vm408, %v289
    %426 = vst.msk [vmem:[#allocation2 + $0x88] sm:$0xff] %vm408, %v291
    %427 = vst.msk [vmem:[#allocation2 + $0x90] sm:$0xff] %vm408, %v294
    %428 = vst.msk [vmem:[#allocation2 + $0x98] sm:$0xff] %vm408, %v296
    %429 = vst.msk [vmem:[#allocation2 + $0xa0] sm:$0xff] %vm408, %v299
    %430 = vst.msk [vmem:[#allocation2 + $0xa8] sm:$0xff] %vm408, %v301
    %431 = vst.msk [vmem:[#allocation2 + $0xb0] sm:$0xff] %vm408, %v304
    %432 = vst.msk [vmem:[#allocation2 + $0xb8] sm:$0xff] %vm408, %v306
    %433 = vst.msk [vmem:[#allocation2 + $0xc0] sm:$0xff] %vm408, %v309
    %434 = vst.msk [vmem:[#allocation2 + $0xc8] sm:$0xff] %vm408, %v311
    %435 = vst.msk [vmem:[#allocation2 + $0xd0] sm:$0xff] %vm408, %v314
    %436 = vst.msk [vmem:[#allocation2 + $0xd8] sm:$0xff] %vm408, %v316
    %437 = vst.msk [vmem:[#allocation2 + $0xe0] sm:$0xff] %vm408, %v319
    %438 = vst.msk [vmem:[#allocation2 + $0xe8] sm:$0xff] %vm408, %v321
    %439 = vst.msk [vmem:[#allocation2 + $0xf0] sm:$0xff] %vm408, %v324
    %440 = vst.msk [vmem:[#allocation2 + $0xf8] sm:$0xff] %vm408, %v326
    %441 = vst.msk [vmem:[#allocation2 + $0x100] sm:$0xff] %vm408, %v329
    %442 = vst.msk [vmem:[#allocation2 + $0x108] sm:$0xff] %vm408, %v331
    %443 = vst.msk [vmem:[#allocation2 + $0x110] sm:$0xff] %vm408, %v334
    %444 = vst.msk [vmem:[#allocation2 + $0x118] sm:$0xff] %vm408, %v336
    %445 = vst.msk [vmem:[#allocation2 + $0x120] sm:$0xff] %vm408, %v339
    %446 = vst.msk [vmem:[#allocation2 + $0x128] sm:$0xff] %vm408, %v341
    %447 = vst.msk [vmem:[#allocation2 + $0x130] sm:$0xff] %vm408, %v344
    %448 = vst.msk [vmem:[#allocation2 + $0x138] sm:$0xff] %vm408, %v346
    %449 = vst.msk [vmem:[#allocation2 + $0x140] sm:$0xff] %vm408, %v349
    %450 = vst.msk [vmem:[#allocation2 + $0x148] sm:$0xff] %vm408, %v351
    %451 = vst.msk [vmem:[#allocation2 + $0x150] sm:$0xff] %vm408, %v354
    %452 = vst.msk [vmem:[#allocation2 + $0x158] sm:$0xff] %vm408, %v356
    %453 = vst.msk [vmem:[#allocation2 + $0x160] sm:$0xff] %vm408, %v359
    %454 = vst.msk [vmem:[#allocation2 + $0x168] sm:$0xff] %vm408, %v361
    %455 = vst.msk [vmem:[#allocation2 + $0x170] sm:$0xff] %vm408, %v364
    %456 = vst.msk [vmem:[#allocation2 + $0x178] sm:$0xff] %vm408, %v366
    %457 = vst.msk [vmem:[#allocation2 + $0x180] sm:$0xff] %vm408, %v369
    %458 = vst.msk [vmem:[#allocation2 + $0x188] sm:$0xff] %vm408, %v371
    %459 = vst.msk [vmem:[#allocation2 + $0x190] sm:$0xff] %vm408, %v374
    %460 = vst.msk [vmem:[#allocation2 + $0x198] sm:$0xff] %vm408, %v376
    %461 = vst.msk [vmem:[#allocation2 + $0x1a0] sm:$0xff] %vm408, %v379
    %462 = vst.msk [vmem:[#allocation2 + $0x1a8] sm:$0xff] %vm408, %v381
    %463 = vst.msk [vmem:[#allocation2 + $0x1b0] sm:$0xff] %vm408, %v384
    %464 = vst.msk [vmem:[#allocation2 + $0x1b8] sm:$0xff] %vm408, %v386
    %465 = vst.msk [vmem:[#allocation2 + $0x1c0] sm:$0xff] %vm408, %v389
    %466 = vst.msk [vmem:[#allocation2 + $0x1c8] sm:$0xff] %vm408, %v391
    %467 = vst.msk [vmem:[#allocation2 + $0x1d0] sm:$0xff] %vm408, %v394
    %468 = vst.msk [vmem:[#allocation2 + $0x1d8] sm:$0xff] %vm408, %v396
    %469 = vst.msk [vmem:[#allocation2 + $0x1e0] sm:$0xff] %vm408, %v399
    %470 = vst.msk [vmem:[#allocation2 + $0x1e8] sm:$0xff] %vm408, %v401
    %471 = vst.msk [vmem:[#allocation2 + $0x1f0] sm:$0xff] %vm408, %v404
    %472 = vst.msk [vmem:[#allocation2 + $0x1f8] sm:$0xff] %vm408, %v406
    %v473 = vld [vmem:[%s3] sm:$0xff]
    %v474 = vld [vmem:[%s3 + $0x8] sm:$0xff]
    %v475 = vld [vmem:[%s3 + $0x10] sm:$0xff]
    %v476 = vld [vmem:[%s3 + $0x18] sm:$0xff]
    %v477 = vpack.c.bf16 %v474, %v473
    %v478 = vpack.c.bf16 %v476, %v475
    %v479 = vld [vmem:[%s5] sm:$0x1]
    %v480 = vld [vmem:[%s1] sm:$0xff]
    %v481 = vld [vmem:[%s1 + $0x8] sm:$0xff]
    %v482 = vld [vmem:[%s1 + $0x10] sm:$0xff]
    %v483 = vld [vmem:[%s1 + $0x18] sm:$0xff]
    %v484 = vld [vmem:[#allocation2] sm:$0xff]
    %v485 = vld [vmem:[#allocation2 + $0x8] sm:$0xff]
    %v486 = vld [vmem:[#allocation2 + $0x10] sm:$0xff]
    %v487 = vld [vmem:[#allocation2 + $0x18] sm:$0xff]
    %v488 = vpack.c.bf16 %v481, %v480
    %v489 = vpack.c.bf16 %v483, %v482
    %vm490 = vcmask 261120
    %v492 = vsel %vm490, %v488, 0
    %v495 = vsel %vm490, %v489, 0
    %497 = vmatpush.bf16.msra.mxu0 0
    %498 = vmatpush.bf16.msra.mxu0 0
    %499 = vmatpush.bf16.msra.mxu0 0
    %500 = vmatpush.bf16.msra.mxu0 0
    %501 = vmatpush.bf16.msra.mxu0 0
    %502 = vmatpush.bf16.msra.mxu0 0
    %503 = vmatpush.bf16.msra.mxu0 %v478
    %504 = vmatpush.bf16.msra.mxu0 %v477
    %505 = vmatmul.bf16.gmra.mxu0 %v492
    %v506 = vpop.f32.mrf.mxu0
    %v507 = vadd.f32 0.0, %v506
    %v508 = vpop.f32.mrf.mxu0
    %v509 = vadd.f32 0.0, %v508
    %510 = vmatmul.bf16.gmra.mxu0 %v495
    %v511 = vpop.f32.mrf.mxu0
    %v512 = vadd.f32 0.0, %v511
    %v513 = vpop.f32.mrf.mxu0
    %v514 = vadd.f32 0.0, %v513
    %515 = vdwg.mxu0
    %v516 = vadd.f32 %v484, %v507
    %v517 = vadd.f32 %v485, %v509
    %v518 = vadd.f32 %v486, %v512
    %v519 = vadd.f32 %v487, %v514
    %v520 = vxor.u32 %v516, 2147483648
    %v521 = vxor.u32 %v517, 2147483648
    %v522 = vxor.u32 %v518, 2147483648
    %v523 = vxor.u32 %v519, 2147483648
    %v524 = vmul.f32 %v520, 1.442695
    %v525 = vpow.pop %v524
    %v526 = vmul.f32 %v521, 1.442695
    %v527 = vpow.pop %v526
    %v528 = vmul.f32 %v522, 1.442695
    %v529 = vpow.pop %v528
    %v530 = vmul.f32 %v523, 1.442695
    %v531 = vpow.pop %v530
    %v532 = vadd.f32 %v525, 1.0
    %v533 = vadd.f32 %v527, 1.0
    %v534 = vadd.f32 %v529, 1.0
    %v535 = vadd.f32 %v531, 1.0
    %v536 = vrcp.pop %v532
    %v537 = vmul.f32 %v532, %v536
    %v538 = vsub.f32 1.0, %v537
    %v539 = vmul.f32 %v536, %v538
    %v540 = vadd.f32 %v536, %v539
    %vm541 = vweird.f32 %v532
    %vm542 = vweird.f32 %v536
    %vm543 = vmor %vm541, %vm542
    %v544 = vsel %vm543, %v536, %v540
    %v545 = vand.u32 2147483647, %v532
    %vm546 = vcmp.eq.f32.partialorder %v545, 8.507059e+37
    %v547 = vand.u32 %v532, 2147483648
    %v548 = vor.u32 1.1754944e-38, %v547
    %v549 = vsel %vm546, %v548, %v544
    %v550 = vmul.f32 1.0, %v549
    %v551 = vrcp.pop %v533
    %v552 = vmul.f32 %v533, %v551
    %v553 = vsub.f32 1.0, %v552
    %v554 = vmul.f32 %v551, %v553
    %v555 = vadd.f32 %v551, %v554
    %vm556 = vweird.f32 %v533
    %vm557 = vweird.f32 %v551
    %vm558 = vmor %vm556, %vm557
    %v559 = vsel %vm558, %v551, %v555
    %v560 = vand.u32 2147483647, %v533
    %vm561 = vcmp.eq.f32.partialorder %v560, 8.507059e+37
    %v562 = vand.u32 %v533, 2147483648
    %v563 = vor.u32 1.1754944e-38, %v562
    %v564 = vsel %vm561, %v563, %v559
    %v565 = vmul.f32 1.0, %v564
    %v566 = vrcp.pop %v534
    %v567 = vmul.f32 %v534, %v566
    %v568 = vsub.f32 1.0, %v567
    %v569 = vmul.f32 %v566, %v568
    %v570 = vadd.f32 %v566, %v569
    %vm571 = vweird.f32 %v534
    %vm572 = vweird.f32 %v566
    %vm573 = vmor %vm571, %vm572
    %v574 = vsel %vm573, %v566, %v570
    %v575 = vand.u32 2147483647, %v534
    %vm576 = vcmp.eq.f32.partialorder %v575, 8.507059e+37
    %v577 = vand.u32 %v534, 2147483648
    %v578 = vor.u32 1.1754944e-38, %v577
    %v579 = vsel %vm576, %v578, %v574
    %v580 = vmul.f32 1.0, %v579
    %v581 = vrcp.pop %v535
    %v582 = vmul.f32 %v535, %v581
    %v583 = vsub.f32 1.0, %v582
    %v584 = vmul.f32 %v581, %v583
    %v585 = vadd.f32 %v581, %v584
    %vm586 = vweird.f32 %v535
    %vm587 = vweird.f32 %v581
    %vm588 = vmor %vm586, %vm587
    %v589 = vsel %vm588, %v581, %v585
    %v590 = vand.u32 2147483647, %v535
    %vm591 = vcmp.eq.f32.partialorder %v590, 8.507059e+37
    %v592 = vand.u32 %v535, 2147483648
    %v593 = vor.u32 1.1754944e-38, %v592
    %v594 = vsel %vm591, %v593, %v589
    %v595 = vmul.f32 1.0, %v594
    %v597 = vperm.slane %v479, 0
    %598 = vrot.lane.b32.xlu0 %v597, 64
    %v599 = vpop.permute.xlu0 %598
    %v601 = vadd.f32 %v507, %v599
    %v602 = vadd.f32 %v509, %v599
    %v603 = vadd.f32 %v512, %v599
    %v604 = vadd.f32 %v514, %v599
    %609 = vrot.lane.b32.xlu0 %v601, 64
    %v610 = vpop.permute.xlu0 %609
    %611 = vrot.lane.b32.xlu0 %v602, 64
    %v612 = vpop.permute.xlu0 %611
    %613 = vrot.lane.b32.xlu0 %v603, 64
    %v614 = vpop.permute.xlu0 %613
    %615 = vrot.lane.b32.xlu0 %v604, 64
    %v616 = vpop.permute.xlu0 %615
    %v621 = vmul.f32 %v550, %v610
    %v622 = vmul.f32 %v565, %v612
    %v623 = vmul.f32 %v580, %v614
    %v624 = vmul.f32 %v595, %v616
    %629 = vrot.lane.b32.xlu0 %v621, 64
    %v630 = vpop.permute.xlu0 %629
    %631 = vrot.lane.b32.xlu0 %v622, 64
    %v632 = vpop.permute.xlu0 %631
    %633 = vrot.lane.b32.xlu0 %v623, 64
    %v634 = vpop.permute.xlu0 %633
    %635 = vrot.lane.b32.xlu0 %v624, 64
    %v636 = vpop.permute.xlu0 %635
    %v641 = vadd.f32 %v484, %v630
    %v642 = vadd.f32 %v485, %v632
    %v643 = vadd.f32 %v486, %v634
    %v644 = vadd.f32 %v487, %v636
    %v645 = vtanh.pop %v641
    %v646 = vtanh.pop %v642
    %v647 = vtanh.pop %v643
    %v648 = vtanh.pop %v644
    %653 = vrot.lane.b32.xlu0 %v645, 64
    %v654 = vpop.permute.xlu0 %653
    %655 = vrot.lane.b32.xlu0 %v646, 64
    %v656 = vpop.permute.xlu0 %655
    %657 = vrot.lane.b32.xlu0 %v647, 64
    %v658 = vpop.permute.xlu0 %657
    %659 = vrot.lane.b32.xlu0 %v648, 64
    %v660 = vpop.permute.xlu0 %659
    %v665 = vsub.f32 %v480, %v654
    %v666 = vsub.f32 %v481, %v656
    %v667 = vsub.f32 %v482, %v658
    %v668 = vsub.f32 %v483, %v660
    %673 = vrot.lane.b32.xlu0 %v665, 32
    %v674 = vpop.permute.xlu0 %673
    %675 = vrot.lane.b32.xlu0 %v666, 32
    %v676 = vpop.permute.xlu0 %675
    %677 = vrot.lane.b32.xlu0 %v667, 32
    %v678 = vpop.permute.xlu0 %677
    %679 = vrot.lane.b32.xlu0 %v668, 32
    %v680 = vpop.permute.xlu0 %679
    %v685 = vmul.f32 %v550, %v674
    %v686 = vmul.f32 %v565, %v676
    %v687 = vmul.f32 %v580, %v678
    %v688 = vmul.f32 %v595, %v680
    %693 = vrot.lane.b32.xlu0 %v685, 32
    %v694 = vpop.permute.xlu0 %693
    %695 = vrot.lane.b32.xlu0 %v686, 32
    %v696 = vpop.permute.xlu0 %695
    %697 = vrot.lane.b32.xlu0 %v687, 32
    %v698 = vpop.permute.xlu0 %697
    %699 = vrot.lane.b32.xlu0 %v688, 32
    %v700 = vpop.permute.xlu0 %699
    %v705 = vadd.f32 %v645, %v694
    %v706 = vadd.f32 %v646, %v696
    %v707 = vadd.f32 %v647, %v698
    %v708 = vadd.f32 %v648, %v700
    %713 = vrot.lane.b32.xlu0 %v705, 64
    %v714 = vpop.permute.xlu0 %713
    %715 = vrot.lane.b32.xlu0 %v706, 64
    %v716 = vpop.permute.xlu0 %715
    %717 = vrot.lane.b32.xlu0 %v707, 64
    %v718 = vpop.permute.xlu0 %717
    %719 = vrot.lane.b32.xlu0 %v708, 64
    %v720 = vpop.permute.xlu0 %719
    %725 = vst.msk [vmem:[#allocation3] sm:$0xff] %vm490, %v714
    %726 = vst.msk [vmem:[#allocation3 + $0x8] sm:$0xff] %vm490, %v716
    %727 = vst.msk [vmem:[#allocation3 + $0x10] sm:$0xff] %vm490, %v718
    %728 = vst.msk [vmem:[#allocation3 + $0x18] sm:$0xff] %vm490, %v720
    %v729 = vld [vmem:[#allocation2 + $0x20] sm:$0xff]
    %v730 = vld [vmem:[#allocation2 + $0x28] sm:$0xff]
    %v731 = vld [vmem:[#allocation2 + $0x30] sm:$0xff]
    %v732 = vld [vmem:[#allocation2 + $0x38] sm:$0xff]
    %v733 = vpack.c.bf16 %v706, %v705
    %v734 = vpack.c.bf16 %v708, %v707
    %737 = vrot.lane.b32.xlu0 %v733, 64
    %v738 = vpop.permute.xlu0 %737
    %739 = vrot.lane.b32.xlu0 %v734, 64
    %v740 = vpop.permute.xlu0 %739
    %v742 = vsel %vm490, %v738, 0
    %v745 = vsel %vm490, %v740, 0
    %747 = vmatpush.bf16.msra.mxu0 0
    %748 = vmatpush.bf16.msra.mxu0 0
    %749 = vmatpush.bf16.msra.mxu0 0
    %750 = vmatpush.bf16.msra.mxu0 0
    %751 = vmatpush.bf16.msra.mxu0 0
    %752 = vmatpush.bf16.msra.mxu0 0
    %753 = vmatpush.bf16.msra.mxu0 %v478
    %754 = vmatpush.bf16.msra.mxu0 %v477
    %755 = vmatmul.bf16.gmra.mxu0 %v742
    %v756 = vpop.f32.mrf.mxu0
    %v757 = vadd.f32 0.0, %v756
    %v758 = vpop.f32.mrf.mxu0
    %v759 = vadd.f32 0.0, %v758
    %760 = vmatmul.bf16.gmra.mxu0 %v745
    %v761 = vpop.f32.mrf.mxu0
    %v762 = vadd.f32 0.0, %v761
    %v763 = vpop.f32.mrf.mxu0
    %v764 = vadd.f32 0.0, %v763
    %765 = vdwg.mxu0
    %v766 = vadd.f32 %v729, %v757
    %v767 = vadd.f32 %v730, %v759
    %v768 = vadd.f32 %v731, %v762
    %v769 = vadd.f32 %v732, %v764
    %v770 = vxor.u32 %v766, 2147483648
    %v771 = vxor.u32 %v767, 2147483648
    %v772 = vxor.u32 %v768, 2147483648
    %v773 = vxor.u32 %v769, 2147483648
    %v774 = vmul.f32 %v770, 1.442695
    %v775 = vpow.pop %v774
    %v776 = vmul.f32 %v771, 1.442695
    %v777 = vpow.pop %v776
    %v778 = vmul.f32 %v772, 1.442695
    %v779 = vpow.pop %v778
    %v780 = vmul.f32 %v773, 1.442695
    %v781 = vpow.pop %v780
    %v782 = vadd.f32 %v775, 1.0
    %v783 = vadd.f32 %v777, 1.0
    %v784 = vadd.f32 %v779, 1.0
    %v785 = vadd.f32 %v781, 1.0
    %v786 = vrcp.pop %v782
    %v787 = vmul.f32 %v782, %v786
    %v788 = vsub.f32 1.0, %v787
    %v789 = vmul.f32 %v786, %v788
    %v790 = vadd.f32 %v786, %v789
    %vm791 = vweird.f32 %v782
    %vm792 = vweird.f32 %v786
    %vm793 = vmor %vm791, %vm792
    %v794 = vsel %vm793, %v786, %v790
    %v795 = vand.u32 2147483647, %v782
    %vm796 = vcmp.eq.f32.partialorder %v795, 8.507059e+37
    %v797 = vand.u32 %v782, 2147483648
    %v798 = vor.u32 1.1754944e-38, %v797
    %v799 = vsel %vm796, %v798, %v794
    %v800 = vmul.f32 1.0, %v799
    %v801 = vrcp.pop %v783
    %v802 = vmul.f32 %v783, %v801
    %v803 = vsub.f32 1.0, %v802
    %v804 = vmul.f32 %v801, %v803
    %v805 = vadd.f32 %v801, %v804
    %vm806 = vweird.f32 %v783
    %vm807 = vweird.f32 %v801
    %vm808 = vmor %vm806, %vm807
    %v809 = vsel %vm808, %v801, %v805
    %v810 = vand.u32 2147483647, %v783
    %vm811 = vcmp.eq.f32.partialorder %v810, 8.507059e+37
    %v812 = vand.u32 %v783, 2147483648
    %v813 = vor.u32 1.1754944e-38, %v812
    %v814 = vsel %vm811, %v813, %v809
    %v815 = vmul.f32 1.0, %v814
    %v816 = vrcp.pop %v784
    %v817 = vmul.f32 %v784, %v816
    %v818 = vsub.f32 1.0, %v817
    %v819 = vmul.f32 %v816, %v818
    %v820 = vadd.f32 %v816, %v819
    %vm821 = vweird.f32 %v784
    %vm822 = vweird.f32 %v816
    %vm823 = vmor %vm821, %vm822
    %v824 = vsel %vm823, %v816, %v820
    %v825 = vand.u32 2147483647, %v784
    %vm826 = vcmp.eq.f32.partialorder %v825, 8.507059e+37
    %v827 = vand.u32 %v784, 2147483648
    %v828 = vor.u32 1.1754944e-38, %v827
    %v829 = vsel %vm826, %v828, %v824
    %v830 = vmul.f32 1.0, %v829
    %v831 = vrcp.pop %v785
    %v832 = vmul.f32 %v785, %v831
    %v833 = vsub.f32 1.0, %v832
    %v834 = vmul.f32 %v831, %v833
    %v835 = vadd.f32 %v831, %v834
    %vm836 = vweird.f32 %v785
    %vm837 = vweird.f32 %v831
    %vm838 = vmor %vm836, %vm837
    %v839 = vsel %vm838, %v831, %v835
    %v840 = vand.u32 2147483647, %v785
    %vm841 = vcmp.eq.f32.partialorder %v840, 8.507059e+37
    %v842 = vand.u32 %v785, 2147483648
    %v843 = vor.u32 1.1754944e-38, %v842
    %v844 = vsel %vm841, %v843, %v839
    %v845 = vmul.f32 1.0, %v844
    %v846 = vadd.f32 %v757, %v599
    %v847 = vadd.f32 %v759, %v599
    %v848 = vadd.f32 %v762, %v599
    %v849 = vadd.f32 %v764, %v599
    %854 = vrot.lane.b32.xlu0 %v846, 64
    %v855 = vpop.permute.xlu0 %854
    %856 = vrot.lane.b32.xlu0 %v847, 64
    %v857 = vpop.permute.xlu0 %856
    %858 = vrot.lane.b32.xlu0 %v848, 64
    %v859 = vpop.permute.xlu0 %858
    %860 = vrot.lane.b32.xlu0 %v849, 64
    %v861 = vpop.permute.xlu0 %860
    %v866 = vmul.f32 %v800, %v855
    %v867 = vmul.f32 %v815, %v857
    %v868 = vmul.f32 %v830, %v859
    %v869 = vmul.f32 %v845, %v861
    %874 = vrot.lane.b32.xlu0 %v866, 64
    %v875 = vpop.permute.xlu0 %874
    %876 = vrot.lane.b32.xlu0 %v867, 64
    %v877 = vpop.permute.xlu0 %876
    %878 = vrot.lane.b32.xlu0 %v868, 64
    %v879 = vpop.permute.xlu0 %878
    %880 = vrot.lane.b32.xlu0 %v869, 64
    %v881 = vpop.permute.xlu0 %880
    %v886 = vadd.f32 %v729, %v875
    %v887 = vadd.f32 %v730, %v877
    %v888 = vadd.f32 %v731, %v879
    %v889 = vadd.f32 %v732, %v881
    %v890 = vtanh.pop %v886
    %v891 = vtanh.pop %v887
    %v892 = vtanh.pop %v888
    %v893 = vtanh.pop %v889
    %v894 = vsub.f32 %v705, %v890
    %v895 = vsub.f32 %v706, %v891
    %v896 = vsub.f32 %v707, %v892
    %v897 = vsub.f32 %v708, %v893
    %902 = vrot.lane.b32.xlu0 %v894, 96
    %v903 = vpop.permute.xlu0 %902
    %904 = vrot.lane.b32.xlu0 %v895, 96
    %v905 = vpop.permute.xlu0 %904
    %906 = vrot.lane.b32.xlu0 %v896, 96
    %v907 = vpop.permute.xlu0 %906
    %908 = vrot.lane.b32.xlu0 %v897, 96
    %v909 = vpop.permute.xlu0 %908
    %v914 = vmul.f32 %v800, %v903
    %v915 = vmul.f32 %v815, %v905
    %v916 = vmul.f32 %v830, %v907
    %v917 = vmul.f32 %v845, %v909
    %922 = vrot.lane.b32.xlu0 %v914, 32
    %v923 = vpop.permute.xlu0 %922
    %924 = vrot.lane.b32.xlu0 %v915, 32
    %v925 = vpop.permute.xlu0 %924
    %926 = vrot.lane.b32.xlu0 %v916, 32
    %v927 = vpop.permute.xlu0 %926
    %928 = vrot.lane.b32.xlu0 %v917, 32
    %v929 = vpop.permute.xlu0 %928
    %v934 = vadd.f32 %v890, %v923
    %v935 = vadd.f32 %v891, %v925
    %v936 = vadd.f32 %v892, %v927
    %v937 = vadd.f32 %v893, %v929
    %942 = vrot.lane.b32.xlu0 %v934, 64
    %v943 = vpop.permute.xlu0 %942
    %944 = vrot.lane.b32.xlu0 %v935, 64
    %v945 = vpop.permute.xlu0 %944
    %946 = vrot.lane.b32.xlu0 %v936, 64
    %v947 = vpop.permute.xlu0 %946
    %948 = vrot.lane.b32.xlu0 %v937, 64
    %v949 = vpop.permute.xlu0 %948
    %954 = vst.msk [vmem:[#allocation3 + $0x20] sm:$0xff] %vm490, %v943
    %955 = vst.msk [vmem:[#allocation3 + $0x28] sm:$0xff] %vm490, %v945
    %956 = vst.msk [vmem:[#allocation3 + $0x30] sm:$0xff] %vm490, %v947
    %957 = vst.msk [vmem:[#allocation3 + $0x38] sm:$0xff] %vm490, %v949
    %v958 = vld [vmem:[#allocation2 + $0x40] sm:$0xff]
    %v959 = vld [vmem:[#allocation2 + $0x48] sm:$0xff]
    %v960 = vld [vmem:[#allocation2 + $0x50] sm:$0xff]
    %v961 = vld [vmem:[#allocation2 + $0x58] sm:$0xff]
    %v962 = vpack.c.bf16 %v935, %v934
    %v963 = vpack.c.bf16 %v937, %v936
    %966 = vrot.lane.b32.xlu0 %v962, 64
    %v967 = vpop.permute.xlu0 %966
    %968 = vrot.lane.b32.xlu0 %v963, 64
    %v969 = vpop.permute.xlu0 %968
    %v971 = vsel %vm490, %v967, 0
    %v974 = vsel %vm490, %v969, 0
    %976 = vmatpush.bf16.msra.mxu0 0
    %977 = vmatpush.bf16.msra.mxu0 0
    %978 = vmatpush.bf16.msra.mxu0 0
    %979 = vmatpush.bf16.msra.mxu0 0
    %980 = vmatpush.bf16.msra.mxu0 0
    %981 = vmatpush.bf16.msra.mxu0 0
    %982 = vmatpush.bf16.msra.mxu0 %v478
    %983 = vmatpush.bf16.msra.mxu0 %v477
    %984 = vmatmul.bf16.gmra.mxu0 %v971
    %v985 = vpop.f32.mrf.mxu0
    %v986 = vadd.f32 0.0, %v985
    %v987 = vpop.f32.mrf.mxu0
    %v988 = vadd.f32 0.0, %v987
    %989 = vmatmul.bf16.gmra.mxu0 %v974
    %v990 = vpop.f32.mrf.mxu0
    %v991 = vadd.f32 0.0, %v990
    %v992 = vpop.f32.mrf.mxu0
    %v993 = vadd.f32 0.0, %v992
    %994 = vdwg.mxu0
    %v995 = vadd.f32 %v958, %v986
    %v996 = vadd.f32 %v959, %v988
    %v997 = vadd.f32 %v960, %v991
    %v998 = vadd.f32 %v961, %v993
    %v999 = vxor.u32 %v995, 2147483648
    %v1000 = vxor.u32 %v996, 2147483648
    %v1001 = vxor.u32 %v997, 2147483648
    %v1002 = vxor.u32 %v998, 2147483648
    %v1003 = vmul.f32 %v999, 1.442695
    %v1004 = vpow.pop %v1003
    %v1005 = vmul.f32 %v1000, 1.442695
    %v1006 = vpow.pop %v1005
    %v1007 = vmul.f32 %v1001, 1.442695
    %v1008 = vpow.pop %v1007
    %v1009 = vmul.f32 %v1002, 1.442695
    %v1010 = vpow.pop %v1009
    %v1011 = vadd.f32 %v1004, 1.0
    %v1012 = vadd.f32 %v1006, 1.0
    %v1013 = vadd.f32 %v1008, 1.0
    %v1014 = vadd.f32 %v1010, 1.0
    %v1015 = vrcp.pop %v1011
    %v1016 = vmul.f32 %v1011, %v1015
    %v1017 = vsub.f32 1.0, %v1016
    %v1018 = vmul.f32 %v1015, %v1017
    %v1019 = vadd.f32 %v1015, %v1018
    %vm1020 = vweird.f32 %v1011
    %vm1021 = vweird.f32 %v1015
    %vm1022 = vmor %vm1020, %vm1021
    %v1023 = vsel %vm1022, %v1015, %v1019
    %v1024 = vand.u32 2147483647, %v1011
    %vm1025 = vcmp.eq.f32.partialorder %v1024, 8.507059e+37
    %v1026 = vand.u32 %v1011, 2147483648
    %v1027 = vor.u32 1.1754944e-38, %v1026
    %v1028 = vsel %vm1025, %v1027, %v1023
    %v1029 = vmul.f32 1.0, %v1028
    %v1030 = vrcp.pop %v1012
    %v1031 = vmul.f32 %v1012, %v1030
    %v1032 = vsub.f32 1.0, %v1031
    %v1033 = vmul.f32 %v1030, %v1032
    %v1034 = vadd.f32 %v1030, %v1033
    %vm1035 = vweird.f32 %v1012
    %vm1036 = vweird.f32 %v1030
    %vm1037 = vmor %vm1035, %vm1036
    %v1038 = vsel %vm1037, %v1030, %v1034
    %v1039 = vand.u32 2147483647, %v1012
    %vm1040 = vcmp.eq.f32.partialorder %v1039, 8.507059e+37
    %v1041 = vand.u32 %v1012, 2147483648
    %v1042 = vor.u32 1.1754944e-38, %v1041
    %v1043 = vsel %vm1040, %v1042, %v1038
    %v1044 = vmul.f32 1.0, %v1043
    %v1045 = vrcp.pop %v1013
    %v1046 = vmul.f32 %v1013, %v1045
    %v1047 = vsub.f32 1.0, %v1046
    %v1048 = vmul.f32 %v1045, %v1047
    %v1049 = vadd.f32 %v1045, %v1048
    %vm1050 = vweird.f32 %v1013
    %vm1051 = vweird.f32 %v1045
    %vm1052 = vmor %vm1050, %vm1051
    %v1053 = vsel %vm1052, %v1045, %v1049
    %v1054 = vand.u32 2147483647, %v1013
    %vm1055 = vcmp.eq.f32.partialorder %v1054, 8.507059e+37
    %v1056 = vand.u32 %v1013, 2147483648
    %v1057 = vor.u32 1.1754944e-38, %v1056
    %v1058 = vsel %vm1055, %v1057, %v1053
    %v1059 = vmul.f32 1.0, %v1058
    %v1060 = vrcp.pop %v1014
    %v1061 = vmul.f32 %v1014, %v1060
    %v1062 = vsub.f32 1.0, %v1061
    %v1063 = vmul.f32 %v1060, %v1062
    %v1064 = vadd.f32 %v1060, %v1063
    %vm1065 = vweird.f32 %v1014
    %vm1066 = vweird.f32 %v1060
    %vm1067 = vmor %vm1065, %vm1066
    %v1068 = vsel %vm1067, %v1060, %v1064
    %v1069 = vand.u32 2147483647, %v1014
    %vm1070 = vcmp.eq.f32.partialorder %v1069, 8.507059e+37
    %v1071 = vand.u32 %v1014, 2147483648
    %v1072 = vor.u32 1.1754944e-38, %v1071
    %v1073 = vsel %vm1070, %v1072, %v1068
    %v1074 = vmul.f32 1.0, %v1073
    %v1075 = vadd.f32 %v986, %v599
    %v1076 = vadd.f32 %v988, %v599
    %v1077 = vadd.f32 %v991, %v599
    %v1078 = vadd.f32 %v993, %v599
    %1083 = vrot.lane.b32.xlu0 %v1075, 64
    %v1084 = vpop.permute.xlu0 %1083
    %1085 = vrot.lane.b32.xlu0 %v1076, 64
    %v1086 = vpop.permute.xlu0 %1085
    %1087 = vrot.lane.b32.xlu0 %v1077, 64
    %v1088 = vpop.permute.xlu0 %1087
    %1089 = vrot.lane.b32.xlu0 %v1078, 64
    %v1090 = vpop.permute.xlu0 %1089
    %v1095 = vmul.f32 %v1029, %v1084
    %v1096 = vmul.f32 %v1044, %v1086
    %v1097 = vmul.f32 %v1059, %v1088
    %v1098 = vmul.f32 %v1074, %v1090
    %1103 = vrot.lane.b32.xlu0 %v1095, 64
    %v1104 = vpop.permute.xlu0 %1103
    %1105 = vrot.lane.b32.xlu0 %v1096, 64
    %v1106 = vpop.permute.xlu0 %1105
    %1107 = vrot.lane.b32.xlu0 %v1097, 64
    %v1108 = vpop.permute.xlu0 %1107
    %1109 = vrot.lane.b32.xlu0 %v1098, 64
    %v1110 = vpop.permute.xlu0 %1109
    %v1115 = vadd.f32 %v958, %v1104
    %v1116 = vadd.f32 %v959, %v1106
    %v1117 = vadd.f32 %v960, %v1108
    %v1118 = vadd.f32 %v961, %v1110
    %v1119 = vtanh.pop %v1115
    %v1120 = vtanh.pop %v1116
    %v1121 = vtanh.pop %v1117
    %v1122 = vtanh.pop %v1118
    %v1123 = vsub.f32 %v934, %v1119
    %v1124 = vsub.f32 %v935, %v1120
    %v1125 = vsub.f32 %v936, %v1121
    %v1126 = vsub.f32 %v937, %v1122
    %1131 = vrot.lane.b32.xlu0 %v1123, 96
    %v1132 = vpop.permute.xlu0 %1131
    %1133 = vrot.lane.b32.xlu0 %v1124, 96
    %v1134 = vpop.permute.xlu0 %1133
    %1135 = vrot.lane.b32.xlu0 %v1125, 96
    %v1136 = vpop.permute.xlu0 %1135
    %1137 = vrot.lane.b32.xlu0 %v1126, 96
    %v1138 = vpop.permute.xlu0 %1137
    %v1143 = vmul.f32 %v1029, %v1132
    %v1144 = vmul.f32 %v1044, %v1134
    %v1145 = vmul.f32 %v1059, %v1136
    %v1146 = vmul.f32 %v1074, %v1138
    %1151 = vrot.lane.b32.xlu0 %v1143, 32
    %v1152 = vpop.permute.xlu0 %1151
    %1153 = vrot.lane.b32.xlu0 %v1144, 32
    %v1154 = vpop.permute.xlu0 %1153
    %1155 = vrot.lane.b32.xlu0 %v1145, 32
    %v1156 = vpop.permute.xlu0 %1155
    %1157 = vrot.lane.b32.xlu0 %v1146, 32
    %v1158 = vpop.permute.xlu0 %1157
    %v1163 = vadd.f32 %v1119, %v1152
    %v1164 = vadd.f32 %v1120, %v1154
    %v1165 = vadd.f32 %v1121, %v1156
    %v1166 = vadd.f32 %v1122, %v1158
    %1171 = vrot.lane.b32.xlu0 %v1163, 64
    %v1172 = vpop.permute.xlu0 %1171
    %1173 = vrot.lane.b32.xlu0 %v1164, 64
    %v1174 = vpop.permute.xlu0 %1173
    %1175 = vrot.lane.b32.xlu0 %v1165, 64
    %v1176 = vpop.permute.xlu0 %1175
    %1177 = vrot.lane.b32.xlu0 %v1166, 64
    %v1178 = vpop.permute.xlu0 %1177
    %1183 = vst.msk [vmem:[#allocation3 + $0x40] sm:$0xff] %vm490, %v1172
    %1184 = vst.msk [vmem:[#allocation3 + $0x48] sm:$0xff] %vm490, %v1174
    %1185 = vst.msk [vmem:[#allocation3 + $0x50] sm:$0xff] %vm490, %v1176
    %1186 = vst.msk [vmem:[#allocation3 + $0x58] sm:$0xff] %vm490, %v1178
    %v1187 = vld [vmem:[#allocation2 + $0x60] sm:$0xff]
    %v1188 = vld [vmem:[#allocation2 + $0x68] sm:$0xff]
    %v1189 = vld [vmem:[#allocation2 + $0x70] sm:$0xff]
    %v1190 = vld [vmem:[#allocation2 + $0x78] sm:$0xff]
    %v1191 = vpack.c.bf16 %v1164, %v1163
    %v1192 = vpack.c.bf16 %v1166, %v1165
    %1195 = vrot.lane.b32.xlu0 %v1191, 64
    %v1196 = vpop.permute.xlu0 %1195
    %1197 = vrot.lane.b32.xlu0 %v1192, 64
    %v1198 = vpop.permute.xlu0 %1197
    %v1200 = vsel %vm490, %v1196, 0
    %v1203 = vsel %vm490, %v1198, 0
    %1205 = vmatpush.bf16.msra.mxu0 0
    %1206 = vmatpush.bf16.msra.mxu0 0
    %1207 = vmatpush.bf16.msra.mxu0 0
    %1208 = vmatpush.bf16.msra.mxu0 0
    %1209 = vmatpush.bf16.msra.mxu0 0
    %1210 = vmatpush.bf16.msra.mxu0 0
    %1211 = vmatpush.bf16.msra.mxu0 %v478
    %1212 = vmatpush.bf16.msra.mxu0 %v477
    %1213 = vmatmul.bf16.gmra.mxu0 %v1200
    %v1214 = vpop.f32.mrf.mxu0
    %v1215 = vadd.f32 0.0, %v1214
    %v1216 = vpop.f32.mrf.mxu0
    %v1217 = vadd.f32 0.0, %v1216
    %1218 = vmatmul.bf16.gmra.mxu0 %v1203
    %v1219 = vpop.f32.mrf.mxu0
    %v1220 = vadd.f32 0.0, %v1219
    %v1221 = vpop.f32.mrf.mxu0
    %v1222 = vadd.f32 0.0, %v1221
    %1223 = vdwg.mxu0
    %v1224 = vadd.f32 %v1187, %v1215
    %v1225 = vadd.f32 %v1188, %v1217
    %v1226 = vadd.f32 %v1189, %v1220
    %v1227 = vadd.f32 %v1190, %v1222
    %v1228 = vxor.u32 %v1224, 2147483648
    %v1229 = vxor.u32 %v1225, 2147483648
    %v1230 = vxor.u32 %v1226, 2147483648
    %v1231 = vxor.u32 %v1227, 2147483648
    %v1232 = vmul.f32 %v1228, 1.442695
    %v1233 = vpow.pop %v1232
    %v1234 = vmul.f32 %v1229, 1.442695
    %v1235 = vpow.pop %v1234
    %v1236 = vmul.f32 %v1230, 1.442695
    %v1237 = vpow.pop %v1236
    %v1238 = vmul.f32 %v1231, 1.442695
    %v1239 = vpow.pop %v1238
    %v1240 = vadd.f32 %v1233, 1.0
    %v1241 = vadd.f32 %v1235, 1.0
    %v1242 = vadd.f32 %v1237, 1.0
    %v1243 = vadd.f32 %v1239, 1.0
    %v1244 = vrcp.pop %v1240
    %v1245 = vmul.f32 %v1240, %v1244
    %v1246 = vsub.f32 1.0, %v1245
    %v1247 = vmul.f32 %v1244, %v1246
    %v1248 = vadd.f32 %v1244, %v1247
    %vm1249 = vweird.f32 %v1240
    %vm1250 = vweird.f32 %v1244
    %vm1251 = vmor %vm1249, %vm1250
    %v1252 = vsel %vm1251, %v1244, %v1248
    %v1253 = vand.u32 2147483647, %v1240
    %vm1254 = vcmp.eq.f32.partialorder %v1253, 8.507059e+37
    %v1255 = vand.u32 %v1240, 2147483648
    %v1256 = vor.u32 1.1754944e-38, %v1255
    %v1257 = vsel %vm1254, %v1256, %v1252
    %v1258 = vmul.f32 1.0, %v1257
    %v1259 = vrcp.pop %v1241
    %v1260 = vmul.f32 %v1241, %v1259
    %v1261 = vsub.f32 1.0, %v1260
    %v1262 = vmul.f32 %v1259, %v1261
    %v1263 = vadd.f32 %v1259, %v1262
    %vm1264 = vweird.f32 %v1241
    %vm1265 = vweird.f32 %v1259
    %vm1266 = vmor %vm1264, %vm1265
    %v1267 = vsel %vm1266, %v1259, %v1263
    %v1268 = vand.u32 2147483647, %v1241
    %vm1269 = vcmp.eq.f32.partialorder %v1268, 8.507059e+37
    %v1270 = vand.u32 %v1241, 2147483648
    %v1271 = vor.u32 1.1754944e-38, %v1270
    %v1272 = vsel %vm1269, %v1271, %v1267
    %v1273 = vmul.f32 1.0, %v1272
    %v1274 = vrcp.pop %v1242
    %v1275 = vmul.f32 %v1242, %v1274
    %v1276 = vsub.f32 1.0, %v1275
    %v1277 = vmul.f32 %v1274, %v1276
    %v1278 = vadd.f32 %v1274, %v1277
    %vm1279 = vweird.f32 %v1242
    %vm1280 = vweird.f32 %v1274
    %vm1281 = vmor %vm1279, %vm1280
    %v1282 = vsel %vm1281, %v1274, %v1278
    %v1283 = vand.u32 2147483647, %v1242
    %vm1284 = vcmp.eq.f32.partialorder %v1283, 8.507059e+37
    %v1285 = vand.u32 %v1242, 2147483648
    %v1286 = vor.u32 1.1754944e-38, %v1285
    %v1287 = vsel %vm1284, %v1286, %v1282
    %v1288 = vmul.f32 1.0, %v1287
    %v1289 = vrcp.pop %v1243
    %v1290 = vmul.f32 %v1243, %v1289
    %v1291 = vsub.f32 1.0, %v1290
    %v1292 = vmul.f32 %v1289, %v1291
    %v1293 = vadd.f32 %v1289, %v1292
    %vm1294 = vweird.f32 %v1243
    %vm1295 = vweird.f32 %v1289
    %vm1296 = vmor %vm1294, %vm1295
    %v1297 = vsel %vm1296, %v1289, %v1293
    %v1298 = vand.u32 2147483647, %v1243
    %vm1299 = vcmp.eq.f32.partialorder %v1298, 8.507059e+37
    %v1300 = vand.u32 %v1243, 2147483648
    %v1301 = vor.u32 1.1754944e-38, %v1300
    %v1302 = vsel %vm1299, %v1301, %v1297
    %v1303 = vmul.f32 1.0, %v1302
    %v1304 = vadd.f32 %v1215, %v599
    %v1305 = vadd.f32 %v1217, %v599
    %v1306 = vadd.f32 %v1220, %v599
    %v1307 = vadd.f32 %v1222, %v599
    %1312 = vrot.lane.b32.xlu0 %v1304, 64
    %v1313 = vpop.permute.xlu0 %1312
    %1314 = vrot.lane.b32.xlu0 %v1305, 64
    %v1315 = vpop.permute.xlu0 %1314
    %1316 = vrot.lane.b32.xlu0 %v1306, 64
    %v1317 = vpop.permute.xlu0 %1316
    %1318 = vrot.lane.b32.xlu0 %v1307, 64
    %v1319 = vpop.permute.xlu0 %1318
    %v1324 = vmul.f32 %v1258, %v1313
    %v1325 = vmul.f32 %v1273, %v1315
    %v1326 = vmul.f32 %v1288, %v1317
    %v1327 = vmul.f32 %v1303, %v1319
    %1332 = vrot.lane.b32.xlu0 %v1324, 64
    %v1333 = vpop.permute.xlu0 %1332
    %1334 = vrot.lane.b32.xlu0 %v1325, 64
    %v1335 = vpop.permute.xlu0 %1334
    %1336 = vrot.lane.b32.xlu0 %v1326, 64
    %v1337 = vpop.permute.xlu0 %1336
    %1338 = vrot.lane.b32.xlu0 %v1327, 64
    %v1339 = vpop.permute.xlu0 %1338
    %v1344 = vadd.f32 %v1187, %v1333
    %v1345 = vadd.f32 %v1188, %v1335
    %v1346 = vadd.f32 %v1189, %v1337
    %v1347 = vadd.f32 %v1190, %v1339
    %v1348 = vtanh.pop %v1344
    %v1349 = vtanh.pop %v1345
    %v1350 = vtanh.pop %v1346
    %v1351 = vtanh.pop %v1347
    %v1352 = vsub.f32 %v1163, %v1348
    %v1353 = vsub.f32 %v1164, %v1349
    %v1354 = vsub.f32 %v1165, %v1350
    %v1355 = vsub.f32 %v1166, %v1351
    %1360 = vrot.lane.b32.xlu0 %v1352, 96
    %v1361 = vpop.permute.xlu0 %1360
    %1362 = vrot.lane.b32.xlu0 %v1353, 96
    %v1363 = vpop.permute.xlu0 %1362
    %1364 = vrot.lane.b32.xlu0 %v1354, 96
    %v1365 = vpop.permute.xlu0 %1364
    %1366 = vrot.lane.b32.xlu0 %v1355, 96
    %v1367 = vpop.permute.xlu0 %1366
    %v1372 = vmul.f32 %v1258, %v1361
    %v1373 = vmul.f32 %v1273, %v1363
    %v1374 = vmul.f32 %v1288, %v1365
    %v1375 = vmul.f32 %v1303, %v1367
    %1380 = vrot.lane.b32.xlu0 %v1372, 32
    %v1381 = vpop.permute.xlu0 %1380
    %1382 = vrot.lane.b32.xlu0 %v1373, 32
    %v1383 = vpop.permute.xlu0 %1382
    %1384 = vrot.lane.b32.xlu0 %v1374, 32
    %v1385 = vpop.permute.xlu0 %1384
    %1386 = vrot.lane.b32.xlu0 %v1375, 32
    %v1387 = vpop.permute.xlu0 %1386
    %v1392 = vadd.f32 %v1348, %v1381
    %v1393 = vadd.f32 %v1349, %v1383
    %v1394 = vadd.f32 %v1350, %v1385
    %v1395 = vadd.f32 %v1351, %v1387
    %1400 = vrot.lane.b32.xlu0 %v1392, 64
    %v1401 = vpop.permute.xlu0 %1400
    %1402 = vrot.lane.b32.xlu0 %v1393, 64
    %v1403 = vpop.permute.xlu0 %1402
    %1404 = vrot.lane.b32.xlu0 %v1394, 64
    %v1405 = vpop.permute.xlu0 %1404
    %1406 = vrot.lane.b32.xlu0 %v1395, 64
    %v1407 = vpop.permute.xlu0 %1406
    %1412 = vst.msk [vmem:[#allocation3 + $0x60] sm:$0xff] %vm490, %v1401
    %1413 = vst.msk [vmem:[#allocation3 + $0x68] sm:$0xff] %vm490, %v1403
    %1414 = vst.msk [vmem:[#allocation3 + $0x70] sm:$0xff] %vm490, %v1405
    %1415 = vst.msk [vmem:[#allocation3 + $0x78] sm:$0xff] %vm490, %v1407
    %v1416 = vld [vmem:[#allocation2 + $0x80] sm:$0xff]
    %v1417 = vld [vmem:[#allocation2 + $0x88] sm:$0xff]
    %v1418 = vld [vmem:[#allocation2 + $0x90] sm:$0xff]
    %v1419 = vld [vmem:[#allocation2 + $0x98] sm:$0xff]
    %v1420 = vpack.c.bf16 %v1393, %v1392
    %v1421 = vpack.c.bf16 %v1395, %v1394
    %1424 = vrot.lane.b32.xlu0 %v1420, 64
    %v1425 = vpop.permute.xlu0 %1424
    %1426 = vrot.lane.b32.xlu0 %v1421, 64
    %v1427 = vpop.permute.xlu0 %1426
    %v1429 = vsel %vm490, %v1425, 0
    %v1432 = vsel %vm490, %v1427, 0
    %1434 = vmatpush.bf16.msra.mxu0 0
    %1435 = vmatpush.bf16.msra.mxu0 0
    %1436 = vmatpush.bf16.msra.mxu0 0
    %1437 = vmatpush.bf16.msra.mxu0 0
    %1438 = vmatpush.bf16.msra.mxu0 0
    %1439 = vmatpush.bf16.msra.mxu0 0
    %1440 = vmatpush.bf16.msra.mxu0 %v478
    %1441 = vmatpush.bf16.msra.mxu0 %v477
    %1442 = vmatmul.bf16.gmra.mxu0 %v1429
    %v1443 = vpop.f32.mrf.mxu0
    %v1444 = vadd.f32 0.0, %v1443
    %v1445 = vpop.f32.mrf.mxu0
    %v1446 = vadd.f32 0.0, %v1445
    %1447 = vmatmul.bf16.gmra.mxu0 %v1432
    %v1448 = vpop.f32.mrf.mxu0
    %v1449 = vadd.f32 0.0, %v1448
    %v1450 = vpop.f32.mrf.mxu0
    %v1451 = vadd.f32 0.0, %v1450
    %1452 = vdwg.mxu0
    %v1453 = vadd.f32 %v1416, %v1444
    %v1454 = vadd.f32 %v1417, %v1446
    %v1455 = vadd.f32 %v1418, %v1449
    %v1456 = vadd.f32 %v1419, %v1451
    %v1457 = vxor.u32 %v1453, 2147483648
    %v1458 = vxor.u32 %v1454, 2147483648
    %v1459 = vxor.u32 %v1455, 2147483648
    %v1460 = vxor.u32 %v1456, 2147483648
    %v1461 = vmul.f32 %v1457, 1.442695
    %v1462 = vpow.pop %v1461
    %v1463 = vmul.f32 %v1458, 1.442695
    %v1464 = vpow.pop %v1463
    %v1465 = vmul.f32 %v1459, 1.442695
    %v1466 = vpow.pop %v1465
    %v1467 = vmul.f32 %v1460, 1.442695
    %v1468 = vpow.pop %v1467
    %v1469 = vadd.f32 %v1462, 1.0
    %v1470 = vadd.f32 %v1464, 1.0
    %v1471 = vadd.f32 %v1466, 1.0
    %v1472 = vadd.f32 %v1468, 1.0
    %v1473 = vrcp.pop %v1469
    %v1474 = vmul.f32 %v1469, %v1473
    %v1475 = vsub.f32 1.0, %v1474
    %v1476 = vmul.f32 %v1473, %v1475
    %v1477 = vadd.f32 %v1473, %v1476
    %vm1478 = vweird.f32 %v1469
    %vm1479 = vweird.f32 %v1473
    %vm1480 = vmor %vm1478, %vm1479
    %v1481 = vsel %vm1480, %v1473, %v1477
    %v1482 = vand.u32 2147483647, %v1469
    %vm1483 = vcmp.eq.f32.partialorder %v1482, 8.507059e+37
    %v1484 = vand.u32 %v1469, 2147483648
    %v1485 = vor.u32 1.1754944e-38, %v1484
    %v1486 = vsel %vm1483, %v1485, %v1481
    %v1487 = vmul.f32 1.0, %v1486
    %v1488 = vrcp.pop %v1470
    %v1489 = vmul.f32 %v1470, %v1488
    %v1490 = vsub.f32 1.0, %v1489
    %v1491 = vmul.f32 %v1488, %v1490
    %v1492 = vadd.f32 %v1488, %v1491
    %vm1493 = vweird.f32 %v1470
    %vm1494 = vweird.f32 %v1488
    %vm1495 = vmor %vm1493, %vm1494
    %v1496 = vsel %vm1495, %v1488, %v1492
    %v1497 = vand.u32 2147483647, %v1470
    %vm1498 = vcmp.eq.f32.partialorder %v1497, 8.507059e+37
    %v1499 = vand.u32 %v1470, 2147483648
    %v1500 = vor.u32 1.1754944e-38, %v1499
    %v1501 = vsel %vm1498, %v1500, %v1496
    %v1502 = vmul.f32 1.0, %v1501
    %v1503 = vrcp.pop %v1471
    %v1504 = vmul.f32 %v1471, %v1503
    %v1505 = vsub.f32 1.0, %v1504
    %v1506 = vmul.f32 %v1503, %v1505
    %v1507 = vadd.f32 %v1503, %v1506
    %vm1508 = vweird.f32 %v1471
    %vm1509 = vweird.f32 %v1503
    %vm1510 = vmor %vm1508, %vm1509
    %v1511 = vsel %vm1510, %v1503, %v1507
    %v1512 = vand.u32 2147483647, %v1471
    %vm1513 = vcmp.eq.f32.partialorder %v1512, 8.507059e+37
    %v1514 = vand.u32 %v1471, 2147483648
    %v1515 = vor.u32 1.1754944e-38, %v1514
    %v1516 = vsel %vm1513, %v1515, %v1511
    %v1517 = vmul.f32 1.0, %v1516
    %v1518 = vrcp.pop %v1472
    %v1519 = vmul.f32 %v1472, %v1518
    %v1520 = vsub.f32 1.0, %v1519
    %v1521 = vmul.f32 %v1518, %v1520
    %v1522 = vadd.f32 %v1518, %v1521
    %vm1523 = vweird.f32 %v1472
    %vm1524 = vweird.f32 %v1518
    %vm1525 = vmor %vm1523, %vm1524
    %v1526 = vsel %vm1525, %v1518, %v1522
    %v1527 = vand.u32 2147483647, %v1472
    %vm1528 = vcmp.eq.f32.partialorder %v1527, 8.507059e+37
    %v1529 = vand.u32 %v1472, 2147483648
    %v1530 = vor.u32 1.1754944e-38, %v1529
    %v1531 = vsel %vm1528, %v1530, %v1526
    %v1532 = vmul.f32 1.0, %v1531
    %v1533 = vadd.f32 %v1444, %v599
    %v1534 = vadd.f32 %v1446, %v599
    %v1535 = vadd.f32 %v1449, %v599
    %v1536 = vadd.f32 %v1451, %v599
    %1541 = vrot.lane.b32.xlu0 %v1533, 64
    %v1542 = vpop.permute.xlu0 %1541
    %1543 = vrot.lane.b32.xlu0 %v1534, 64
    %v1544 = vpop.permute.xlu0 %1543
    %1545 = vrot.lane.b32.xlu0 %v1535, 64
    %v1546 = vpop.permute.xlu0 %1545
    %1547 = vrot.lane.b32.xlu0 %v1536, 64
    %v1548 = vpop.permute.xlu0 %1547
    %v1553 = vmul.f32 %v1487, %v1542
    %v1554 = vmul.f32 %v1502, %v1544
    %v1555 = vmul.f32 %v1517, %v1546
    %v1556 = vmul.f32 %v1532, %v1548
    %1561 = vrot.lane.b32.xlu0 %v1553, 64
    %v1562 = vpop.permute.xlu0 %1561
    %1563 = vrot.lane.b32.xlu0 %v1554, 64
    %v1564 = vpop.permute.xlu0 %1563
    %1565 = vrot.lane.b32.xlu0 %v1555, 64
    %v1566 = vpop.permute.xlu0 %1565
    %1567 = vrot.lane.b32.xlu0 %v1556, 64
    %v1568 = vpop.permute.xlu0 %1567
    %v1573 = vadd.f32 %v1416, %v1562
    %v1574 = vadd.f32 %v1417, %v1564
    %v1575 = vadd.f32 %v1418, %v1566
    %v1576 = vadd.f32 %v1419, %v1568
    %v1577 = vtanh.pop %v1573
    %v1578 = vtanh.pop %v1574
    %v1579 = vtanh.pop %v1575
    %v1580 = vtanh.pop %v1576
    %v1581 = vsub.f32 %v1392, %v1577
    %v1582 = vsub.f32 %v1393, %v1578
    %v1583 = vsub.f32 %v1394, %v1579
    %v1584 = vsub.f32 %v1395, %v1580
    %1589 = vrot.lane.b32.xlu0 %v1581, 96
    %v1590 = vpop.permute.xlu0 %1589
    %1591 = vrot.lane.b32.xlu0 %v1582, 96
    %v1592 = vpop.permute.xlu0 %1591
    %1593 = vrot.lane.b32.xlu0 %v1583, 96
    %v1594 = vpop.permute.xlu0 %1593
    %1595 = vrot.lane.b32.xlu0 %v1584, 96
    %v1596 = vpop.permute.xlu0 %1595
    %v1601 = vmul.f32 %v1487, %v1590
    %v1602 = vmul.f32 %v1502, %v1592
    %v1603 = vmul.f32 %v1517, %v1594
    %v1604 = vmul.f32 %v1532, %v1596
    %1609 = vrot.lane.b32.xlu0 %v1601, 32
    %v1610 = vpop.permute.xlu0 %1609
    %1611 = vrot.lane.b32.xlu0 %v1602, 32
    %v1612 = vpop.permute.xlu0 %1611
    %1613 = vrot.lane.b32.xlu0 %v1603, 32
    %v1614 = vpop.permute.xlu0 %1613
    %1615 = vrot.lane.b32.xlu0 %v1604, 32
    %v1616 = vpop.permute.xlu0 %1615
    %v1621 = vadd.f32 %v1577, %v1610
    %v1622 = vadd.f32 %v1578, %v1612
    %v1623 = vadd.f32 %v1579, %v1614
    %v1624 = vadd.f32 %v1580, %v1616
    %1629 = vrot.lane.b32.xlu0 %v1621, 64
    %v1630 = vpop.permute.xlu0 %1629
    %1631 = vrot.lane.b32.xlu0 %v1622, 64
    %v1632 = vpop.permute.xlu0 %1631
    %1633 = vrot.lane.b32.xlu0 %v1623, 64
    %v1634 = vpop.permute.xlu0 %1633
    %1635 = vrot.lane.b32.xlu0 %v1624, 64
    %v1636 = vpop.permute.xlu0 %1635
    %1641 = vst.msk [vmem:[#allocation3 + $0x80] sm:$0xff] %vm490, %v1630
    %1642 = vst.msk [vmem:[#allocation3 + $0x88] sm:$0xff] %vm490, %v1632
    %1643 = vst.msk [vmem:[#allocation3 + $0x90] sm:$0xff] %vm490, %v1634
    %1644 = vst.msk [vmem:[#allocation3 + $0x98] sm:$0xff] %vm490, %v1636
    %v1645 = vld [vmem:[#allocation2 + $0xa0] sm:$0xff]
    %v1646 = vld [vmem:[#allocation2 + $0xa8] sm:$0xff]
    %v1647 = vld [vmem:[#allocation2 + $0xb0] sm:$0xff]
    %v1648 = vld [vmem:[#allocation2 + $0xb8] sm:$0xff]
    %v1649 = vpack.c.bf16 %v1622, %v1621
    %v1650 = vpack.c.bf16 %v1624, %v1623
    %1653 = vrot.lane.b32.xlu0 %v1649, 64
    %v1654 = vpop.permute.xlu0 %1653
    %1655 = vrot.lane.b32.xlu0 %v1650, 64
    %v1656 = vpop.permute.xlu0 %1655
    %v1658 = vsel %vm490, %v1654, 0
    %v1661 = vsel %vm490, %v1656, 0
    %1663 = vmatpush.bf16.msra.mxu0 0
    %1664 = vmatpush.bf16.msra.mxu0 0
    %1665 = vmatpush.bf16.msra.mxu0 0
    %1666 = vmatpush.bf16.msra.mxu0 0
    %1667 = vmatpush.bf16.msra.mxu0 0
    %1668 = vmatpush.bf16.msra.mxu0 0
    %1669 = vmatpush.bf16.msra.mxu0 %v478
    %1670 = vmatpush.bf16.msra.mxu0 %v477
    %1671 = vmatmul.bf16.gmra.mxu0 %v1658
    %v1672 = vpop.f32.mrf.mxu0
    %v1673 = vadd.f32 0.0, %v1672
    %v1674 = vpop.f32.mrf.mxu0
    %v1675 = vadd.f32 0.0, %v1674
    %1676 = vmatmul.bf16.gmra.mxu0 %v1661
    %v1677 = vpop.f32.mrf.mxu0
    %v1678 = vadd.f32 0.0, %v1677
    %v1679 = vpop.f32.mrf.mxu0
    %v1680 = vadd.f32 0.0, %v1679
    %1681 = vdwg.mxu0
    %v1682 = vadd.f32 %v1645, %v1673
    %v1683 = vadd.f32 %v1646, %v1675
    %v1684 = vadd.f32 %v1647, %v1678
    %v1685 = vadd.f32 %v1648, %v1680
    %v1686 = vxor.u32 %v1682, 2147483648
    %v1687 = vxor.u32 %v1683, 2147483648
    %v1688 = vxor.u32 %v1684, 2147483648
    %v1689 = vxor.u32 %v1685, 2147483648
    %v1690 = vmul.f32 %v1686, 1.442695
    %v1691 = vpow.pop %v1690
    %v1692 = vmul.f32 %v1687, 1.442695
    %v1693 = vpow.pop %v1692
    %v1694 = vmul.f32 %v1688, 1.442695
    %v1695 = vpow.pop %v1694
    %v1696 = vmul.f32 %v1689, 1.442695
    %v1697 = vpow.pop %v1696
    %v1698 = vadd.f32 %v1691, 1.0
    %v1699 = vadd.f32 %v1693, 1.0
    %v1700 = vadd.f32 %v1695, 1.0
    %v1701 = vadd.f32 %v1697, 1.0
    %v1702 = vrcp.pop %v1698
    %v1703 = vmul.f32 %v1698, %v1702
    %v1704 = vsub.f32 1.0, %v1703
    %v1705 = vmul.f32 %v1702, %v1704
    %v1706 = vadd.f32 %v1702, %v1705
    %vm1707 = vweird.f32 %v1698
    %vm1708 = vweird.f32 %v1702
    %vm1709 = vmor %vm1707, %vm1708
    %v1710 = vsel %vm1709, %v1702, %v1706
    %v1711 = vand.u32 2147483647, %v1698
    %vm1712 = vcmp.eq.f32.partialorder %v1711, 8.507059e+37
    %v1713 = vand.u32 %v1698, 2147483648
    %v1714 = vor.u32 1.1754944e-38, %v1713
    %v1715 = vsel %vm1712, %v1714, %v1710
    %v1716 = vmul.f32 1.0, %v1715
    %v1717 = vrcp.pop %v1699
    %v1718 = vmul.f32 %v1699, %v1717
    %v1719 = vsub.f32 1.0, %v1718
    %v1720 = vmul.f32 %v1717, %v1719
    %v1721 = vadd.f32 %v1717, %v1720
    %vm1722 = vweird.f32 %v1699
    %vm1723 = vweird.f32 %v1717
    %vm1724 = vmor %vm1722, %vm1723
    %v1725 = vsel %vm1724, %v1717, %v1721
    %v1726 = vand.u32 2147483647, %v1699
    %vm1727 = vcmp.eq.f32.partialorder %v1726, 8.507059e+37
    %v1728 = vand.u32 %v1699, 2147483648
    %v1729 = vor.u32 1.1754944e-38, %v1728
    %v1730 = vsel %vm1727, %v1729, %v1725
    %v1731 = vmul.f32 1.0, %v1730
    %v1732 = vrcp.pop %v1700
    %v1733 = vmul.f32 %v1700, %v1732
    %v1734 = vsub.f32 1.0, %v1733
    %v1735 = vmul.f32 %v1732, %v1734
    %v1736 = vadd.f32 %v1732, %v1735
    %vm1737 = vweird.f32 %v1700
    %vm1738 = vweird.f32 %v1732
    %vm1739 = vmor %vm1737, %vm1738
    %v1740 = vsel %vm1739, %v1732, %v1736
    %v1741 = vand.u32 2147483647, %v1700
    %vm1742 = vcmp.eq.f32.partialorder %v1741, 8.507059e+37
    %v1743 = vand.u32 %v1700, 2147483648
    %v1744 = vor.u32 1.1754944e-38, %v1743
    %v1745 = vsel %vm1742, %v1744, %v1740
    %v1746 = vmul.f32 1.0, %v1745
    %v1747 = vrcp.pop %v1701
    %v1748 = vmul.f32 %v1701, %v1747
    %v1749 = vsub.f32 1.0, %v1748
    %v1750 = vmul.f32 %v1747, %v1749
    %v1751 = vadd.f32 %v1747, %v1750
    %vm1752 = vweird.f32 %v1701
    %vm1753 = vweird.f32 %v1747
    %vm1754 = vmor %vm1752, %vm1753
    %v1755 = vsel %vm1754, %v1747, %v1751
    %v1756 = vand.u32 2147483647, %v1701
    %vm1757 = vcmp.eq.f32.partialorder %v1756, 8.507059e+37
    %v1758 = vand.u32 %v1701, 2147483648
    %v1759 = vor.u32 1.1754944e-38, %v1758
    %v1760 = vsel %vm1757, %v1759, %v1755
    %v1761 = vmul.f32 1.0, %v1760
    %v1762 = vadd.f32 %v1673, %v599
    %v1763 = vadd.f32 %v1675, %v599
    %v1764 = vadd.f32 %v1678, %v599
    %v1765 = vadd.f32 %v1680, %v599
    %1770 = vrot.lane.b32.xlu0 %v1762, 64
    %v1771 = vpop.permute.xlu0 %1770
    %1772 = vrot.lane.b32.xlu0 %v1763, 64
    %v1773 = vpop.permute.xlu0 %1772
    %1774 = vrot.lane.b32.xlu0 %v1764, 64
    %v1775 = vpop.permute.xlu0 %1774
    %1776 = vrot.lane.b32.xlu0 %v1765, 64
    %v1777 = vpop.permute.xlu0 %1776
    %v1782 = vmul.f32 %v1716, %v1771
    %v1783 = vmul.f32 %v1731, %v1773
    %v1784 = vmul.f32 %v1746, %v1775
    %v1785 = vmul.f32 %v1761, %v1777
    %1790 = vrot.lane.b32.xlu0 %v1782, 64
    %v1791 = vpop.permute.xlu0 %1790
    %1792 = vrot.lane.b32.xlu0 %v1783, 64
    %v1793 = vpop.permute.xlu0 %1792
    %1794 = vrot.lane.b32.xlu0 %v1784, 64
    %v1795 = vpop.permute.xlu0 %1794
    %1796 = vrot.lane.b32.xlu0 %v1785, 64
    %v1797 = vpop.permute.xlu0 %1796
    %v1802 = vadd.f32 %v1645, %v1791
    %v1803 = vadd.f32 %v1646, %v1793
    %v1804 = vadd.f32 %v1647, %v1795
    %v1805 = vadd.f32 %v1648, %v1797
    %v1806 = vtanh.pop %v1802
    %v1807 = vtanh.pop %v1803
    %v1808 = vtanh.pop %v1804
    %v1809 = vtanh.pop %v1805
    %v1810 = vsub.f32 %v1621, %v1806
    %v1811 = vsub.f32 %v1622, %v1807
    %v1812 = vsub.f32 %v1623, %v1808
    %v1813 = vsub.f32 %v1624, %v1809
    %1818 = vrot.lane.b32.xlu0 %v1810, 96
    %v1819 = vpop.permute.xlu0 %1818
    %1820 = vrot.lane.b32.xlu0 %v1811, 96
    %v1821 = vpop.permute.xlu0 %1820
    %1822 = vrot.lane.b32.xlu0 %v1812, 96
    %v1823 = vpop.permute.xlu0 %1822
    %1824 = vrot.lane.b32.xlu0 %v1813, 96
    %v1825 = vpop.permute.xlu0 %1824
    %v1830 = vmul.f32 %v1716, %v1819
    %v1831 = vmul.f32 %v1731, %v1821
    %v1832 = vmul.f32 %v1746, %v1823
    %v1833 = vmul.f32 %v1761, %v1825
    %1838 = vrot.lane.b32.xlu0 %v1830, 32
    %v1839 = vpop.permute.xlu0 %1838
    %1840 = vrot.lane.b32.xlu0 %v1831, 32
    %v1841 = vpop.permute.xlu0 %1840
    %1842 = vrot.lane.b32.xlu0 %v1832, 32
    %v1843 = vpop.permute.xlu0 %1842
    %1844 = vrot.lane.b32.xlu0 %v1833, 32
    %v1845 = vpop.permute.xlu0 %1844
    %v1850 = vadd.f32 %v1806, %v1839
    %v1851 = vadd.f32 %v1807, %v1841
    %v1852 = vadd.f32 %v1808, %v1843
    %v1853 = vadd.f32 %v1809, %v1845
    %1858 = vrot.lane.b32.xlu0 %v1850, 64
    %v1859 = vpop.permute.xlu0 %1858
    %1860 = vrot.lane.b32.xlu0 %v1851, 64
    %v1861 = vpop.permute.xlu0 %1860
    %1862 = vrot.lane.b32.xlu0 %v1852, 64
    %v1863 = vpop.permute.xlu0 %1862
    %1864 = vrot.lane.b32.xlu0 %v1853, 64
    %v1865 = vpop.permute.xlu0 %1864
    %1870 = vst.msk [vmem:[#allocation3 + $0xa0] sm:$0xff] %vm490, %v1859
    %1871 = vst.msk [vmem:[#allocation3 + $0xa8] sm:$0xff] %vm490, %v1861
    %1872 = vst.msk [vmem:[#allocation3 + $0xb0] sm:$0xff] %vm490, %v1863
    %1873 = vst.msk [vmem:[#allocation3 + $0xb8] sm:$0xff] %vm490, %v1865
    %v1874 = vld [vmem:[#allocation2 + $0xc0] sm:$0xff]
    %v1875 = vld [vmem:[#allocation2 + $0xc8] sm:$0xff]
    %v1876 = vld [vmem:[#allocation2 + $0xd0] sm:$0xff]
    %v1877 = vld [vmem:[#allocation2 + $0xd8] sm:$0xff]
    %v1878 = vpack.c.bf16 %v1851, %v1850
    %v1879 = vpack.c.bf16 %v1853, %v1852
    %1882 = vrot.lane.b32.xlu0 %v1878, 64
    %v1883 = vpop.permute.xlu0 %1882
    %1884 = vrot.lane.b32.xlu0 %v1879, 64
    %v1885 = vpop.permute.xlu0 %1884
    %v1887 = vsel %vm490, %v1883, 0
    %v1890 = vsel %vm490, %v1885, 0
    %1892 = vmatpush.bf16.msra.mxu0 0
    %1893 = vmatpush.bf16.msra.mxu0 0
    %1894 = vmatpush.bf16.msra.mxu0 0
    %1895 = vmatpush.bf16.msra.mxu0 0
    %1896 = vmatpush.bf16.msra.mxu0 0
    %1897 = vmatpush.bf16.msra.mxu0 0
    %1898 = vmatpush.bf16.msra.mxu0 %v478
    %1899 = vmatpush.bf16.msra.mxu0 %v477
    %1900 = vmatmul.bf16.gmra.mxu0 %v1887
    %v1901 = vpop.f32.mrf.mxu0
    %v1902 = vadd.f32 0.0, %v1901
    %v1903 = vpop.f32.mrf.mxu0
    %v1904 = vadd.f32 0.0, %v1903
    %1905 = vmatmul.bf16.gmra.mxu0 %v1890
    %v1906 = vpop.f32.mrf.mxu0
    %v1907 = vadd.f32 0.0, %v1906
    %v1908 = vpop.f32.mrf.mxu0
    %v1909 = vadd.f32 0.0, %v1908
    %1910 = vdwg.mxu0
    %v1911 = vadd.f32 %v1874, %v1902
    %v1912 = vadd.f32 %v1875, %v1904
    %v1913 = vadd.f32 %v1876, %v1907
    %v1914 = vadd.f32 %v1877, %v1909
    %v1915 = vxor.u32 %v1911, 2147483648
    %v1916 = vxor.u32 %v1912, 2147483648
    %v1917 = vxor.u32 %v1913, 2147483648
    %v1918 = vxor.u32 %v1914, 2147483648
    %v1919 = vmul.f32 %v1915, 1.442695
    %v1920 = vpow.pop %v1919
    %v1921 = vmul.f32 %v1916, 1.442695
    %v1922 = vpow.pop %v1921
    %v1923 = vmul.f32 %v1917, 1.442695
    %v1924 = vpow.pop %v1923
    %v1925 = vmul.f32 %v1918, 1.442695
    %v1926 = vpow.pop %v1925
    %v1927 = vadd.f32 %v1920, 1.0
    %v1928 = vadd.f32 %v1922, 1.0
    %v1929 = vadd.f32 %v1924, 1.0
    %v1930 = vadd.f32 %v1926, 1.0
    %v1931 = vrcp.pop %v1927
    %v1932 = vmul.f32 %v1927, %v1931
    %v1933 = vsub.f32 1.0, %v1932
    %v1934 = vmul.f32 %v1931, %v1933
    %v1935 = vadd.f32 %v1931, %v1934
    %vm1936 = vweird.f32 %v1927
    %vm1937 = vweird.f32 %v1931
    %vm1938 = vmor %vm1936, %vm1937
    %v1939 = vsel %vm1938, %v1931, %v1935
    %v1940 = vand.u32 2147483647, %v1927
    %vm1941 = vcmp.eq.f32.partialorder %v1940, 8.507059e+37
    %v1942 = vand.u32 %v1927, 2147483648
    %v1943 = vor.u32 1.1754944e-38, %v1942
    %v1944 = vsel %vm1941, %v1943, %v1939
    %v1945 = vmul.f32 1.0, %v1944
    %v1946 = vrcp.pop %v1928
    %v1947 = vmul.f32 %v1928, %v1946
    %v1948 = vsub.f32 1.0, %v1947
    %v1949 = vmul.f32 %v1946, %v1948
    %v1950 = vadd.f32 %v1946, %v1949
    %vm1951 = vweird.f32 %v1928
    %vm1952 = vweird.f32 %v1946
    %vm1953 = vmor %vm1951, %vm1952
    %v1954 = vsel %vm1953, %v1946, %v1950
    %v1955 = vand.u32 2147483647, %v1928
    %vm1956 = vcmp.eq.f32.partialorder %v1955, 8.507059e+37
    %v1957 = vand.u32 %v1928, 2147483648
    %v1958 = vor.u32 1.1754944e-38, %v1957
    %v1959 = vsel %vm1956, %v1958, %v1954
    %v1960 = vmul.f32 1.0, %v1959
    %v1961 = vrcp.pop %v1929
    %v1962 = vmul.f32 %v1929, %v1961
    %v1963 = vsub.f32 1.0, %v1962
    %v1964 = vmul.f32 %v1961, %v1963
    %v1965 = vadd.f32 %v1961, %v1964
    %vm1966 = vweird.f32 %v1929
    %vm1967 = vweird.f32 %v1961
    %vm1968 = vmor %vm1966, %vm1967
    %v1969 = vsel %vm1968, %v1961, %v1965
    %v1970 = vand.u32 2147483647, %v1929
    %vm1971 = vcmp.eq.f32.partialorder %v1970, 8.507059e+37
    %v1972 = vand.u32 %v1929, 2147483648
    %v1973 = vor.u32 1.1754944e-38, %v1972
    %v1974 = vsel %vm1971, %v1973, %v1969
    %v1975 = vmul.f32 1.0, %v1974
    %v1976 = vrcp.pop %v1930
    %v1977 = vmul.f32 %v1930, %v1976
    %v1978 = vsub.f32 1.0, %v1977
    %v1979 = vmul.f32 %v1976, %v1978
    %v1980 = vadd.f32 %v1976, %v1979
    %vm1981 = vweird.f32 %v1930
    %vm1982 = vweird.f32 %v1976
    %vm1983 = vmor %vm1981, %vm1982
    %v1984 = vsel %vm1983, %v1976, %v1980
    %v1985 = vand.u32 2147483647, %v1930
    %vm1986 = vcmp.eq.f32.partialorder %v1985, 8.507059e+37
    %v1987 = vand.u32 %v1930, 2147483648
    %v1988 = vor.u32 1.1754944e-38, %v1987
    %v1989 = vsel %vm1986, %v1988, %v1984
    %v1990 = vmul.f32 1.0, %v1989
    %v1991 = vadd.f32 %v1902, %v599
    %v1992 = vadd.f32 %v1904, %v599
    %v1993 = vadd.f32 %v1907, %v599
    %v1994 = vadd.f32 %v1909, %v599
    %1999 = vrot.lane.b32.xlu0 %v1991, 64
    %v2000 = vpop.permute.xlu0 %1999
    %2001 = vrot.lane.b32.xlu0 %v1992, 64
    %v2002 = vpop.permute.xlu0 %2001
    %2003 = vrot.lane.b32.xlu0 %v1993, 64
    %v2004 = vpop.permute.xlu0 %2003
    %2005 = vrot.lane.b32.xlu0 %v1994, 64
    %v2006 = vpop.permute.xlu0 %2005
    %v2011 = vmul.f32 %v1945, %v2000
    %v2012 = vmul.f32 %v1960, %v2002
    %v2013 = vmul.f32 %v1975, %v2004
    %v2014 = vmul.f32 %v1990, %v2006
    %2019 = vrot.lane.b32.xlu0 %v2011, 64
    %v2020 = vpop.permute.xlu0 %2019
    %2021 = vrot.lane.b32.xlu0 %v2012, 64
    %v2022 = vpop.permute.xlu0 %2021
    %2023 = vrot.lane.b32.xlu0 %v2013, 64
    %v2024 = vpop.permute.xlu0 %2023
    %2025 = vrot.lane.b32.xlu0 %v2014, 64
    %v2026 = vpop.permute.xlu0 %2025
    %v2031 = vadd.f32 %v1874, %v2020
    %v2032 = vadd.f32 %v1875, %v2022
    %v2033 = vadd.f32 %v1876, %v2024
    %v2034 = vadd.f32 %v1877, %v2026
    %v2035 = vtanh.pop %v2031
    %v2036 = vtanh.pop %v2032
    %v2037 = vtanh.pop %v2033
    %v2038 = vtanh.pop %v2034
    %v2039 = vsub.f32 %v1850, %v2035
    %v2040 = vsub.f32 %v1851, %v2036
    %v2041 = vsub.f32 %v1852, %v2037
    %v2042 = vsub.f32 %v1853, %v2038
    %2047 = vrot.lane.b32.xlu0 %v2039, 96
    %v2048 = vpop.permute.xlu0 %2047
    %2049 = vrot.lane.b32.xlu0 %v2040, 96
    %v2050 = vpop.permute.xlu0 %2049
    %2051 = vrot.lane.b32.xlu0 %v2041, 96
    %v2052 = vpop.permute.xlu0 %2051
    %2053 = vrot.lane.b32.xlu0 %v2042, 96
    %v2054 = vpop.permute.xlu0 %2053
    %v2059 = vmul.f32 %v1945, %v2048
    %v2060 = vmul.f32 %v1960, %v2050
    %v2061 = vmul.f32 %v1975, %v2052
    %v2062 = vmul.f32 %v1990, %v2054
    %2067 = vrot.lane.b32.xlu0 %v2059, 32
    %v2068 = vpop.permute.xlu0 %2067
    %2069 = vrot.lane.b32.xlu0 %v2060, 32
    %v2070 = vpop.permute.xlu0 %2069
    %2071 = vrot.lane.b32.xlu0 %v2061, 32
    %v2072 = vpop.permute.xlu0 %2071
    %2073 = vrot.lane.b32.xlu0 %v2062, 32
    %v2074 = vpop.permute.xlu0 %2073
    %v2079 = vadd.f32 %v2035, %v2068
    %v2080 = vadd.f32 %v2036, %v2070
    %v2081 = vadd.f32 %v2037, %v2072
    %v2082 = vadd.f32 %v2038, %v2074
    %2087 = vrot.lane.b32.xlu0 %v2079, 64
    %v2088 = vpop.permute.xlu0 %2087
    %2089 = vrot.lane.b32.xlu0 %v2080, 64
    %v2090 = vpop.permute.xlu0 %2089
    %2091 = vrot.lane.b32.xlu0 %v2081, 64
    %v2092 = vpop.permute.xlu0 %2091
    %2093 = vrot.lane.b32.xlu0 %v2082, 64
    %v2094 = vpop.permute.xlu0 %2093
    %2099 = vst.msk [vmem:[#allocation3 + $0xc0] sm:$0xff] %vm490, %v2088
    %2100 = vst.msk [vmem:[#allocation3 + $0xc8] sm:$0xff] %vm490, %v2090
    %2101 = vst.msk [vmem:[#allocation3 + $0xd0] sm:$0xff] %vm490, %v2092
    %2102 = vst.msk [vmem:[#allocation3 + $0xd8] sm:$0xff] %vm490, %v2094
    %v2103 = vld [vmem:[#allocation2 + $0xe0] sm:$0xff]
    %v2104 = vld [vmem:[#allocation2 + $0xe8] sm:$0xff]
    %v2105 = vld [vmem:[#allocation2 + $0xf0] sm:$0xff]
    %v2106 = vld [vmem:[#allocation2 + $0xf8] sm:$0xff]
    %v2107 = vpack.c.bf16 %v2080, %v2079
    %v2108 = vpack.c.bf16 %v2082, %v2081
    %2111 = vrot.lane.b32.xlu0 %v2107, 64
    %v2112 = vpop.permute.xlu0 %2111
    %2113 = vrot.lane.b32.xlu0 %v2108, 64
    %v2114 = vpop.permute.xlu0 %2113
    %v2116 = vsel %vm490, %v2112, 0
    %v2119 = vsel %vm490, %v2114, 0
    %2121 = vmatpush.bf16.msra.mxu0 0
    %2122 = vmatpush.bf16.msra.mxu0 0
    %2123 = vmatpush.bf16.msra.mxu0 0
    %2124 = vmatpush.bf16.msra.mxu0 0
    %2125 = vmatpush.bf16.msra.mxu0 0
    %2126 = vmatpush.bf16.msra.mxu0 0
    %2127 = vmatpush.bf16.msra.mxu0 %v478
    %2128 = vmatpush.bf16.msra.mxu0 %v477
    %2129 = vmatmul.bf16.gmra.mxu0 %v2116
    %v2130 = vpop.f32.mrf.mxu0
    %v2131 = vadd.f32 0.0, %v2130
    %v2132 = vpop.f32.mrf.mxu0
    %v2133 = vadd.f32 0.0, %v2132
    %2134 = vmatmul.bf16.gmra.mxu0 %v2119
    %v2135 = vpop.f32.mrf.mxu0
    %v2136 = vadd.f32 0.0, %v2135
    %v2137 = vpop.f32.mrf.mxu0
    %v2138 = vadd.f32 0.0, %v2137
    %2139 = vdwg.mxu0
    %v2140 = vadd.f32 %v2103, %v2131
    %v2141 = vadd.f32 %v2104, %v2133
    %v2142 = vadd.f32 %v2105, %v2136
    %v2143 = vadd.f32 %v2106, %v2138
    %v2144 = vxor.u32 %v2140, 2147483648
    %v2145 = vxor.u32 %v2141, 2147483648
    %v2146 = vxor.u32 %v2142, 2147483648
    %v2147 = vxor.u32 %v2143, 2147483648
    %v2148 = vmul.f32 %v2144, 1.442695
    %v2149 = vpow.pop %v2148
    %v2150 = vmul.f32 %v2145, 1.442695
    %v2151 = vpow.pop %v2150
    %v2152 = vmul.f32 %v2146, 1.442695
    %v2153 = vpow.pop %v2152
    %v2154 = vmul.f32 %v2147, 1.442695
    %v2155 = vpow.pop %v2154
    %v2156 = vadd.f32 %v2149, 1.0
    %v2157 = vadd.f32 %v2151, 1.0
    %v2158 = vadd.f32 %v2153, 1.0
    %v2159 = vadd.f32 %v2155, 1.0
    %v2160 = vrcp.pop %v2156
    %v2161 = vmul.f32 %v2156, %v2160
    %v2162 = vsub.f32 1.0, %v2161
    %v2163 = vmul.f32 %v2160, %v2162
    %v2164 = vadd.f32 %v2160, %v2163
    %vm2165 = vweird.f32 %v2156
    %vm2166 = vweird.f32 %v2160
    %vm2167 = vmor %vm2165, %vm2166
    %v2168 = vsel %vm2167, %v2160, %v2164
    %v2169 = vand.u32 2147483647, %v2156
    %vm2170 = vcmp.eq.f32.partialorder %v2169, 8.507059e+37
    %v2171 = vand.u32 %v2156, 2147483648
    %v2172 = vor.u32 1.1754944e-38, %v2171
    %v2173 = vsel %vm2170, %v2172, %v2168
    %v2174 = vmul.f32 1.0, %v2173
    %v2175 = vrcp.pop %v2157
    %v2176 = vmul.f32 %v2157, %v2175
    %v2177 = vsub.f32 1.0, %v2176
    %v2178 = vmul.f32 %v2175, %v2177
    %v2179 = vadd.f32 %v2175, %v2178
    %vm2180 = vweird.f32 %v2157
    %vm2181 = vweird.f32 %v2175
    %vm2182 = vmor %vm2180, %vm2181
    %v2183 = vsel %vm2182, %v2175, %v2179
    %v2184 = vand.u32 2147483647, %v2157
    %vm2185 = vcmp.eq.f32.partialorder %v2184, 8.507059e+37
    %v2186 = vand.u32 %v2157, 2147483648
    %v2187 = vor.u32 1.1754944e-38, %v2186
    %v2188 = vsel %vm2185, %v2187, %v2183
    %v2189 = vmul.f32 1.0, %v2188
    %v2190 = vrcp.pop %v2158
    %v2191 = vmul.f32 %v2158, %v2190
    %v2192 = vsub.f32 1.0, %v2191
    %v2193 = vmul.f32 %v2190, %v2192
    %v2194 = vadd.f32 %v2190, %v2193
    %vm2195 = vweird.f32 %v2158
    %vm2196 = vweird.f32 %v2190
    %vm2197 = vmor %vm2195, %vm2196
    %v2198 = vsel %vm2197, %v2190, %v2194
    %v2199 = vand.u32 2147483647, %v2158
    %vm2200 = vcmp.eq.f32.partialorder %v2199, 8.507059e+37
    %v2201 = vand.u32 %v2158, 2147483648
    %v2202 = vor.u32 1.1754944e-38, %v2201
    %v2203 = vsel %vm2200, %v2202, %v2198
    %v2204 = vmul.f32 1.0, %v2203
    %v2205 = vrcp.pop %v2159
    %v2206 = vmul.f32 %v2159, %v2205
    %v2207 = vsub.f32 1.0, %v2206
    %v2208 = vmul.f32 %v2205, %v2207
    %v2209 = vadd.f32 %v2205, %v2208
    %vm2210 = vweird.f32 %v2159
    %vm2211 = vweird.f32 %v2205
    %vm2212 = vmor %vm2210, %vm2211
    %v2213 = vsel %vm2212, %v2205, %v2209
    %v2214 = vand.u32 2147483647, %v2159
    %vm2215 = vcmp.eq.f32.partialorder %v2214, 8.507059e+37
    %v2216 = vand.u32 %v2159, 2147483648
    %v2217 = vor.u32 1.1754944e-38, %v2216
    %v2218 = vsel %vm2215, %v2217, %v2213
    %v2219 = vmul.f32 1.0, %v2218
    %v2220 = vadd.f32 %v2131, %v599
    %v2221 = vadd.f32 %v2133, %v599
    %v2222 = vadd.f32 %v2136, %v599
    %v2223 = vadd.f32 %v2138, %v599
    %2228 = vrot.lane.b32.xlu0 %v2220, 64
    %v2229 = vpop.permute.xlu0 %2228
    %2230 = vrot.lane.b32.xlu0 %v2221, 64
    %v2231 = vpop.permute.xlu0 %2230
    %2232 = vrot.lane.b32.xlu0 %v2222, 64
    %v2233 = vpop.permute.xlu0 %2232
    %2234 = vrot.lane.b32.xlu0 %v2223, 64
    %v2235 = vpop.permute.xlu0 %2234
    %v2240 = vmul.f32 %v2174, %v2229
    %v2241 = vmul.f32 %v2189, %v2231
    %v2242 = vmul.f32 %v2204, %v2233
    %v2243 = vmul.f32 %v2219, %v2235
    %2248 = vrot.lane.b32.xlu0 %v2240, 64
    %v2249 = vpop.permute.xlu0 %2248
    %2250 = vrot.lane.b32.xlu0 %v2241, 64
    %v2251 = vpop.permute.xlu0 %2250
    %2252 = vrot.lane.b32.xlu0 %v2242, 64
    %v2253 = vpop.permute.xlu0 %2252
    %2254 = vrot.lane.b32.xlu0 %v2243, 64
    %v2255 = vpop.permute.xlu0 %2254
    %v2260 = vadd.f32 %v2103, %v2249
    %v2261 = vadd.f32 %v2104, %v2251
    %v2262 = vadd.f32 %v2105, %v2253
    %v2263 = vadd.f32 %v2106, %v2255
    %v2264 = vtanh.pop %v2260
    %v2265 = vtanh.pop %v2261
    %v2266 = vtanh.pop %v2262
    %v2267 = vtanh.pop %v2263
    %v2268 = vsub.f32 %v2079, %v2264
    %v2269 = vsub.f32 %v2080, %v2265
    %v2270 = vsub.f32 %v2081, %v2266
    %v2271 = vsub.f32 %v2082, %v2267
    %2276 = vrot.lane.b32.xlu0 %v2268, 96
    %v2277 = vpop.permute.xlu0 %2276
    %2278 = vrot.lane.b32.xlu0 %v2269, 96
    %v2279 = vpop.permute.xlu0 %2278
    %2280 = vrot.lane.b32.xlu0 %v2270, 96
    %v2281 = vpop.permute.xlu0 %2280
    %2282 = vrot.lane.b32.xlu0 %v2271, 96
    %v2283 = vpop.permute.xlu0 %2282
    %v2288 = vmul.f32 %v2174, %v2277
    %v2289 = vmul.f32 %v2189, %v2279
    %v2290 = vmul.f32 %v2204, %v2281
    %v2291 = vmul.f32 %v2219, %v2283
    %2296 = vrot.lane.b32.xlu0 %v2288, 32
    %v2297 = vpop.permute.xlu0 %2296
    %2298 = vrot.lane.b32.xlu0 %v2289, 32
    %v2299 = vpop.permute.xlu0 %2298
    %2300 = vrot.lane.b32.xlu0 %v2290, 32
    %v2301 = vpop.permute.xlu0 %2300
    %2302 = vrot.lane.b32.xlu0 %v2291, 32
    %v2303 = vpop.permute.xlu0 %2302
    %v2308 = vadd.f32 %v2264, %v2297
    %v2309 = vadd.f32 %v2265, %v2299
    %v2310 = vadd.f32 %v2266, %v2301
    %v2311 = vadd.f32 %v2267, %v2303
    %2316 = vrot.lane.b32.xlu0 %v2308, 64
    %v2317 = vpop.permute.xlu0 %2316
    %2318 = vrot.lane.b32.xlu0 %v2309, 64
    %v2319 = vpop.permute.xlu0 %2318
    %2320 = vrot.lane.b32.xlu0 %v2310, 64
    %v2321 = vpop.permute.xlu0 %2320
    %2322 = vrot.lane.b32.xlu0 %v2311, 64
    %v2323 = vpop.permute.xlu0 %2322
    %2328 = vst.msk [vmem:[#allocation3 + $0xe0] sm:$0xff] %vm490, %v2317
    %2329 = vst.msk [vmem:[#allocation3 + $0xe8] sm:$0xff] %vm490, %v2319
    %2330 = vst.msk [vmem:[#allocation3 + $0xf0] sm:$0xff] %vm490, %v2321
    %2331 = vst.msk [vmem:[#allocation3 + $0xf8] sm:$0xff] %vm490, %v2323
    %v2332 = vld [vmem:[#allocation2 + $0x100] sm:$0xff]
    %v2333 = vld [vmem:[#allocation2 + $0x108] sm:$0xff]
    %v2334 = vld [vmem:[#allocation2 + $0x110] sm:$0xff]
    %v2335 = vld [vmem:[#allocation2 + $0x118] sm:$0xff]
    %v2336 = vpack.c.bf16 %v2309, %v2308
    %v2337 = vpack.c.bf16 %v2311, %v2310
    %2340 = vrot.lane.b32.xlu0 %v2336, 64
    %v2341 = vpop.permute.xlu0 %2340
    %2342 = vrot.lane.b32.xlu0 %v2337, 64
    %v2343 = vpop.permute.xlu0 %2342
    %v2345 = vsel %vm490, %v2341, 0
    %v2348 = vsel %vm490, %v2343, 0
    %2350 = vmatpush.bf16.msra.mxu0 0
    %2351 = vmatpush.bf16.msra.mxu0 0
    %2352 = vmatpush.bf16.msra.mxu0 0
    %2353 = vmatpush.bf16.msra.mxu0 0
    %2354 = vmatpush.bf16.msra.mxu0 0
    %2355 = vmatpush.bf16.msra.mxu0 0
    %2356 = vmatpush.bf16.msra.mxu0 %v478
    %2357 = vmatpush.bf16.msra.mxu0 %v477
    %2358 = vmatmul.bf16.gmra.mxu0 %v2345
    %v2359 = vpop.f32.mrf.mxu0
    %v2360 = vadd.f32 0.0, %v2359
    %v2361 = vpop.f32.mrf.mxu0
    %v2362 = vadd.f32 0.0, %v2361
    %2363 = vmatmul.bf16.gmra.mxu0 %v2348
    %v2364 = vpop.f32.mrf.mxu0
    %v2365 = vadd.f32 0.0, %v2364
    %v2366 = vpop.f32.mrf.mxu0
    %v2367 = vadd.f32 0.0, %v2366
    %2368 = vdwg.mxu0
    %v2369 = vadd.f32 %v2332, %v2360
    %v2370 = vadd.f32 %v2333, %v2362
    %v2371 = vadd.f32 %v2334, %v2365
    %v2372 = vadd.f32 %v2335, %v2367
    %v2373 = vxor.u32 %v2369, 2147483648
    %v2374 = vxor.u32 %v2370, 2147483648
    %v2375 = vxor.u32 %v2371, 2147483648
    %v2376 = vxor.u32 %v2372, 2147483648
    %v2377 = vmul.f32 %v2373, 1.442695
    %v2378 = vpow.pop %v2377
    %v2379 = vmul.f32 %v2374, 1.442695
    %v2380 = vpow.pop %v2379
    %v2381 = vmul.f32 %v2375, 1.442695
    %v2382 = vpow.pop %v2381
    %v2383 = vmul.f32 %v2376, 1.442695
    %v2384 = vpow.pop %v2383
    %v2385 = vadd.f32 %v2378, 1.0
    %v2386 = vadd.f32 %v2380, 1.0
    %v2387 = vadd.f32 %v2382, 1.0
    %v2388 = vadd.f32 %v2384, 1.0
    %v2389 = vrcp.pop %v2385
    %v2390 = vmul.f32 %v2385, %v2389
    %v2391 = vsub.f32 1.0, %v2390
    %v2392 = vmul.f32 %v2389, %v2391
    %v2393 = vadd.f32 %v2389, %v2392
    %vm2394 = vweird.f32 %v2385
    %vm2395 = vweird.f32 %v2389
    %vm2396 = vmor %vm2394, %vm2395
    %v2397 = vsel %vm2396, %v2389, %v2393
    %v2398 = vand.u32 2147483647, %v2385
    %vm2399 = vcmp.eq.f32.partialorder %v2398, 8.507059e+37
    %v2400 = vand.u32 %v2385, 2147483648
    %v2401 = vor.u32 1.1754944e-38, %v2400
    %v2402 = vsel %vm2399, %v2401, %v2397
    %v2403 = vmul.f32 1.0, %v2402
    %v2404 = vrcp.pop %v2386
    %v2405 = vmul.f32 %v2386, %v2404
    %v2406 = vsub.f32 1.0, %v2405
    %v2407 = vmul.f32 %v2404, %v2406
    %v2408 = vadd.f32 %v2404, %v2407
    %vm2409 = vweird.f32 %v2386
    %vm2410 = vweird.f32 %v2404
    %vm2411 = vmor %vm2409, %vm2410
    %v2412 = vsel %vm2411, %v2404, %v2408
    %v2413 = vand.u32 2147483647, %v2386
    %vm2414 = vcmp.eq.f32.partialorder %v2413, 8.507059e+37
    %v2415 = vand.u32 %v2386, 2147483648
    %v2416 = vor.u32 1.1754944e-38, %v2415
    %v2417 = vsel %vm2414, %v2416, %v2412
    %v2418 = vmul.f32 1.0, %v2417
    %v2419 = vrcp.pop %v2387
    %v2420 = vmul.f32 %v2387, %v2419
    %v2421 = vsub.f32 1.0, %v2420
    %v2422 = vmul.f32 %v2419, %v2421
    %v2423 = vadd.f32 %v2419, %v2422
    %vm2424 = vweird.f32 %v2387
    %vm2425 = vweird.f32 %v2419
    %vm2426 = vmor %vm2424, %vm2425
    %v2427 = vsel %vm2426, %v2419, %v2423
    %v2428 = vand.u32 2147483647, %v2387
    %vm2429 = vcmp.eq.f32.partialorder %v2428, 8.507059e+37
    %v2430 = vand.u32 %v2387, 2147483648
    %v2431 = vor.u32 1.1754944e-38, %v2430
    %v2432 = vsel %vm2429, %v2431, %v2427
    %v2433 = vmul.f32 1.0, %v2432
    %v2434 = vrcp.pop %v2388
    %v2435 = vmul.f32 %v2388, %v2434
    %v2436 = vsub.f32 1.0, %v2435
    %v2437 = vmul.f32 %v2434, %v2436
    %v2438 = vadd.f32 %v2434, %v2437
    %vm2439 = vweird.f32 %v2388
    %vm2440 = vweird.f32 %v2434
    %vm2441 = vmor %vm2439, %vm2440
    %v2442 = vsel %vm2441, %v2434, %v2438
    %v2443 = vand.u32 2147483647, %v2388
    %vm2444 = vcmp.eq.f32.partialorder %v2443, 8.507059e+37
    %v2445 = vand.u32 %v2388, 2147483648
    %v2446 = vor.u32 1.1754944e-38, %v2445
    %v2447 = vsel %vm2444, %v2446, %v2442
    %v2448 = vmul.f32 1.0, %v2447
    %v2449 = vadd.f32 %v2360, %v599
    %v2450 = vadd.f32 %v2362, %v599
    %v2451 = vadd.f32 %v2365, %v599
    %v2452 = vadd.f32 %v2367, %v599
    %2457 = vrot.lane.b32.xlu0 %v2449, 64
    %v2458 = vpop.permute.xlu0 %2457
    %2459 = vrot.lane.b32.xlu0 %v2450, 64
    %v2460 = vpop.permute.xlu0 %2459
    %2461 = vrot.lane.b32.xlu0 %v2451, 64
    %v2462 = vpop.permute.xlu0 %2461
    %2463 = vrot.lane.b32.xlu0 %v2452, 64
    %v2464 = vpop.permute.xlu0 %2463
    %v2469 = vmul.f32 %v2403, %v2458
    %v2470 = vmul.f32 %v2418, %v2460
    %v2471 = vmul.f32 %v2433, %v2462
    %v2472 = vmul.f32 %v2448, %v2464
    %2477 = vrot.lane.b32.xlu0 %v2469, 64
    %v2478 = vpop.permute.xlu0 %2477
    %2479 = vrot.lane.b32.xlu0 %v2470, 64
    %v2480 = vpop.permute.xlu0 %2479
    %2481 = vrot.lane.b32.xlu0 %v2471, 64
    %v2482 = vpop.permute.xlu0 %2481
    %2483 = vrot.lane.b32.xlu0 %v2472, 64
    %v2484 = vpop.permute.xlu0 %2483
    %v2489 = vadd.f32 %v2332, %v2478
    %v2490 = vadd.f32 %v2333, %v2480
    %v2491 = vadd.f32 %v2334, %v2482
    %v2492 = vadd.f32 %v2335, %v2484
    %v2493 = vtanh.pop %v2489
    %v2494 = vtanh.pop %v2490
    %v2495 = vtanh.pop %v2491
    %v2496 = vtanh.pop %v2492
    %v2497 = vsub.f32 %v2308, %v2493
    %v2498 = vsub.f32 %v2309, %v2494
    %v2499 = vsub.f32 %v2310, %v2495
    %v2500 = vsub.f32 %v2311, %v2496
    %2505 = vrot.lane.b32.xlu0 %v2497, 96
    %v2506 = vpop.permute.xlu0 %2505
    %2507 = vrot.lane.b32.xlu0 %v2498, 96
    %v2508 = vpop.permute.xlu0 %2507
    %2509 = vrot.lane.b32.xlu0 %v2499, 96
    %v2510 = vpop.permute.xlu0 %2509
    %2511 = vrot.lane.b32.xlu0 %v2500, 96
    %v2512 = vpop.permute.xlu0 %2511
    %v2517 = vmul.f32 %v2403, %v2506
    %v2518 = vmul.f32 %v2418, %v2508
    %v2519 = vmul.f32 %v2433, %v2510
    %v2520 = vmul.f32 %v2448, %v2512
    %2525 = vrot.lane.b32.xlu0 %v2517, 32
    %v2526 = vpop.permute.xlu0 %2525
    %2527 = vrot.lane.b32.xlu0 %v2518, 32
    %v2528 = vpop.permute.xlu0 %2527
    %2529 = vrot.lane.b32.xlu0 %v2519, 32
    %v2530 = vpop.permute.xlu0 %2529
    %2531 = vrot.lane.b32.xlu0 %v2520, 32
    %v2532 = vpop.permute.xlu0 %2531
    %v2537 = vadd.f32 %v2493, %v2526
    %v2538 = vadd.f32 %v2494, %v2528
    %v2539 = vadd.f32 %v2495, %v2530
    %v2540 = vadd.f32 %v2496, %v2532
    %2545 = vrot.lane.b32.xlu0 %v2537, 64
    %v2546 = vpop.permute.xlu0 %2545
    %2547 = vrot.lane.b32.xlu0 %v2538, 64
    %v2548 = vpop.permute.xlu0 %2547
    %2549 = vrot.lane.b32.xlu0 %v2539, 64
    %v2550 = vpop.permute.xlu0 %2549
    %2551 = vrot.lane.b32.xlu0 %v2540, 64
    %v2552 = vpop.permute.xlu0 %2551
    %2557 = vst.msk [vmem:[#allocation3 + $0x100] sm:$0xff] %vm490, %v2546
    %2558 = vst.msk [vmem:[#allocation3 + $0x108] sm:$0xff] %vm490, %v2548
    %2559 = vst.msk [vmem:[#allocation3 + $0x110] sm:$0xff] %vm490, %v2550
    %2560 = vst.msk [vmem:[#allocation3 + $0x118] sm:$0xff] %vm490, %v2552
    %v2561 = vld [vmem:[#allocation2 + $0x120] sm:$0xff]
    %v2562 = vld [vmem:[#allocation2 + $0x128] sm:$0xff]
    %v2563 = vld [vmem:[#allocation2 + $0x130] sm:$0xff]
    %v2564 = vld [vmem:[#allocation2 + $0x138] sm:$0xff]
    %v2565 = vpack.c.bf16 %v2538, %v2537
    %v2566 = vpack.c.bf16 %v2540, %v2539
    %2569 = vrot.lane.b32.xlu0 %v2565, 64
    %v2570 = vpop.permute.xlu0 %2569
    %2571 = vrot.lane.b32.xlu0 %v2566, 64
    %v2572 = vpop.permute.xlu0 %2571
    %v2574 = vsel %vm490, %v2570, 0
    %v2577 = vsel %vm490, %v2572, 0
    %2579 = vmatpush.bf16.msra.mxu0 0
    %2580 = vmatpush.bf16.msra.mxu0 0
    %2581 = vmatpush.bf16.msra.mxu0 0
    %2582 = vmatpush.bf16.msra.mxu0 0
    %2583 = vmatpush.bf16.msra.mxu0 0
    %2584 = vmatpush.bf16.msra.mxu0 0
    %2585 = vmatpush.bf16.msra.mxu0 %v478
    %2586 = vmatpush.bf16.msra.mxu0 %v477
    %2587 = vmatmul.bf16.gmra.mxu0 %v2574
    %v2588 = vpop.f32.mrf.mxu0
    %v2589 = vadd.f32 0.0, %v2588
    %v2590 = vpop.f32.mrf.mxu0
    %v2591 = vadd.f32 0.0, %v2590
    %2592 = vmatmul.bf16.gmra.mxu0 %v2577
    %v2593 = vpop.f32.mrf.mxu0
    %v2594 = vadd.f32 0.0, %v2593
    %v2595 = vpop.f32.mrf.mxu0
    %v2596 = vadd.f32 0.0, %v2595
    %2597 = vdwg.mxu0
    %v2598 = vadd.f32 %v2561, %v2589
    %v2599 = vadd.f32 %v2562, %v2591
    %v2600 = vadd.f32 %v2563, %v2594
    %v2601 = vadd.f32 %v2564, %v2596
    %v2602 = vxor.u32 %v2598, 2147483648
    %v2603 = vxor.u32 %v2599, 2147483648
    %v2604 = vxor.u32 %v2600, 2147483648
    %v2605 = vxor.u32 %v2601, 2147483648
    %v2606 = vmul.f32 %v2602, 1.442695
    %v2607 = vpow.pop %v2606
    %v2608 = vmul.f32 %v2603, 1.442695
    %v2609 = vpow.pop %v2608
    %v2610 = vmul.f32 %v2604, 1.442695
    %v2611 = vpow.pop %v2610
    %v2612 = vmul.f32 %v2605, 1.442695
    %v2613 = vpow.pop %v2612
    %v2614 = vadd.f32 %v2607, 1.0
    %v2615 = vadd.f32 %v2609, 1.0
    %v2616 = vadd.f32 %v2611, 1.0
    %v2617 = vadd.f32 %v2613, 1.0
    %v2618 = vrcp.pop %v2614
    %v2619 = vmul.f32 %v2614, %v2618
    %v2620 = vsub.f32 1.0, %v2619
    %v2621 = vmul.f32 %v2618, %v2620
    %v2622 = vadd.f32 %v2618, %v2621
    %vm2623 = vweird.f32 %v2614
    %vm2624 = vweird.f32 %v2618
    %vm2625 = vmor %vm2623, %vm2624
    %v2626 = vsel %vm2625, %v2618, %v2622
    %v2627 = vand.u32 2147483647, %v2614
    %vm2628 = vcmp.eq.f32.partialorder %v2627, 8.507059e+37
    %v2629 = vand.u32 %v2614, 2147483648
    %v2630 = vor.u32 1.1754944e-38, %v2629
    %v2631 = vsel %vm2628, %v2630, %v2626
    %v2632 = vmul.f32 1.0, %v2631
    %v2633 = vrcp.pop %v2615
    %v2634 = vmul.f32 %v2615, %v2633
    %v2635 = vsub.f32 1.0, %v2634
    %v2636 = vmul.f32 %v2633, %v2635
    %v2637 = vadd.f32 %v2633, %v2636
    %vm2638 = vweird.f32 %v2615
    %vm2639 = vweird.f32 %v2633
    %vm2640 = vmor %vm2638, %vm2639
    %v2641 = vsel %vm2640, %v2633, %v2637
    %v2642 = vand.u32 2147483647, %v2615
    %vm2643 = vcmp.eq.f32.partialorder %v2642, 8.507059e+37
    %v2644 = vand.u32 %v2615, 2147483648
    %v2645 = vor.u32 1.1754944e-38, %v2644
    %v2646 = vsel %vm2643, %v2645, %v2641
    %v2647 = vmul.f32 1.0, %v2646
    %v2648 = vrcp.pop %v2616
    %v2649 = vmul.f32 %v2616, %v2648
    %v2650 = vsub.f32 1.0, %v2649
    %v2651 = vmul.f32 %v2648, %v2650
    %v2652 = vadd.f32 %v2648, %v2651
    %vm2653 = vweird.f32 %v2616
    %vm2654 = vweird.f32 %v2648
    %vm2655 = vmor %vm2653, %vm2654
    %v2656 = vsel %vm2655, %v2648, %v2652
    %v2657 = vand.u32 2147483647, %v2616
    %vm2658 = vcmp.eq.f32.partialorder %v2657, 8.507059e+37
    %v2659 = vand.u32 %v2616, 2147483648
    %v2660 = vor.u32 1.1754944e-38, %v2659
    %v2661 = vsel %vm2658, %v2660, %v2656
    %v2662 = vmul.f32 1.0, %v2661
    %v2663 = vrcp.pop %v2617
    %v2664 = vmul.f32 %v2617, %v2663
    %v2665 = vsub.f32 1.0, %v2664
    %v2666 = vmul.f32 %v2663, %v2665
    %v2667 = vadd.f32 %v2663, %v2666
    %vm2668 = vweird.f32 %v2617
    %vm2669 = vweird.f32 %v2663
    %vm2670 = vmor %vm2668, %vm2669
    %v2671 = vsel %vm2670, %v2663, %v2667
    %v2672 = vand.u32 2147483647, %v2617
    %vm2673 = vcmp.eq.f32.partialorder %v2672, 8.507059e+37
    %v2674 = vand.u32 %v2617, 2147483648
    %v2675 = vor.u32 1.1754944e-38, %v2674
    %v2676 = vsel %vm2673, %v2675, %v2671
    %v2677 = vmul.f32 1.0, %v2676
    %v2678 = vadd.f32 %v2589, %v599
    %v2679 = vadd.f32 %v2591, %v599
    %v2680 = vadd.f32 %v2594, %v599
    %v2681 = vadd.f32 %v2596, %v599
    %2686 = vrot.lane.b32.xlu0 %v2678, 64
    %v2687 = vpop.permute.xlu0 %2686
    %2688 = vrot.lane.b32.xlu0 %v2679, 64
    %v2689 = vpop.permute.xlu0 %2688
    %2690 = vrot.lane.b32.xlu0 %v2680, 64
    %v2691 = vpop.permute.xlu0 %2690
    %2692 = vrot.lane.b32.xlu0 %v2681, 64
    %v2693 = vpop.permute.xlu0 %2692
    %v2698 = vmul.f32 %v2632, %v2687
    %v2699 = vmul.f32 %v2647, %v2689
    %v2700 = vmul.f32 %v2662, %v2691
    %v2701 = vmul.f32 %v2677, %v2693
    %2706 = vrot.lane.b32.xlu0 %v2698, 64
    %v2707 = vpop.permute.xlu0 %2706
    %2708 = vrot.lane.b32.xlu0 %v2699, 64
    %v2709 = vpop.permute.xlu0 %2708
    %2710 = vrot.lane.b32.xlu0 %v2700, 64
    %v2711 = vpop.permute.xlu0 %2710
    %2712 = vrot.lane.b32.xlu0 %v2701, 64
    %v2713 = vpop.permute.xlu0 %2712
    %v2718 = vadd.f32 %v2561, %v2707
    %v2719 = vadd.f32 %v2562, %v2709
    %v2720 = vadd.f32 %v2563, %v2711
    %v2721 = vadd.f32 %v2564, %v2713
    %v2722 = vtanh.pop %v2718
    %v2723 = vtanh.pop %v2719
    %v2724 = vtanh.pop %v2720
    %v2725 = vtanh.pop %v2721
    %v2726 = vsub.f32 %v2537, %v2722
    %v2727 = vsub.f32 %v2538, %v2723
    %v2728 = vsub.f32 %v2539, %v2724
    %v2729 = vsub.f32 %v2540, %v2725
    %2734 = vrot.lane.b32.xlu0 %v2726, 96
    %v2735 = vpop.permute.xlu0 %2734
    %2736 = vrot.lane.b32.xlu0 %v2727, 96
    %v2737 = vpop.permute.xlu0 %2736
    %2738 = vrot.lane.b32.xlu0 %v2728, 96
    %v2739 = vpop.permute.xlu0 %2738
    %2740 = vrot.lane.b32.xlu0 %v2729, 96
    %v2741 = vpop.permute.xlu0 %2740
    %v2746 = vmul.f32 %v2632, %v2735
    %v2747 = vmul.f32 %v2647, %v2737
    %v2748 = vmul.f32 %v2662, %v2739
    %v2749 = vmul.f32 %v2677, %v2741
    %2754 = vrot.lane.b32.xlu0 %v2746, 32
    %v2755 = vpop.permute.xlu0 %2754
    %2756 = vrot.lane.b32.xlu0 %v2747, 32
    %v2757 = vpop.permute.xlu0 %2756
    %2758 = vrot.lane.b32.xlu0 %v2748, 32
    %v2759 = vpop.permute.xlu0 %2758
    %2760 = vrot.lane.b32.xlu0 %v2749, 32
    %v2761 = vpop.permute.xlu0 %2760
    %v2766 = vadd.f32 %v2722, %v2755
    %v2767 = vadd.f32 %v2723, %v2757
    %v2768 = vadd.f32 %v2724, %v2759
    %v2769 = vadd.f32 %v2725, %v2761
    %2774 = vrot.lane.b32.xlu0 %v2766, 64
    %v2775 = vpop.permute.xlu0 %2774
    %2776 = vrot.lane.b32.xlu0 %v2767, 64
    %v2777 = vpop.permute.xlu0 %2776
    %2778 = vrot.lane.b32.xlu0 %v2768, 64
    %v2779 = vpop.permute.xlu0 %2778
    %2780 = vrot.lane.b32.xlu0 %v2769, 64
    %v2781 = vpop.permute.xlu0 %2780
    %2786 = vst.msk [vmem:[#allocation3 + $0x120] sm:$0xff] %vm490, %v2775
    %2787 = vst.msk [vmem:[#allocation3 + $0x128] sm:$0xff] %vm490, %v2777
    %2788 = vst.msk [vmem:[#allocation3 + $0x130] sm:$0xff] %vm490, %v2779
    %2789 = vst.msk [vmem:[#allocation3 + $0x138] sm:$0xff] %vm490, %v2781
    %v2790 = vld [vmem:[#allocation2 + $0x140] sm:$0xff]
    %v2791 = vld [vmem:[#allocation2 + $0x148] sm:$0xff]
    %v2792 = vld [vmem:[#allocation2 + $0x150] sm:$0xff]
    %v2793 = vld [vmem:[#allocation2 + $0x158] sm:$0xff]
    %v2794 = vpack.c.bf16 %v2767, %v2766
    %v2795 = vpack.c.bf16 %v2769, %v2768
    %2798 = vrot.lane.b32.xlu0 %v2794, 64
    %v2799 = vpop.permute.xlu0 %2798
    %2800 = vrot.lane.b32.xlu0 %v2795, 64
    %v2801 = vpop.permute.xlu0 %2800
    %v2803 = vsel %vm490, %v2799, 0
    %v2806 = vsel %vm490, %v2801, 0
    %2808 = vmatpush.bf16.msra.mxu0 0
    %2809 = vmatpush.bf16.msra.mxu0 0
    %2810 = vmatpush.bf16.msra.mxu0 0
    %2811 = vmatpush.bf16.msra.mxu0 0
    %2812 = vmatpush.bf16.msra.mxu0 0
    %2813 = vmatpush.bf16.msra.mxu0 0
    %2814 = vmatpush.bf16.msra.mxu0 %v478
    %2815 = vmatpush.bf16.msra.mxu0 %v477
    %2816 = vmatmul.bf16.gmra.mxu0 %v2803
    %v2817 = vpop.f32.mrf.mxu0
    %v2818 = vadd.f32 0.0, %v2817
    %v2819 = vpop.f32.mrf.mxu0
    %v2820 = vadd.f32 0.0, %v2819
    %2821 = vmatmul.bf16.gmra.mxu0 %v2806
    %v2822 = vpop.f32.mrf.mxu0
    %v2823 = vadd.f32 0.0, %v2822
    %v2824 = vpop.f32.mrf.mxu0
    %v2825 = vadd.f32 0.0, %v2824
    %2826 = vdwg.mxu0
    %v2827 = vadd.f32 %v2790, %v2818
    %v2828 = vadd.f32 %v2791, %v2820
    %v2829 = vadd.f32 %v2792, %v2823
    %v2830 = vadd.f32 %v2793, %v2825
    %v2831 = vxor.u32 %v2827, 2147483648
    %v2832 = vxor.u32 %v2828, 2147483648
    %v2833 = vxor.u32 %v2829, 2147483648
    %v2834 = vxor.u32 %v2830, 2147483648
    %v2835 = vmul.f32 %v2831, 1.442695
    %v2836 = vpow.pop %v2835
    %v2837 = vmul.f32 %v2832, 1.442695
    %v2838 = vpow.pop %v2837
    %v2839 = vmul.f32 %v2833, 1.442695
    %v2840 = vpow.pop %v2839
    %v2841 = vmul.f32 %v2834, 1.442695
    %v2842 = vpow.pop %v2841
    %v2843 = vadd.f32 %v2836, 1.0
    %v2844 = vadd.f32 %v2838, 1.0
    %v2845 = vadd.f32 %v2840, 1.0
    %v2846 = vadd.f32 %v2842, 1.0
    %v2847 = vrcp.pop %v2843
    %v2848 = vmul.f32 %v2843, %v2847
    %v2849 = vsub.f32 1.0, %v2848
    %v2850 = vmul.f32 %v2847, %v2849
    %v2851 = vadd.f32 %v2847, %v2850
    %vm2852 = vweird.f32 %v2843
    %vm2853 = vweird.f32 %v2847
    %vm2854 = vmor %vm2852, %vm2853
    %v2855 = vsel %vm2854, %v2847, %v2851
    %v2856 = vand.u32 2147483647, %v2843
    %vm2857 = vcmp.eq.f32.partialorder %v2856, 8.507059e+37
    %v2858 = vand.u32 %v2843, 2147483648
    %v2859 = vor.u32 1.1754944e-38, %v2858
    %v2860 = vsel %vm2857, %v2859, %v2855
    %v2861 = vmul.f32 1.0, %v2860
    %v2862 = vrcp.pop %v2844
    %v2863 = vmul.f32 %v2844, %v2862
    %v2864 = vsub.f32 1.0, %v2863
    %v2865 = vmul.f32 %v2862, %v2864
    %v2866 = vadd.f32 %v2862, %v2865
    %vm2867 = vweird.f32 %v2844
    %vm2868 = vweird.f32 %v2862
    %vm2869 = vmor %vm2867, %vm2868
    %v2870 = vsel %vm2869, %v2862, %v2866
    %v2871 = vand.u32 2147483647, %v2844
    %vm2872 = vcmp.eq.f32.partialorder %v2871, 8.507059e+37
    %v2873 = vand.u32 %v2844, 2147483648
    %v2874 = vor.u32 1.1754944e-38, %v2873
    %v2875 = vsel %vm2872, %v2874, %v2870
    %v2876 = vmul.f32 1.0, %v2875
    %v2877 = vrcp.pop %v2845
    %v2878 = vmul.f32 %v2845, %v2877
    %v2879 = vsub.f32 1.0, %v2878
    %v2880 = vmul.f32 %v2877, %v2879
    %v2881 = vadd.f32 %v2877, %v2880
    %vm2882 = vweird.f32 %v2845
    %vm2883 = vweird.f32 %v2877
    %vm2884 = vmor %vm2882, %vm2883
    %v2885 = vsel %vm2884, %v2877, %v2881
    %v2886 = vand.u32 2147483647, %v2845
    %vm2887 = vcmp.eq.f32.partialorder %v2886, 8.507059e+37
    %v2888 = vand.u32 %v2845, 2147483648
    %v2889 = vor.u32 1.1754944e-38, %v2888
    %v2890 = vsel %vm2887, %v2889, %v2885
    %v2891 = vmul.f32 1.0, %v2890
    %v2892 = vrcp.pop %v2846
    %v2893 = vmul.f32 %v2846, %v2892
    %v2894 = vsub.f32 1.0, %v2893
    %v2895 = vmul.f32 %v2892, %v2894
    %v2896 = vadd.f32 %v2892, %v2895
    %vm2897 = vweird.f32 %v2846
    %vm2898 = vweird.f32 %v2892
    %vm2899 = vmor %vm2897, %vm2898
    %v2900 = vsel %vm2899, %v2892, %v2896
    %v2901 = vand.u32 2147483647, %v2846
    %vm2902 = vcmp.eq.f32.partialorder %v2901, 8.507059e+37
    %v2903 = vand.u32 %v2846, 2147483648
    %v2904 = vor.u32 1.1754944e-38, %v2903
    %v2905 = vsel %vm2902, %v2904, %v2900
    %v2906 = vmul.f32 1.0, %v2905
    %v2907 = vadd.f32 %v2818, %v599
    %v2908 = vadd.f32 %v2820, %v599
    %v2909 = vadd.f32 %v2823, %v599
    %v2910 = vadd.f32 %v2825, %v599
    %2915 = vrot.lane.b32.xlu0 %v2907, 64
    %v2916 = vpop.permute.xlu0 %2915
    %2917 = vrot.lane.b32.xlu0 %v2908, 64
    %v2918 = vpop.permute.xlu0 %2917
    %2919 = vrot.lane.b32.xlu0 %v2909, 64
    %v2920 = vpop.permute.xlu0 %2919
    %2921 = vrot.lane.b32.xlu0 %v2910, 64
    %v2922 = vpop.permute.xlu0 %2921
    %v2927 = vmul.f32 %v2861, %v2916
    %v2928 = vmul.f32 %v2876, %v2918
    %v2929 = vmul.f32 %v2891, %v2920
    %v2930 = vmul.f32 %v2906, %v2922
    %2935 = vrot.lane.b32.xlu0 %v2927, 64
    %v2936 = vpop.permute.xlu0 %2935
    %2937 = vrot.lane.b32.xlu0 %v2928, 64
    %v2938 = vpop.permute.xlu0 %2937
    %2939 = vrot.lane.b32.xlu0 %v2929, 64
    %v2940 = vpop.permute.xlu0 %2939
    %2941 = vrot.lane.b32.xlu0 %v2930, 64
    %v2942 = vpop.permute.xlu0 %2941
    %v2947 = vadd.f32 %v2790, %v2936
    %v2948 = vadd.f32 %v2791, %v2938
    %v2949 = vadd.f32 %v2792, %v2940
    %v2950 = vadd.f32 %v2793, %v2942
    %v2951 = vtanh.pop %v2947
    %v2952 = vtanh.pop %v2948
    %v2953 = vtanh.pop %v2949
    %v2954 = vtanh.pop %v2950
    %v2955 = vsub.f32 %v2766, %v2951
    %v2956 = vsub.f32 %v2767, %v2952
    %v2957 = vsub.f32 %v2768, %v2953
    %v2958 = vsub.f32 %v2769, %v2954
    %2963 = vrot.lane.b32.xlu0 %v2955, 96
    %v2964 = vpop.permute.xlu0 %2963
    %2965 = vrot.lane.b32.xlu0 %v2956, 96
    %v2966 = vpop.permute.xlu0 %2965
    %2967 = vrot.lane.b32.xlu0 %v2957, 96
    %v2968 = vpop.permute.xlu0 %2967
    %2969 = vrot.lane.b32.xlu0 %v2958, 96
    %v2970 = vpop.permute.xlu0 %2969
    %v2975 = vmul.f32 %v2861, %v2964
    %v2976 = vmul.f32 %v2876, %v2966
    %v2977 = vmul.f32 %v2891, %v2968
    %v2978 = vmul.f32 %v2906, %v2970
    %2983 = vrot.lane.b32.xlu0 %v2975, 32
    %v2984 = vpop.permute.xlu0 %2983
    %2985 = vrot.lane.b32.xlu0 %v2976, 32
    %v2986 = vpop.permute.xlu0 %2985
    %2987 = vrot.lane.b32.xlu0 %v2977, 32
    %v2988 = vpop.permute.xlu0 %2987
    %2989 = vrot.lane.b32.xlu0 %v2978, 32
    %v2990 = vpop.permute.xlu0 %2989
    %v2995 = vadd.f32 %v2951, %v2984
    %v2996 = vadd.f32 %v2952, %v2986
    %v2997 = vadd.f32 %v2953, %v2988
    %v2998 = vadd.f32 %v2954, %v2990
    %3003 = vrot.lane.b32.xlu0 %v2995, 64
    %v3004 = vpop.permute.xlu0 %3003
    %3005 = vrot.lane.b32.xlu0 %v2996, 64
    %v3006 = vpop.permute.xlu0 %3005
    %3007 = vrot.lane.b32.xlu0 %v2997, 64
    %v3008 = vpop.permute.xlu0 %3007
    %3009 = vrot.lane.b32.xlu0 %v2998, 64
    %v3010 = vpop.permute.xlu0 %3009
    %3015 = vst.msk [vmem:[#allocation3 + $0x140] sm:$0xff] %vm490, %v3004
    %3016 = vst.msk [vmem:[#allocation3 + $0x148] sm:$0xff] %vm490, %v3006
    %3017 = vst.msk [vmem:[#allocation3 + $0x150] sm:$0xff] %vm490, %v3008
    %3018 = vst.msk [vmem:[#allocation3 + $0x158] sm:$0xff] %vm490, %v3010
    %v3019 = vld [vmem:[#allocation2 + $0x160] sm:$0xff]
    %v3020 = vld [vmem:[#allocation2 + $0x168] sm:$0xff]
    %v3021 = vld [vmem:[#allocation2 + $0x170] sm:$0xff]
    %v3022 = vld [vmem:[#allocation2 + $0x178] sm:$0xff]
    %v3023 = vpack.c.bf16 %v2996, %v2995
    %v3024 = vpack.c.bf16 %v2998, %v2997
    %3027 = vrot.lane.b32.xlu0 %v3023, 64
    %v3028 = vpop.permute.xlu0 %3027
    %3029 = vrot.lane.b32.xlu0 %v3024, 64
    %v3030 = vpop.permute.xlu0 %3029
    %v3032 = vsel %vm490, %v3028, 0
    %v3035 = vsel %vm490, %v3030, 0
    %3037 = vmatpush.bf16.msra.mxu0 0
    %3038 = vmatpush.bf16.msra.mxu0 0
    %3039 = vmatpush.bf16.msra.mxu0 0
    %3040 = vmatpush.bf16.msra.mxu0 0
    %3041 = vmatpush.bf16.msra.mxu0 0
    %3042 = vmatpush.bf16.msra.mxu0 0
    %3043 = vmatpush.bf16.msra.mxu0 %v478
    %3044 = vmatpush.bf16.msra.mxu0 %v477
    %3045 = vmatmul.bf16.gmra.mxu0 %v3032
    %v3046 = vpop.f32.mrf.mxu0
    %v3047 = vadd.f32 0.0, %v3046
    %v3048 = vpop.f32.mrf.mxu0
    %v3049 = vadd.f32 0.0, %v3048
    %3050 = vmatmul.bf16.gmra.mxu0 %v3035
    %v3051 = vpop.f32.mrf.mxu0
    %v3052 = vadd.f32 0.0, %v3051
    %v3053 = vpop.f32.mrf.mxu0
    %v3054 = vadd.f32 0.0, %v3053
    %3055 = vdwg.mxu0
    %v3056 = vadd.f32 %v3019, %v3047
    %v3057 = vadd.f32 %v3020, %v3049
    %v3058 = vadd.f32 %v3021, %v3052
    %v3059 = vadd.f32 %v3022, %v3054
    %v3060 = vxor.u32 %v3056, 2147483648
    %v3061 = vxor.u32 %v3057, 2147483648
    %v3062 = vxor.u32 %v3058, 2147483648
    %v3063 = vxor.u32 %v3059, 2147483648
    %v3064 = vmul.f32 %v3060, 1.442695
    %v3065 = vpow.pop %v3064
    %v3066 = vmul.f32 %v3061, 1.442695
    %v3067 = vpow.pop %v3066
    %v3068 = vmul.f32 %v3062, 1.442695
    %v3069 = vpow.pop %v3068
    %v3070 = vmul.f32 %v3063, 1.442695
    %v3071 = vpow.pop %v3070
    %v3072 = vadd.f32 %v3065, 1.0
    %v3073 = vadd.f32 %v3067, 1.0
    %v3074 = vadd.f32 %v3069, 1.0
    %v3075 = vadd.f32 %v3071, 1.0
    %v3076 = vrcp.pop %v3072
    %v3077 = vmul.f32 %v3072, %v3076
    %v3078 = vsub.f32 1.0, %v3077
    %v3079 = vmul.f32 %v3076, %v3078
    %v3080 = vadd.f32 %v3076, %v3079
    %vm3081 = vweird.f32 %v3072
    %vm3082 = vweird.f32 %v3076
    %vm3083 = vmor %vm3081, %vm3082
    %v3084 = vsel %vm3083, %v3076, %v3080
    %v3085 = vand.u32 2147483647, %v3072
    %vm3086 = vcmp.eq.f32.partialorder %v3085, 8.507059e+37
    %v3087 = vand.u32 %v3072, 2147483648
    %v3088 = vor.u32 1.1754944e-38, %v3087
    %v3089 = vsel %vm3086, %v3088, %v3084
    %v3090 = vmul.f32 1.0, %v3089
    %v3091 = vrcp.pop %v3073
    %v3092 = vmul.f32 %v3073, %v3091
    %v3093 = vsub.f32 1.0, %v3092
    %v3094 = vmul.f32 %v3091, %v3093
    %v3095 = vadd.f32 %v3091, %v3094
    %vm3096 = vweird.f32 %v3073
    %vm3097 = vweird.f32 %v3091
    %vm3098 = vmor %vm3096, %vm3097
    %v3099 = vsel %vm3098, %v3091, %v3095
    %v3100 = vand.u32 2147483647, %v3073
    %vm3101 = vcmp.eq.f32.partialorder %v3100, 8.507059e+37
    %v3102 = vand.u32 %v3073, 2147483648
    %v3103 = vor.u32 1.1754944e-38, %v3102
    %v3104 = vsel %vm3101, %v3103, %v3099
    %v3105 = vmul.f32 1.0, %v3104
    %v3106 = vrcp.pop %v3074
    %v3107 = vmul.f32 %v3074, %v3106
    %v3108 = vsub.f32 1.0, %v3107
    %v3109 = vmul.f32 %v3106, %v3108
    %v3110 = vadd.f32 %v3106, %v3109
    %vm3111 = vweird.f32 %v3074
    %vm3112 = vweird.f32 %v3106
    %vm3113 = vmor %vm3111, %vm3112
    %v3114 = vsel %vm3113, %v3106, %v3110
    %v3115 = vand.u32 2147483647, %v3074
    %vm3116 = vcmp.eq.f32.partialorder %v3115, 8.507059e+37
    %v3117 = vand.u32 %v3074, 2147483648
    %v3118 = vor.u32 1.1754944e-38, %v3117
    %v3119 = vsel %vm3116, %v3118, %v3114
    %v3120 = vmul.f32 1.0, %v3119
    %v3121 = vrcp.pop %v3075
    %v3122 = vmul.f32 %v3075, %v3121
    %v3123 = vsub.f32 1.0, %v3122
    %v3124 = vmul.f32 %v3121, %v3123
    %v3125 = vadd.f32 %v3121, %v3124
    %vm3126 = vweird.f32 %v3075
    %vm3127 = vweird.f32 %v3121
    %vm3128 = vmor %vm3126, %vm3127
    %v3129 = vsel %vm3128, %v3121, %v3125
    %v3130 = vand.u32 2147483647, %v3075
    %vm3131 = vcmp.eq.f32.partialorder %v3130, 8.507059e+37
    %v3132 = vand.u32 %v3075, 2147483648
    %v3133 = vor.u32 1.1754944e-38, %v3132
    %v3134 = vsel %vm3131, %v3133, %v3129
    %v3135 = vmul.f32 1.0, %v3134
    %v3136 = vadd.f32 %v3047, %v599
    %v3137 = vadd.f32 %v3049, %v599
    %v3138 = vadd.f32 %v3052, %v599
    %v3139 = vadd.f32 %v3054, %v599
    %3144 = vrot.lane.b32.xlu0 %v3136, 64
    %v3145 = vpop.permute.xlu0 %3144
    %3146 = vrot.lane.b32.xlu0 %v3137, 64
    %v3147 = vpop.permute.xlu0 %3146
    %3148 = vrot.lane.b32.xlu0 %v3138, 64
    %v3149 = vpop.permute.xlu0 %3148
    %3150 = vrot.lane.b32.xlu0 %v3139, 64
    %v3151 = vpop.permute.xlu0 %3150
    %v3156 = vmul.f32 %v3090, %v3145
    %v3157 = vmul.f32 %v3105, %v3147
    %v3158 = vmul.f32 %v3120, %v3149
    %v3159 = vmul.f32 %v3135, %v3151
    %3164 = vrot.lane.b32.xlu0 %v3156, 64
    %v3165 = vpop.permute.xlu0 %3164
    %3166 = vrot.lane.b32.xlu0 %v3157, 64
    %v3167 = vpop.permute.xlu0 %3166
    %3168 = vrot.lane.b32.xlu0 %v3158, 64
    %v3169 = vpop.permute.xlu0 %3168
    %3170 = vrot.lane.b32.xlu0 %v3159, 64
    %v3171 = vpop.permute.xlu0 %3170
    %v3176 = vadd.f32 %v3019, %v3165
    %v3177 = vadd.f32 %v3020, %v3167
    %v3178 = vadd.f32 %v3021, %v3169
    %v3179 = vadd.f32 %v3022, %v3171
    %v3180 = vtanh.pop %v3176
    %v3181 = vtanh.pop %v3177
    %v3182 = vtanh.pop %v3178
    %v3183 = vtanh.pop %v3179
    %v3184 = vsub.f32 %v2995, %v3180
    %v3185 = vsub.f32 %v2996, %v3181
    %v3186 = vsub.f32 %v2997, %v3182
    %v3187 = vsub.f32 %v2998, %v3183
    %3192 = vrot.lane.b32.xlu0 %v3184, 96
    %v3193 = vpop.permute.xlu0 %3192
    %3194 = vrot.lane.b32.xlu0 %v3185, 96
    %v3195 = vpop.permute.xlu0 %3194
    %3196 = vrot.lane.b32.xlu0 %v3186, 96
    %v3197 = vpop.permute.xlu0 %3196
    %3198 = vrot.lane.b32.xlu0 %v3187, 96
    %v3199 = vpop.permute.xlu0 %3198
    %v3204 = vmul.f32 %v3090, %v3193
    %v3205 = vmul.f32 %v3105, %v3195
    %v3206 = vmul.f32 %v3120, %v3197
    %v3207 = vmul.f32 %v3135, %v3199
    %3212 = vrot.lane.b32.xlu0 %v3204, 32
    %v3213 = vpop.permute.xlu0 %3212
    %3214 = vrot.lane.b32.xlu0 %v3205, 32
    %v3215 = vpop.permute.xlu0 %3214
    %3216 = vrot.lane.b32.xlu0 %v3206, 32
    %v3217 = vpop.permute.xlu0 %3216
    %3218 = vrot.lane.b32.xlu0 %v3207, 32
    %v3219 = vpop.permute.xlu0 %3218
    %v3224 = vadd.f32 %v3180, %v3213
    %v3225 = vadd.f32 %v3181, %v3215
    %v3226 = vadd.f32 %v3182, %v3217
    %v3227 = vadd.f32 %v3183, %v3219
    %3232 = vrot.lane.b32.xlu0 %v3224, 64
    %v3233 = vpop.permute.xlu0 %3232
    %3234 = vrot.lane.b32.xlu0 %v3225, 64
    %v3235 = vpop.permute.xlu0 %3234
    %3236 = vrot.lane.b32.xlu0 %v3226, 64
    %v3237 = vpop.permute.xlu0 %3236
    %3238 = vrot.lane.b32.xlu0 %v3227, 64
    %v3239 = vpop.permute.xlu0 %3238
    %3244 = vst.msk [vmem:[#allocation3 + $0x160] sm:$0xff] %vm490, %v3233
    %3245 = vst.msk [vmem:[#allocation3 + $0x168] sm:$0xff] %vm490, %v3235
    %3246 = vst.msk [vmem:[#allocation3 + $0x170] sm:$0xff] %vm490, %v3237
    %3247 = vst.msk [vmem:[#allocation3 + $0x178] sm:$0xff] %vm490, %v3239
    %v3248 = vld [vmem:[#allocation2 + $0x180] sm:$0xff]
    %v3249 = vld [vmem:[#allocation2 + $0x188] sm:$0xff]
    %v3250 = vld [vmem:[#allocation2 + $0x190] sm:$0xff]
    %v3251 = vld [vmem:[#allocation2 + $0x198] sm:$0xff]
    %v3252 = vpack.c.bf16 %v3225, %v3224
    %v3253 = vpack.c.bf16 %v3227, %v3226
    %3256 = vrot.lane.b32.xlu0 %v3252, 64
    %v3257 = vpop.permute.xlu0 %3256
    %3258 = vrot.lane.b32.xlu0 %v3253, 64
    %v3259 = vpop.permute.xlu0 %3258
    %v3261 = vsel %vm490, %v3257, 0
    %v3264 = vsel %vm490, %v3259, 0
    %3266 = vmatpush.bf16.msra.mxu0 0
    %3267 = vmatpush.bf16.msra.mxu0 0
    %3268 = vmatpush.bf16.msra.mxu0 0
    %3269 = vmatpush.bf16.msra.mxu0 0
    %3270 = vmatpush.bf16.msra.mxu0 0
    %3271 = vmatpush.bf16.msra.mxu0 0
    %3272 = vmatpush.bf16.msra.mxu0 %v478
    %3273 = vmatpush.bf16.msra.mxu0 %v477
    %3274 = vmatmul.bf16.gmra.mxu0 %v3261
    %v3275 = vpop.f32.mrf.mxu0
    %v3276 = vadd.f32 0.0, %v3275
    %v3277 = vpop.f32.mrf.mxu0
    %v3278 = vadd.f32 0.0, %v3277
    %3279 = vmatmul.bf16.gmra.mxu0 %v3264
    %v3280 = vpop.f32.mrf.mxu0
    %v3281 = vadd.f32 0.0, %v3280
    %v3282 = vpop.f32.mrf.mxu0
    %v3283 = vadd.f32 0.0, %v3282
    %3284 = vdwg.mxu0
    %v3285 = vadd.f32 %v3248, %v3276
    %v3286 = vadd.f32 %v3249, %v3278
    %v3287 = vadd.f32 %v3250, %v3281
    %v3288 = vadd.f32 %v3251, %v3283
    %v3289 = vxor.u32 %v3285, 2147483648
    %v3290 = vxor.u32 %v3286, 2147483648
    %v3291 = vxor.u32 %v3287, 2147483648
    %v3292 = vxor.u32 %v3288, 2147483648
    %v3293 = vmul.f32 %v3289, 1.442695
    %v3294 = vpow.pop %v3293
    %v3295 = vmul.f32 %v3290, 1.442695
    %v3296 = vpow.pop %v3295
    %v3297 = vmul.f32 %v3291, 1.442695
    %v3298 = vpow.pop %v3297
    %v3299 = vmul.f32 %v3292, 1.442695
    %v3300 = vpow.pop %v3299
    %v3301 = vadd.f32 %v3294, 1.0
    %v3302 = vadd.f32 %v3296, 1.0
    %v3303 = vadd.f32 %v3298, 1.0
    %v3304 = vadd.f32 %v3300, 1.0
    %v3305 = vrcp.pop %v3301
    %v3306 = vmul.f32 %v3301, %v3305
    %v3307 = vsub.f32 1.0, %v3306
    %v3308 = vmul.f32 %v3305, %v3307
    %v3309 = vadd.f32 %v3305, %v3308
    %vm3310 = vweird.f32 %v3301
    %vm3311 = vweird.f32 %v3305
    %vm3312 = vmor %vm3310, %vm3311
    %v3313 = vsel %vm3312, %v3305, %v3309
    %v3314 = vand.u32 2147483647, %v3301
    %vm3315 = vcmp.eq.f32.partialorder %v3314, 8.507059e+37
    %v3316 = vand.u32 %v3301, 2147483648
    %v3317 = vor.u32 1.1754944e-38, %v3316
    %v3318 = vsel %vm3315, %v3317, %v3313
    %v3319 = vmul.f32 1.0, %v3318
    %v3320 = vrcp.pop %v3302
    %v3321 = vmul.f32 %v3302, %v3320
    %v3322 = vsub.f32 1.0, %v3321
    %v3323 = vmul.f32 %v3320, %v3322
    %v3324 = vadd.f32 %v3320, %v3323
    %vm3325 = vweird.f32 %v3302
    %vm3326 = vweird.f32 %v3320
    %vm3327 = vmor %vm3325, %vm3326
    %v3328 = vsel %vm3327, %v3320, %v3324
    %v3329 = vand.u32 2147483647, %v3302
    %vm3330 = vcmp.eq.f32.partialorder %v3329, 8.507059e+37
    %v3331 = vand.u32 %v3302, 2147483648
    %v3332 = vor.u32 1.1754944e-38, %v3331
    %v3333 = vsel %vm3330, %v3332, %v3328
    %v3334 = vmul.f32 1.0, %v3333
    %v3335 = vrcp.pop %v3303
    %v3336 = vmul.f32 %v3303, %v3335
    %v3337 = vsub.f32 1.0, %v3336
    %v3338 = vmul.f32 %v3335, %v3337
    %v3339 = vadd.f32 %v3335, %v3338
    %vm3340 = vweird.f32 %v3303
    %vm3341 = vweird.f32 %v3335
    %vm3342 = vmor %vm3340, %vm3341
    %v3343 = vsel %vm3342, %v3335, %v3339
    %v3344 = vand.u32 2147483647, %v3303
    %vm3345 = vcmp.eq.f32.partialorder %v3344, 8.507059e+37
    %v3346 = vand.u32 %v3303, 2147483648
    %v3347 = vor.u32 1.1754944e-38, %v3346
    %v3348 = vsel %vm3345, %v3347, %v3343
    %v3349 = vmul.f32 1.0, %v3348
    %v3350 = vrcp.pop %v3304
    %v3351 = vmul.f32 %v3304, %v3350
    %v3352 = vsub.f32 1.0, %v3351
    %v3353 = vmul.f32 %v3350, %v3352
    %v3354 = vadd.f32 %v3350, %v3353
    %vm3355 = vweird.f32 %v3304
    %vm3356 = vweird.f32 %v3350
    %vm3357 = vmor %vm3355, %vm3356
    %v3358 = vsel %vm3357, %v3350, %v3354
    %v3359 = vand.u32 2147483647, %v3304
    %vm3360 = vcmp.eq.f32.partialorder %v3359, 8.507059e+37
    %v3361 = vand.u32 %v3304, 2147483648
    %v3362 = vor.u32 1.1754944e-38, %v3361
    %v3363 = vsel %vm3360, %v3362, %v3358
    %v3364 = vmul.f32 1.0, %v3363
    %v3365 = vadd.f32 %v3276, %v599
    %v3366 = vadd.f32 %v3278, %v599
    %v3367 = vadd.f32 %v3281, %v599
    %v3368 = vadd.f32 %v3283, %v599
    %3373 = vrot.lane.b32.xlu0 %v3365, 64
    %v3374 = vpop.permute.xlu0 %3373
    %3375 = vrot.lane.b32.xlu0 %v3366, 64
    %v3376 = vpop.permute.xlu0 %3375
    %3377 = vrot.lane.b32.xlu0 %v3367, 64
    %v3378 = vpop.permute.xlu0 %3377
    %3379 = vrot.lane.b32.xlu0 %v3368, 64
    %v3380 = vpop.permute.xlu0 %3379
    %v3385 = vmul.f32 %v3319, %v3374
    %v3386 = vmul.f32 %v3334, %v3376
    %v3387 = vmul.f32 %v3349, %v3378
    %v3388 = vmul.f32 %v3364, %v3380
    %3393 = vrot.lane.b32.xlu0 %v3385, 64
    %v3394 = vpop.permute.xlu0 %3393
    %3395 = vrot.lane.b32.xlu0 %v3386, 64
    %v3396 = vpop.permute.xlu0 %3395
    %3397 = vrot.lane.b32.xlu0 %v3387, 64
    %v3398 = vpop.permute.xlu0 %3397
    %3399 = vrot.lane.b32.xlu0 %v3388, 64
    %v3400 = vpop.permute.xlu0 %3399
    %v3405 = vadd.f32 %v3248, %v3394
    %v3406 = vadd.f32 %v3249, %v3396
    %v3407 = vadd.f32 %v3250, %v3398
    %v3408 = vadd.f32 %v3251, %v3400
    %v3409 = vtanh.pop %v3405
    %v3410 = vtanh.pop %v3406
    %v3411 = vtanh.pop %v3407
    %v3412 = vtanh.pop %v3408
    %v3413 = vsub.f32 %v3224, %v3409
    %v3414 = vsub.f32 %v3225, %v3410
    %v3415 = vsub.f32 %v3226, %v3411
    %v3416 = vsub.f32 %v3227, %v3412
    %3421 = vrot.lane.b32.xlu0 %v3413, 96
    %v3422 = vpop.permute.xlu0 %3421
    %3423 = vrot.lane.b32.xlu0 %v3414, 96
    %v3424 = vpop.permute.xlu0 %3423
    %3425 = vrot.lane.b32.xlu0 %v3415, 96
    %v3426 = vpop.permute.xlu0 %3425
    %3427 = vrot.lane.b32.xlu0 %v3416, 96
    %v3428 = vpop.permute.xlu0 %3427
    %v3433 = vmul.f32 %v3319, %v3422
    %v3434 = vmul.f32 %v3334, %v3424
    %v3435 = vmul.f32 %v3349, %v3426
    %v3436 = vmul.f32 %v3364, %v3428
    %3441 = vrot.lane.b32.xlu0 %v3433, 32
    %v3442 = vpop.permute.xlu0 %3441
    %3443 = vrot.lane.b32.xlu0 %v3434, 32
    %v3444 = vpop.permute.xlu0 %3443
    %3445 = vrot.lane.b32.xlu0 %v3435, 32
    %v3446 = vpop.permute.xlu0 %3445
    %3447 = vrot.lane.b32.xlu0 %v3436, 32
    %v3448 = vpop.permute.xlu0 %3447
    %v3453 = vadd.f32 %v3409, %v3442
    %v3454 = vadd.f32 %v3410, %v3444
    %v3455 = vadd.f32 %v3411, %v3446
    %v3456 = vadd.f32 %v3412, %v3448
    %3461 = vrot.lane.b32.xlu0 %v3453, 64
    %v3462 = vpop.permute.xlu0 %3461
    %3463 = vrot.lane.b32.xlu0 %v3454, 64
    %v3464 = vpop.permute.xlu0 %3463
    %3465 = vrot.lane.b32.xlu0 %v3455, 64
    %v3466 = vpop.permute.xlu0 %3465
    %3467 = vrot.lane.b32.xlu0 %v3456, 64
    %v3468 = vpop.permute.xlu0 %3467
    %3473 = vst.msk [vmem:[#allocation3 + $0x180] sm:$0xff] %vm490, %v3462
    %3474 = vst.msk [vmem:[#allocation3 + $0x188] sm:$0xff] %vm490, %v3464
    %3475 = vst.msk [vmem:[#allocation3 + $0x190] sm:$0xff] %vm490, %v3466
    %3476 = vst.msk [vmem:[#allocation3 + $0x198] sm:$0xff] %vm490, %v3468
    %v3477 = vld [vmem:[#allocation2 + $0x1a0] sm:$0xff]
    %v3478 = vld [vmem:[#allocation2 + $0x1a8] sm:$0xff]
    %v3479 = vld [vmem:[#allocation2 + $0x1b0] sm:$0xff]
    %v3480 = vld [vmem:[#allocation2 + $0x1b8] sm:$0xff]
    %v3481 = vpack.c.bf16 %v3454, %v3453
    %v3482 = vpack.c.bf16 %v3456, %v3455
    %3485 = vrot.lane.b32.xlu0 %v3481, 64
    %v3486 = vpop.permute.xlu0 %3485
    %3487 = vrot.lane.b32.xlu0 %v3482, 64
    %v3488 = vpop.permute.xlu0 %3487
    %v3490 = vsel %vm490, %v3486, 0
    %v3493 = vsel %vm490, %v3488, 0
    %3495 = vmatpush.bf16.msra.mxu0 0
    %3496 = vmatpush.bf16.msra.mxu0 0
    %3497 = vmatpush.bf16.msra.mxu0 0
    %3498 = vmatpush.bf16.msra.mxu0 0
    %3499 = vmatpush.bf16.msra.mxu0 0
    %3500 = vmatpush.bf16.msra.mxu0 0
    %3501 = vmatpush.bf16.msra.mxu0 %v478
    %3502 = vmatpush.bf16.msra.mxu0 %v477
    %3503 = vmatmul.bf16.gmra.mxu0 %v3490
    %v3504 = vpop.f32.mrf.mxu0
    %v3505 = vadd.f32 0.0, %v3504
    %v3506 = vpop.f32.mrf.mxu0
    %v3507 = vadd.f32 0.0, %v3506
    %3508 = vmatmul.bf16.gmra.mxu0 %v3493
    %v3509 = vpop.f32.mrf.mxu0
    %v3510 = vadd.f32 0.0, %v3509
    %v3511 = vpop.f32.mrf.mxu0
    %v3512 = vadd.f32 0.0, %v3511
    %3513 = vdwg.mxu0
    %v3514 = vadd.f32 %v3477, %v3505
    %v3515 = vadd.f32 %v3478, %v3507
    %v3516 = vadd.f32 %v3479, %v3510
    %v3517 = vadd.f32 %v3480, %v3512
    %v3518 = vxor.u32 %v3514, 2147483648
    %v3519 = vxor.u32 %v3515, 2147483648
    %v3520 = vxor.u32 %v3516, 2147483648
    %v3521 = vxor.u32 %v3517, 2147483648
    %v3522 = vmul.f32 %v3518, 1.442695
    %v3523 = vpow.pop %v3522
    %v3524 = vmul.f32 %v3519, 1.442695
    %v3525 = vpow.pop %v3524
    %v3526 = vmul.f32 %v3520, 1.442695
    %v3527 = vpow.pop %v3526
    %v3528 = vmul.f32 %v3521, 1.442695
    %v3529 = vpow.pop %v3528
    %v3530 = vadd.f32 %v3523, 1.0
    %v3531 = vadd.f32 %v3525, 1.0
    %v3532 = vadd.f32 %v3527, 1.0
    %v3533 = vadd.f32 %v3529, 1.0
    %v3534 = vrcp.pop %v3530
    %v3535 = vmul.f32 %v3530, %v3534
    %v3536 = vsub.f32 1.0, %v3535
    %v3537 = vmul.f32 %v3534, %v3536
    %v3538 = vadd.f32 %v3534, %v3537
    %vm3539 = vweird.f32 %v3530
    %vm3540 = vweird.f32 %v3534
    %vm3541 = vmor %vm3539, %vm3540
    %v3542 = vsel %vm3541, %v3534, %v3538
    %v3543 = vand.u32 2147483647, %v3530
    %vm3544 = vcmp.eq.f32.partialorder %v3543, 8.507059e+37
    %v3545 = vand.u32 %v3530, 2147483648
    %v3546 = vor.u32 1.1754944e-38, %v3545
    %v3547 = vsel %vm3544, %v3546, %v3542
    %v3548 = vmul.f32 1.0, %v3547
    %v3549 = vrcp.pop %v3531
    %v3550 = vmul.f32 %v3531, %v3549
    %v3551 = vsub.f32 1.0, %v3550
    %v3552 = vmul.f32 %v3549, %v3551
    %v3553 = vadd.f32 %v3549, %v3552
    %vm3554 = vweird.f32 %v3531
    %vm3555 = vweird.f32 %v3549
    %vm3556 = vmor %vm3554, %vm3555
    %v3557 = vsel %vm3556, %v3549, %v3553
    %v3558 = vand.u32 2147483647, %v3531
    %vm3559 = vcmp.eq.f32.partialorder %v3558, 8.507059e+37
    %v3560 = vand.u32 %v3531, 2147483648
    %v3561 = vor.u32 1.1754944e-38, %v3560
    %v3562 = vsel %vm3559, %v3561, %v3557
    %v3563 = vmul.f32 1.0, %v3562
    %v3564 = vrcp.pop %v3532
    %v3565 = vmul.f32 %v3532, %v3564
    %v3566 = vsub.f32 1.0, %v3565
    %v3567 = vmul.f32 %v3564, %v3566
    %v3568 = vadd.f32 %v3564, %v3567
    %vm3569 = vweird.f32 %v3532
    %vm3570 = vweird.f32 %v3564
    %vm3571 = vmor %vm3569, %vm3570
    %v3572 = vsel %vm3571, %v3564, %v3568
    %v3573 = vand.u32 2147483647, %v3532
    %vm3574 = vcmp.eq.f32.partialorder %v3573, 8.507059e+37
    %v3575 = vand.u32 %v3532, 2147483648
    %v3576 = vor.u32 1.1754944e-38, %v3575
    %v3577 = vsel %vm3574, %v3576, %v3572
    %v3578 = vmul.f32 1.0, %v3577
    %v3579 = vrcp.pop %v3533
    %v3580 = vmul.f32 %v3533, %v3579
    %v3581 = vsub.f32 1.0, %v3580
    %v3582 = vmul.f32 %v3579, %v3581
    %v3583 = vadd.f32 %v3579, %v3582
    %vm3584 = vweird.f32 %v3533
    %vm3585 = vweird.f32 %v3579
    %vm3586 = vmor %vm3584, %vm3585
    %v3587 = vsel %vm3586, %v3579, %v3583
    %v3588 = vand.u32 2147483647, %v3533
    %vm3589 = vcmp.eq.f32.partialorder %v3588, 8.507059e+37
    %v3590 = vand.u32 %v3533, 2147483648
    %v3591 = vor.u32 1.1754944e-38, %v3590
    %v3592 = vsel %vm3589, %v3591, %v3587
    %v3593 = vmul.f32 1.0, %v3592
    %v3594 = vadd.f32 %v3505, %v599
    %v3595 = vadd.f32 %v3507, %v599
    %v3596 = vadd.f32 %v3510, %v599
    %v3597 = vadd.f32 %v3512, %v599
    %3602 = vrot.lane.b32.xlu0 %v3594, 64
    %v3603 = vpop.permute.xlu0 %3602
    %3604 = vrot.lane.b32.xlu0 %v3595, 64
    %v3605 = vpop.permute.xlu0 %3604
    %3606 = vrot.lane.b32.xlu0 %v3596, 64
    %v3607 = vpop.permute.xlu0 %3606
    %3608 = vrot.lane.b32.xlu0 %v3597, 64
    %v3609 = vpop.permute.xlu0 %3608
    %v3614 = vmul.f32 %v3548, %v3603
    %v3615 = vmul.f32 %v3563, %v3605
    %v3616 = vmul.f32 %v3578, %v3607
    %v3617 = vmul.f32 %v3593, %v3609
    %3622 = vrot.lane.b32.xlu0 %v3614, 64
    %v3623 = vpop.permute.xlu0 %3622
    %3624 = vrot.lane.b32.xlu0 %v3615, 64
    %v3625 = vpop.permute.xlu0 %3624
    %3626 = vrot.lane.b32.xlu0 %v3616, 64
    %v3627 = vpop.permute.xlu0 %3626
    %3628 = vrot.lane.b32.xlu0 %v3617, 64
    %v3629 = vpop.permute.xlu0 %3628
    %v3634 = vadd.f32 %v3477, %v3623
    %v3635 = vadd.f32 %v3478, %v3625
    %v3636 = vadd.f32 %v3479, %v3627
    %v3637 = vadd.f32 %v3480, %v3629
    %v3638 = vtanh.pop %v3634
    %v3639 = vtanh.pop %v3635
    %v3640 = vtanh.pop %v3636
    %v3641 = vtanh.pop %v3637
    %v3642 = vsub.f32 %v3453, %v3638
    %v3643 = vsub.f32 %v3454, %v3639
    %v3644 = vsub.f32 %v3455, %v3640
    %v3645 = vsub.f32 %v3456, %v3641
    %3650 = vrot.lane.b32.xlu0 %v3642, 96
    %v3651 = vpop.permute.xlu0 %3650
    %3652 = vrot.lane.b32.xlu0 %v3643, 96
    %v3653 = vpop.permute.xlu0 %3652
    %3654 = vrot.lane.b32.xlu0 %v3644, 96
    %v3655 = vpop.permute.xlu0 %3654
    %3656 = vrot.lane.b32.xlu0 %v3645, 96
    %v3657 = vpop.permute.xlu0 %3656
    %v3662 = vmul.f32 %v3548, %v3651
    %v3663 = vmul.f32 %v3563, %v3653
    %v3664 = vmul.f32 %v3578, %v3655
    %v3665 = vmul.f32 %v3593, %v3657
    %3670 = vrot.lane.b32.xlu0 %v3662, 32
    %v3671 = vpop.permute.xlu0 %3670
    %3672 = vrot.lane.b32.xlu0 %v3663, 32
    %v3673 = vpop.permute.xlu0 %3672
    %3674 = vrot.lane.b32.xlu0 %v3664, 32
    %v3675 = vpop.permute.xlu0 %3674
    %3676 = vrot.lane.b32.xlu0 %v3665, 32
    %v3677 = vpop.permute.xlu0 %3676
    %v3682 = vadd.f32 %v3638, %v3671
    %v3683 = vadd.f32 %v3639, %v3673
    %v3684 = vadd.f32 %v3640, %v3675
    %v3685 = vadd.f32 %v3641, %v3677
    %3690 = vrot.lane.b32.xlu0 %v3682, 64
    %v3691 = vpop.permute.xlu0 %3690
    %3692 = vrot.lane.b32.xlu0 %v3683, 64
    %v3693 = vpop.permute.xlu0 %3692
    %3694 = vrot.lane.b32.xlu0 %v3684, 64
    %v3695 = vpop.permute.xlu0 %3694
    %3696 = vrot.lane.b32.xlu0 %v3685, 64
    %v3697 = vpop.permute.xlu0 %3696
    %3702 = vst.msk [vmem:[#allocation3 + $0x1a0] sm:$0xff] %vm490, %v3691
    %3703 = vst.msk [vmem:[#allocation3 + $0x1a8] sm:$0xff] %vm490, %v3693
    %3704 = vst.msk [vmem:[#allocation3 + $0x1b0] sm:$0xff] %vm490, %v3695
    %3705 = vst.msk [vmem:[#allocation3 + $0x1b8] sm:$0xff] %vm490, %v3697
    %v3706 = vld [vmem:[#allocation2 + $0x1c0] sm:$0xff]
    %v3707 = vld [vmem:[#allocation2 + $0x1c8] sm:$0xff]
    %v3708 = vld [vmem:[#allocation2 + $0x1d0] sm:$0xff]
    %v3709 = vld [vmem:[#allocation2 + $0x1d8] sm:$0xff]
    %v3710 = vpack.c.bf16 %v3683, %v3682
    %v3711 = vpack.c.bf16 %v3685, %v3684
    %3714 = vrot.lane.b32.xlu0 %v3710, 64
    %v3715 = vpop.permute.xlu0 %3714
    %3716 = vrot.lane.b32.xlu0 %v3711, 64
    %v3717 = vpop.permute.xlu0 %3716
    %v3719 = vsel %vm490, %v3715, 0
    %v3722 = vsel %vm490, %v3717, 0
    %3724 = vmatpush.bf16.msra.mxu0 0
    %3725 = vmatpush.bf16.msra.mxu0 0
    %3726 = vmatpush.bf16.msra.mxu0 0
    %3727 = vmatpush.bf16.msra.mxu0 0
    %3728 = vmatpush.bf16.msra.mxu0 0
    %3729 = vmatpush.bf16.msra.mxu0 0
    %3730 = vmatpush.bf16.msra.mxu0 %v478
    %3731 = vmatpush.bf16.msra.mxu0 %v477
    %3732 = vmatmul.bf16.gmra.mxu0 %v3719
    %v3733 = vpop.f32.mrf.mxu0
    %v3734 = vadd.f32 0.0, %v3733
    %v3735 = vpop.f32.mrf.mxu0
    %v3736 = vadd.f32 0.0, %v3735
    %3737 = vmatmul.bf16.gmra.mxu0 %v3722
    %v3738 = vpop.f32.mrf.mxu0
    %v3739 = vadd.f32 0.0, %v3738
    %v3740 = vpop.f32.mrf.mxu0
    %v3741 = vadd.f32 0.0, %v3740
    %3742 = vdwg.mxu0
    %v3743 = vadd.f32 %v3706, %v3734
    %v3744 = vadd.f32 %v3707, %v3736
    %v3745 = vadd.f32 %v3708, %v3739
    %v3746 = vadd.f32 %v3709, %v3741
    %v3747 = vxor.u32 %v3743, 2147483648
    %v3748 = vxor.u32 %v3744, 2147483648
    %v3749 = vxor.u32 %v3745, 2147483648
    %v3750 = vxor.u32 %v3746, 2147483648
    %v3751 = vmul.f32 %v3747, 1.442695
    %v3752 = vpow.pop %v3751
    %v3753 = vmul.f32 %v3748, 1.442695
    %v3754 = vpow.pop %v3753
    %v3755 = vmul.f32 %v3749, 1.442695
    %v3756 = vpow.pop %v3755
    %v3757 = vmul.f32 %v3750, 1.442695
    %v3758 = vpow.pop %v3757
    %v3759 = vadd.f32 %v3752, 1.0
    %v3760 = vadd.f32 %v3754, 1.0
    %v3761 = vadd.f32 %v3756, 1.0
    %v3762 = vadd.f32 %v3758, 1.0
    %v3763 = vrcp.pop %v3759
    %v3764 = vmul.f32 %v3759, %v3763
    %v3765 = vsub.f32 1.0, %v3764
    %v3766 = vmul.f32 %v3763, %v3765
    %v3767 = vadd.f32 %v3763, %v3766
    %vm3768 = vweird.f32 %v3759
    %vm3769 = vweird.f32 %v3763
    %vm3770 = vmor %vm3768, %vm3769
    %v3771 = vsel %vm3770, %v3763, %v3767
    %v3772 = vand.u32 2147483647, %v3759
    %vm3773 = vcmp.eq.f32.partialorder %v3772, 8.507059e+37
    %v3774 = vand.u32 %v3759, 2147483648
    %v3775 = vor.u32 1.1754944e-38, %v3774
    %v3776 = vsel %vm3773, %v3775, %v3771
    %v3777 = vmul.f32 1.0, %v3776
    %v3778 = vrcp.pop %v3760
    %v3779 = vmul.f32 %v3760, %v3778
    %v3780 = vsub.f32 1.0, %v3779
    %v3781 = vmul.f32 %v3778, %v3780
    %v3782 = vadd.f32 %v3778, %v3781
    %vm3783 = vweird.f32 %v3760
    %vm3784 = vweird.f32 %v3778
    %vm3785 = vmor %vm3783, %vm3784
    %v3786 = vsel %vm3785, %v3778, %v3782
    %v3787 = vand.u32 2147483647, %v3760
    %vm3788 = vcmp.eq.f32.partialorder %v3787, 8.507059e+37
    %v3789 = vand.u32 %v3760, 2147483648
    %v3790 = vor.u32 1.1754944e-38, %v3789
    %v3791 = vsel %vm3788, %v3790, %v3786
    %v3792 = vmul.f32 1.0, %v3791
    %v3793 = vrcp.pop %v3761
    %v3794 = vmul.f32 %v3761, %v3793
    %v3795 = vsub.f32 1.0, %v3794
    %v3796 = vmul.f32 %v3793, %v3795
    %v3797 = vadd.f32 %v3793, %v3796
    %vm3798 = vweird.f32 %v3761
    %vm3799 = vweird.f32 %v3793
    %vm3800 = vmor %vm3798, %vm3799
    %v3801 = vsel %vm3800, %v3793, %v3797
    %v3802 = vand.u32 2147483647, %v3761
    %vm3803 = vcmp.eq.f32.partialorder %v3802, 8.507059e+37
    %v3804 = vand.u32 %v3761, 2147483648
    %v3805 = vor.u32 1.1754944e-38, %v3804
    %v3806 = vsel %vm3803, %v3805, %v3801
    %v3807 = vmul.f32 1.0, %v3806
    %v3808 = vrcp.pop %v3762
    %v3809 = vmul.f32 %v3762, %v3808
    %v3810 = vsub.f32 1.0, %v3809
    %v3811 = vmul.f32 %v3808, %v3810
    %v3812 = vadd.f32 %v3808, %v3811
    %vm3813 = vweird.f32 %v3762
    %vm3814 = vweird.f32 %v3808
    %vm3815 = vmor %vm3813, %vm3814
    %v3816 = vsel %vm3815, %v3808, %v3812
    %v3817 = vand.u32 2147483647, %v3762
    %vm3818 = vcmp.eq.f32.partialorder %v3817, 8.507059e+37
    %v3819 = vand.u32 %v3762, 2147483648
    %v3820 = vor.u32 1.1754944e-38, %v3819
    %v3821 = vsel %vm3818, %v3820, %v3816
    %v3822 = vmul.f32 1.0, %v3821
    %v3823 = vadd.f32 %v3734, %v599
    %v3824 = vadd.f32 %v3736, %v599
    %v3825 = vadd.f32 %v3739, %v599
    %v3826 = vadd.f32 %v3741, %v599
    %3831 = vrot.lane.b32.xlu0 %v3823, 64
    %v3832 = vpop.permute.xlu0 %3831
    %3833 = vrot.lane.b32.xlu0 %v3824, 64
    %v3834 = vpop.permute.xlu0 %3833
    %3835 = vrot.lane.b32.xlu0 %v3825, 64
    %v3836 = vpop.permute.xlu0 %3835
    %3837 = vrot.lane.b32.xlu0 %v3826, 64
    %v3838 = vpop.permute.xlu0 %3837
    %v3843 = vmul.f32 %v3777, %v3832
    %v3844 = vmul.f32 %v3792, %v3834
    %v3845 = vmul.f32 %v3807, %v3836
    %v3846 = vmul.f32 %v3822, %v3838
    %3851 = vrot.lane.b32.xlu0 %v3843, 64
    %v3852 = vpop.permute.xlu0 %3851
    %3853 = vrot.lane.b32.xlu0 %v3844, 64
    %v3854 = vpop.permute.xlu0 %3853
    %3855 = vrot.lane.b32.xlu0 %v3845, 64
    %v3856 = vpop.permute.xlu0 %3855
    %3857 = vrot.lane.b32.xlu0 %v3846, 64
    %v3858 = vpop.permute.xlu0 %3857
    %v3863 = vadd.f32 %v3706, %v3852
    %v3864 = vadd.f32 %v3707, %v3854
    %v3865 = vadd.f32 %v3708, %v3856
    %v3866 = vadd.f32 %v3709, %v3858
    %v3867 = vtanh.pop %v3863
    %v3868 = vtanh.pop %v3864
    %v3869 = vtanh.pop %v3865
    %v3870 = vtanh.pop %v3866
    %v3871 = vsub.f32 %v3682, %v3867
    %v3872 = vsub.f32 %v3683, %v3868
    %v3873 = vsub.f32 %v3684, %v3869
    %v3874 = vsub.f32 %v3685, %v3870
    %3879 = vrot.lane.b32.xlu0 %v3871, 96
    %v3880 = vpop.permute.xlu0 %3879
    %3881 = vrot.lane.b32.xlu0 %v3872, 96
    %v3882 = vpop.permute.xlu0 %3881
    %3883 = vrot.lane.b32.xlu0 %v3873, 96
    %v3884 = vpop.permute.xlu0 %3883
    %3885 = vrot.lane.b32.xlu0 %v3874, 96
    %v3886 = vpop.permute.xlu0 %3885
    %v3891 = vmul.f32 %v3777, %v3880
    %v3892 = vmul.f32 %v3792, %v3882
    %v3893 = vmul.f32 %v3807, %v3884
    %v3894 = vmul.f32 %v3822, %v3886
    %3899 = vrot.lane.b32.xlu0 %v3891, 32
    %v3900 = vpop.permute.xlu0 %3899
    %3901 = vrot.lane.b32.xlu0 %v3892, 32
    %v3902 = vpop.permute.xlu0 %3901
    %3903 = vrot.lane.b32.xlu0 %v3893, 32
    %v3904 = vpop.permute.xlu0 %3903
    %3905 = vrot.lane.b32.xlu0 %v3894, 32
    %v3906 = vpop.permute.xlu0 %3905
    %v3911 = vadd.f32 %v3867, %v3900
    %v3912 = vadd.f32 %v3868, %v3902
    %v3913 = vadd.f32 %v3869, %v3904
    %v3914 = vadd.f32 %v3870, %v3906
    %3919 = vrot.lane.b32.xlu0 %v3911, 64
    %v3920 = vpop.permute.xlu0 %3919
    %3921 = vrot.lane.b32.xlu0 %v3912, 64
    %v3922 = vpop.permute.xlu0 %3921
    %3923 = vrot.lane.b32.xlu0 %v3913, 64
    %v3924 = vpop.permute.xlu0 %3923
    %3925 = vrot.lane.b32.xlu0 %v3914, 64
    %v3926 = vpop.permute.xlu0 %3925
    %3931 = vst.msk [vmem:[#allocation3 + $0x1c0] sm:$0xff] %vm490, %v3920
    %3932 = vst.msk [vmem:[#allocation3 + $0x1c8] sm:$0xff] %vm490, %v3922
    %3933 = vst.msk [vmem:[#allocation3 + $0x1d0] sm:$0xff] %vm490, %v3924
    %3934 = vst.msk [vmem:[#allocation3 + $0x1d8] sm:$0xff] %vm490, %v3926
    %v3935 = vld [vmem:[#allocation2 + $0x1e0] sm:$0xff]
    %v3936 = vld [vmem:[#allocation2 + $0x1e8] sm:$0xff]
    %v3937 = vld [vmem:[#allocation2 + $0x1f0] sm:$0xff]
    %v3938 = vld [vmem:[#allocation2 + $0x1f8] sm:$0xff]
    %v3939 = vpack.c.bf16 %v3912, %v3911
    %v3940 = vpack.c.bf16 %v3914, %v3913
    %3943 = vrot.lane.b32.xlu0 %v3939, 64
    %v3944 = vpop.permute.xlu0 %3943
    %3945 = vrot.lane.b32.xlu0 %v3940, 64
    %v3946 = vpop.permute.xlu0 %3945
    %v3948 = vsel %vm490, %v3944, 0
    %v3951 = vsel %vm490, %v3946, 0
    %3953 = vmatpush.bf16.msra.mxu0 0
    %3954 = vmatpush.bf16.msra.mxu0 0
    %3955 = vmatpush.bf16.msra.mxu0 0
    %3956 = vmatpush.bf16.msra.mxu0 0
    %3957 = vmatpush.bf16.msra.mxu0 0
    %3958 = vmatpush.bf16.msra.mxu0 0
    %3959 = vmatpush.bf16.msra.mxu0 %v478
    %3960 = vmatpush.bf16.msra.mxu0 %v477
    %3961 = vmatmul.bf16.gmra.mxu0 %v3948
    %v3962 = vpop.f32.mrf.mxu0
    %v3963 = vadd.f32 0.0, %v3962
    %v3964 = vpop.f32.mrf.mxu0
    %v3965 = vadd.f32 0.0, %v3964
    %3966 = vmatmul.bf16.gmra.mxu0 %v3951
    %v3967 = vpop.f32.mrf.mxu0
    %v3968 = vadd.f32 0.0, %v3967
    %v3969 = vpop.f32.mrf.mxu0
    %v3970 = vadd.f32 0.0, %v3969
    %3971 = vdwg.mxu0
    %v3972 = vadd.f32 %v3935, %v3963
    %v3973 = vadd.f32 %v3936, %v3965
    %v3974 = vadd.f32 %v3937, %v3968
    %v3975 = vadd.f32 %v3938, %v3970
    %v3976 = vxor.u32 %v3972, 2147483648
    %v3977 = vxor.u32 %v3973, 2147483648
    %v3978 = vxor.u32 %v3974, 2147483648
    %v3979 = vxor.u32 %v3975, 2147483648
    %v3980 = vmul.f32 %v3976, 1.442695
    %v3981 = vpow.pop %v3980
    %v3982 = vmul.f32 %v3977, 1.442695
    %v3983 = vpow.pop %v3982
    %v3984 = vmul.f32 %v3978, 1.442695
    %v3985 = vpow.pop %v3984
    %v3986 = vmul.f32 %v3979, 1.442695
    %v3987 = vpow.pop %v3986
    %v3988 = vadd.f32 %v3981, 1.0
    %v3989 = vadd.f32 %v3983, 1.0
    %v3990 = vadd.f32 %v3985, 1.0
    %v3991 = vadd.f32 %v3987, 1.0
    %v3992 = vrcp.pop %v3988
    %v3993 = vmul.f32 %v3988, %v3992
    %v3994 = vsub.f32 1.0, %v3993
    %v3995 = vmul.f32 %v3992, %v3994
    %v3996 = vadd.f32 %v3992, %v3995
    %vm3997 = vweird.f32 %v3988
    %vm3998 = vweird.f32 %v3992
    %vm3999 = vmor %vm3997, %vm3998
    %v4000 = vsel %vm3999, %v3992, %v3996
    %v4001 = vand.u32 2147483647, %v3988
    %vm4002 = vcmp.eq.f32.partialorder %v4001, 8.507059e+37
    %v4003 = vand.u32 %v3988, 2147483648
    %v4004 = vor.u32 1.1754944e-38, %v4003
    %v4005 = vsel %vm4002, %v4004, %v4000
    %v4006 = vmul.f32 1.0, %v4005
    %v4007 = vrcp.pop %v3989
    %v4008 = vmul.f32 %v3989, %v4007
    %v4009 = vsub.f32 1.0, %v4008
    %v4010 = vmul.f32 %v4007, %v4009
    %v4011 = vadd.f32 %v4007, %v4010
    %vm4012 = vweird.f32 %v3989
    %vm4013 = vweird.f32 %v4007
    %vm4014 = vmor %vm4012, %vm4013
    %v4015 = vsel %vm4014, %v4007, %v4011
    %v4016 = vand.u32 2147483647, %v3989
    %vm4017 = vcmp.eq.f32.partialorder %v4016, 8.507059e+37
    %v4018 = vand.u32 %v3989, 2147483648
    %v4019 = vor.u32 1.1754944e-38, %v4018
    %v4020 = vsel %vm4017, %v4019, %v4015
    %v4021 = vmul.f32 1.0, %v4020
    %v4022 = vrcp.pop %v3990
    %v4023 = vmul.f32 %v3990, %v4022
    %v4024 = vsub.f32 1.0, %v4023
    %v4025 = vmul.f32 %v4022, %v4024
    %v4026 = vadd.f32 %v4022, %v4025
    %vm4027 = vweird.f32 %v3990
    %vm4028 = vweird.f32 %v4022
    %vm4029 = vmor %vm4027, %vm4028
    %v4030 = vsel %vm4029, %v4022, %v4026
    %v4031 = vand.u32 2147483647, %v3990
    %vm4032 = vcmp.eq.f32.partialorder %v4031, 8.507059e+37
    %v4033 = vand.u32 %v3990, 2147483648
    %v4034 = vor.u32 1.1754944e-38, %v4033
    %v4035 = vsel %vm4032, %v4034, %v4030
    %v4036 = vmul.f32 1.0, %v4035
    %v4037 = vrcp.pop %v3991
    %v4038 = vmul.f32 %v3991, %v4037
    %v4039 = vsub.f32 1.0, %v4038
    %v4040 = vmul.f32 %v4037, %v4039
    %v4041 = vadd.f32 %v4037, %v4040
    %vm4042 = vweird.f32 %v3991
    %vm4043 = vweird.f32 %v4037
    %vm4044 = vmor %vm4042, %vm4043
    %v4045 = vsel %vm4044, %v4037, %v4041
    %v4046 = vand.u32 2147483647, %v3991
    %vm4047 = vcmp.eq.f32.partialorder %v4046, 8.507059e+37
    %v4048 = vand.u32 %v3991, 2147483648
    %v4049 = vor.u32 1.1754944e-38, %v4048
    %v4050 = vsel %vm4047, %v4049, %v4045
    %v4051 = vmul.f32 1.0, %v4050
    %v4052 = vadd.f32 %v3963, %v599
    %v4053 = vadd.f32 %v3965, %v599
    %v4054 = vadd.f32 %v3968, %v599
    %v4055 = vadd.f32 %v3970, %v599
    %4060 = vrot.lane.b32.xlu0 %v4052, 64
    %v4061 = vpop.permute.xlu0 %4060
    %4062 = vrot.lane.b32.xlu0 %v4053, 64
    %v4063 = vpop.permute.xlu0 %4062
    %4064 = vrot.lane.b32.xlu0 %v4054, 64
    %v4065 = vpop.permute.xlu0 %4064
    %4066 = vrot.lane.b32.xlu0 %v4055, 64
    %v4067 = vpop.permute.xlu0 %4066
    %v4072 = vmul.f32 %v4006, %v4061
    %v4073 = vmul.f32 %v4021, %v4063
    %v4074 = vmul.f32 %v4036, %v4065
    %v4075 = vmul.f32 %v4051, %v4067
    %4080 = vrot.lane.b32.xlu0 %v4072, 64
    %v4081 = vpop.permute.xlu0 %4080
    %4082 = vrot.lane.b32.xlu0 %v4073, 64
    %v4083 = vpop.permute.xlu0 %4082
    %4084 = vrot.lane.b32.xlu0 %v4074, 64
    %v4085 = vpop.permute.xlu0 %4084
    %4086 = vrot.lane.b32.xlu0 %v4075, 64
    %v4087 = vpop.permute.xlu0 %4086
    %v4092 = vadd.f32 %v3935, %v4081
    %v4093 = vadd.f32 %v3936, %v4083
    %v4094 = vadd.f32 %v3937, %v4085
    %v4095 = vadd.f32 %v3938, %v4087
    %v4096 = vtanh.pop %v4092
    %v4097 = vtanh.pop %v4093
    %v4098 = vtanh.pop %v4094
    %v4099 = vtanh.pop %v4095
    %v4100 = vsub.f32 %v3911, %v4096
    %v4101 = vsub.f32 %v3912, %v4097
    %v4102 = vsub.f32 %v3913, %v4098
    %v4103 = vsub.f32 %v3914, %v4099
    %4108 = vrot.lane.b32.xlu0 %v4100, 96
    %v4109 = vpop.permute.xlu0 %4108
    %4110 = vrot.lane.b32.xlu0 %v4101, 96
    %v4111 = vpop.permute.xlu0 %4110
    %4112 = vrot.lane.b32.xlu0 %v4102, 96
    %v4113 = vpop.permute.xlu0 %4112
    %4114 = vrot.lane.b32.xlu0 %v4103, 96
    %v4115 = vpop.permute.xlu0 %4114
    %v4120 = vmul.f32 %v4006, %v4109
    %v4121 = vmul.f32 %v4021, %v4111
    %v4122 = vmul.f32 %v4036, %v4113
    %v4123 = vmul.f32 %v4051, %v4115
    %4128 = vrot.lane.b32.xlu0 %v4120, 32
    %v4129 = vpop.permute.xlu0 %4128
    %4130 = vrot.lane.b32.xlu0 %v4121, 32
    %v4131 = vpop.permute.xlu0 %4130
    %4132 = vrot.lane.b32.xlu0 %v4122, 32
    %v4133 = vpop.permute.xlu0 %4132
    %4134 = vrot.lane.b32.xlu0 %v4123, 32
    %v4135 = vpop.permute.xlu0 %4134
    %v4140 = vadd.f32 %v4096, %v4129
    %v4141 = vadd.f32 %v4097, %v4131
    %v4142 = vadd.f32 %v4098, %v4133
    %v4143 = vadd.f32 %v4099, %v4135
    %4148 = vrot.lane.b32.xlu0 %v4140, 64
    %v4149 = vpop.permute.xlu0 %4148
    %4150 = vrot.lane.b32.xlu0 %v4141, 64
    %v4151 = vpop.permute.xlu0 %4150
    %4152 = vrot.lane.b32.xlu0 %v4142, 64
    %v4153 = vpop.permute.xlu0 %4152
    %4154 = vrot.lane.b32.xlu0 %v4143, 64
    %v4155 = vpop.permute.xlu0 %4154
    %4160 = vst.msk [vmem:[#allocation3 + $0x1e0] sm:$0xff] %vm490, %v4149
    %4161 = vst.msk [vmem:[#allocation3 + $0x1e8] sm:$0xff] %vm490, %v4151
    %4162 = vst.msk [vmem:[#allocation3 + $0x1f0] sm:$0xff] %vm490, %v4153
    %4163 = vst.msk [vmem:[#allocation3 + $0x1f8] sm:$0xff] %vm490, %v4155
    %4164 = vst.msk [vmem:[#allocation4] sm:$0xff] %vm490, %v4149
    %4165 = vst.msk [vmem:[#allocation4 + $0x8] sm:$0xff] %vm490, %v4151
    %4166 = vst.msk [vmem:[#allocation4 + $0x10] sm:$0xff] %vm490, %v4153
    %4167 = vst.msk [vmem:[#allocation4 + $0x18] sm:$0xff] %vm490, %v4155
    %v4168 = vld [vmem:[#allocation3] sm:$0xff]
    %v4169 = vld [vmem:[#allocation3 + $0x8] sm:$0xff]
    %v4170 = vld [vmem:[#allocation3 + $0x10] sm:$0xff]
    %v4171 = vld [vmem:[#allocation3 + $0x18] sm:$0xff]
    %v4172 = vld [vmem:[#allocation3 + $0x20] sm:$0xff]
    %v4173 = vld [vmem:[#allocation3 + $0x28] sm:$0xff]
    %v4174 = vld [vmem:[#allocation3 + $0x30] sm:$0xff]
    %v4175 = vld [vmem:[#allocation3 + $0x38] sm:$0xff]
    %v4176 = vld [vmem:[#allocation3 + $0x40] sm:$0xff]
    %v4177 = vld [vmem:[#allocation3 + $0x48] sm:$0xff]
    %v4178 = vld [vmem:[#allocation3 + $0x50] sm:$0xff]
    %v4179 = vld [vmem:[#allocation3 + $0x58] sm:$0xff]
    %v4180 = vld [vmem:[#allocation3 + $0x60] sm:$0xff]
    %v4181 = vld [vmem:[#allocation3 + $0x68] sm:$0xff]
    %v4182 = vld [vmem:[#allocation3 + $0x70] sm:$0xff]
    %v4183 = vld [vmem:[#allocation3 + $0x78] sm:$0xff]
    %v4184 = vld [vmem:[#allocation3 + $0x80] sm:$0xff]
    %v4185 = vld [vmem:[#allocation3 + $0x88] sm:$0xff]
    %v4186 = vld [vmem:[#allocation3 + $0x90] sm:$0xff]
    %v4187 = vld [vmem:[#allocation3 + $0x98] sm:$0xff]
    %v4188 = vld [vmem:[#allocation3 + $0xa0] sm:$0xff]
    %v4189 = vld [vmem:[#allocation3 + $0xa8] sm:$0xff]
    %v4190 = vld [vmem:[#allocation3 + $0xb0] sm:$0xff]
    %v4191 = vld [vmem:[#allocation3 + $0xb8] sm:$0xff]
    %v4192 = vld [vmem:[#allocation3 + $0xc0] sm:$0xff]
    %v4193 = vld [vmem:[#allocation3 + $0xc8] sm:$0xff]
    %v4194 = vld [vmem:[#allocation3 + $0xd0] sm:$0xff]
    %v4195 = vld [vmem:[#allocation3 + $0xd8] sm:$0xff]
    %v4196 = vld [vmem:[#allocation3 + $0xe0] sm:$0xff]
    %v4197 = vld [vmem:[#allocation3 + $0xe8] sm:$0xff]
    %v4198 = vld [vmem:[#allocation3 + $0xf0] sm:$0xff]
    %v4199 = vld [vmem:[#allocation3 + $0xf8] sm:$0xff]
    %v4200 = vld [vmem:[#allocation3 + $0x100] sm:$0xff]
    %v4201 = vld [vmem:[#allocation3 + $0x108] sm:$0xff]
    %v4202 = vld [vmem:[#allocation3 + $0x110] sm:$0xff]
    %v4203 = vld [vmem:[#allocation3 + $0x118] sm:$0xff]
    %v4204 = vld [vmem:[#allocation3 + $0x120] sm:$0xff]
    %v4205 = vld [vmem:[#allocation3 + $0x128] sm:$0xff]
    %v4206 = vld [vmem:[#allocation3 + $0x130] sm:$0xff]
    %v4207 = vld [vmem:[#allocation3 + $0x138] sm:$0xff]
    %v4208 = vld [vmem:[#allocation3 + $0x140] sm:$0xff]
    %v4209 = vld [vmem:[#allocation3 + $0x148] sm:$0xff]
    %v4210 = vld [vmem:[#allocation3 + $0x150] sm:$0xff]
    %v4211 = vld [vmem:[#allocation3 + $0x158] sm:$0xff]
    %v4212 = vld [vmem:[#allocation3 + $0x160] sm:$0xff]
    %v4213 = vld [vmem:[#allocation3 + $0x168] sm:$0xff]
    %v4214 = vld [vmem:[#allocation3 + $0x170] sm:$0xff]
    %v4215 = vld [vmem:[#allocation3 + $0x178] sm:$0xff]
    %v4216 = vld [vmem:[#allocation3 + $0x180] sm:$0xff]
    %v4217 = vld [vmem:[#allocation3 + $0x188] sm:$0xff]
    %v4218 = vld [vmem:[#allocation3 + $0x190] sm:$0xff]
    %v4219 = vld [vmem:[#allocation3 + $0x198] sm:$0xff]
    %v4220 = vld [vmem:[#allocation3 + $0x1a0] sm:$0xff]
    %v4221 = vld [vmem:[#allocation3 + $0x1a8] sm:$0xff]
    %v4222 = vld [vmem:[#allocation3 + $0x1b0] sm:$0xff]
    %v4223 = vld [vmem:[#allocation3 + $0x1b8] sm:$0xff]
    %v4224 = vld [vmem:[#allocation3 + $0x1c0] sm:$0xff]
    %v4225 = vld [vmem:[#allocation3 + $0x1c8] sm:$0xff]
    %v4226 = vld [vmem:[#allocation3 + $0x1d0] sm:$0xff]
    %v4227 = vld [vmem:[#allocation3 + $0x1d8] sm:$0xff]
    %v4228 = vld [vmem:[#allocation3 + $0x1e0] sm:$0xff]
    %v4229 = vld [vmem:[#allocation3 + $0x1e8] sm:$0xff]
    %v4230 = vld [vmem:[#allocation3 + $0x1f0] sm:$0xff]
    %v4231 = vld [vmem:[#allocation3 + $0x1f8] sm:$0xff]
    %v4232 = vpack.c.bf16 %v4169, %v4168
    %v4233 = vpack.c.bf16 %v4171, %v4170
    %v4234 = vpack.c.bf16 %v4173, %v4172
    %v4235 = vpack.c.bf16 %v4175, %v4174
    %v4236 = vpack.c.bf16 %v4177, %v4176
    %v4237 = vpack.c.bf16 %v4179, %v4178
    %v4238 = vpack.c.bf16 %v4181, %v4180
    %v4239 = vpack.c.bf16 %v4183, %v4182
    %v4240 = vpack.c.bf16 %v4185, %v4184
    %v4241 = vpack.c.bf16 %v4187, %v4186
    %v4242 = vpack.c.bf16 %v4189, %v4188
    %v4243 = vpack.c.bf16 %v4191, %v4190
    %v4244 = vpack.c.bf16 %v4193, %v4192
    %v4245 = vpack.c.bf16 %v4195, %v4194
    %v4246 = vpack.c.bf16 %v4197, %v4196
    %v4247 = vpack.c.bf16 %v4199, %v4198
    %v4248 = vpack.c.bf16 %v4201, %v4200
    %v4249 = vpack.c.bf16 %v4203, %v4202
    %v4250 = vpack.c.bf16 %v4205, %v4204
    %v4251 = vpack.c.bf16 %v4207, %v4206
    %v4252 = vpack.c.bf16 %v4209, %v4208
    %v4253 = vpack.c.bf16 %v4211, %v4210
    %v4254 = vpack.c.bf16 %v4213, %v4212
    %v4255 = vpack.c.bf16 %v4215, %v4214
    %v4256 = vpack.c.bf16 %v4217, %v4216
    %v4257 = vpack.c.bf16 %v4219, %v4218
    %v4258 = vpack.c.bf16 %v4221, %v4220
    %v4259 = vpack.c.bf16 %v4223, %v4222
    %v4260 = vpack.c.bf16 %v4225, %v4224
    %v4261 = vpack.c.bf16 %v4227, %v4226
    %v4262 = vpack.c.bf16 %v4229, %v4228
    %v4263 = vpack.c.bf16 %v4231, %v4230
    %v4264 = vld [vmem:[%s6] sm:$0xff]
    %v4265 = vpack.c.bf16 %v4264, %v4264
    %v4267 = vsel %vm490, %v4265, 0
    %v4270 = vsel %vm490, %v4232, 0
    %v4273 = vsel %vm490, %v4233, 0
    %v4276 = vsel %vm490, %v4234, 0
    %v4279 = vsel %vm490, %v4235, 0
    %v4282 = vsel %vm490, %v4236, 0
    %v4285 = vsel %vm490, %v4237, 0
    %v4288 = vsel %vm490, %v4238, 0
    %v4291 = vsel %vm490, %v4239, 0
    %v4294 = vsel %vm490, %v4240, 0
    %v4297 = vsel %vm490, %v4241, 0
    %v4300 = vsel %vm490, %v4242, 0
    %v4303 = vsel %vm490, %v4243, 0
    %v4306 = vsel %vm490, %v4244, 0
    %v4309 = vsel %vm490, %v4245, 0
    %v4312 = vsel %vm490, %v4246, 0
    %v4315 = vsel %vm490, %v4247, 0
    %v4318 = vsel %vm490, %v4248, 0
    %v4321 = vsel %vm490, %v4249, 0
    %v4324 = vsel %vm490, %v4250, 0
    %v4327 = vsel %vm490, %v4251, 0
    %v4330 = vsel %vm490, %v4252, 0
    %v4333 = vsel %vm490, %v4253, 0
    %v4336 = vsel %vm490, %v4254, 0
    %v4339 = vsel %vm490, %v4255, 0
    %v4342 = vsel %vm490, %v4256, 0
    %v4345 = vsel %vm490, %v4257, 0
    %v4348 = vsel %vm490, %v4258, 0
    %v4351 = vsel %vm490, %v4259, 0
    %v4354 = vsel %vm490, %v4260, 0
    %v4357 = vsel %vm490, %v4261, 0
    %v4360 = vsel %vm490, %v4262, 0
    %v4363 = vsel %vm490, %v4263, 0
    %4365 = vmatpush.bf16.xpose.msra.mxu0 %v4291
    %4366 = vmatpush.bf16.xpose.msra.mxu0 %v4288
    %4367 = vmatpush.bf16.xpose.msra.mxu0 %v4285
    %4368 = vmatpush.bf16.xpose.msra.mxu0 %v4282
    %4369 = vmatpush.bf16.xpose.msra.mxu0 %v4279
    %4370 = vmatpush.bf16.xpose.msra.mxu0 %v4276
    %4371 = vmatpush.bf16.xpose.msra.mxu0 %v4273
    %4372 = vmatpush.bf16.xpose.msra.mxu0 %v4270
    %4373 = vmatmul.bf16.gmra.mxu0 %v4267
    %v4374 = vpop.f32.mrf.mxu0
    %v4375 = vadd.f32 0.0, %v4374
    %v4376 = vpop.f32.mrf.mxu0
    %4377 = vdwg.mxu0
    %4378 = vmatpush.bf16.xpose.msra.mxu0 %v4315
    %4379 = vmatpush.bf16.xpose.msra.mxu0 %v4312
    %4380 = vmatpush.bf16.xpose.msra.mxu0 %v4309
    %4381 = vmatpush.bf16.xpose.msra.mxu0 %v4306
    %4382 = vmatpush.bf16.xpose.msra.mxu0 %v4303
    %4383 = vmatpush.bf16.xpose.msra.mxu0 %v4300
    %4384 = vmatpush.bf16.xpose.msra.mxu0 %v4297
    %4385 = vmatpush.bf16.xpose.msra.mxu0 %v4294
    %4386 = vmatmul.bf16.gmra.mxu0 %v4267
    %v4387 = vpop.f32.mrf.mxu0
    %v4388 = vadd.f32 0.0, %v4387
    %v4389 = vpop.f32.mrf.mxu0
    %4390 = vdwg.mxu0
    %4391 = vmatpush.bf16.xpose.msra.mxu0 %v4339
    %4392 = vmatpush.bf16.xpose.msra.mxu0 %v4336
    %4393 = vmatpush.bf16.xpose.msra.mxu0 %v4333
    %4394 = vmatpush.bf16.xpose.msra.mxu0 %v4330
    %4395 = vmatpush.bf16.xpose.msra.mxu0 %v4327
    %4396 = vmatpush.bf16.xpose.msra.mxu0 %v4324
    %4397 = vmatpush.bf16.xpose.msra.mxu0 %v4321
    %4398 = vmatpush.bf16.xpose.msra.mxu0 %v4318
    %4399 = vmatmul.bf16.gmra.mxu0 %v4267
    %v4400 = vpop.f32.mrf.mxu0
    %v4401 = vadd.f32 0.0, %v4400
    %v4402 = vpop.f32.mrf.mxu0
    %4403 = vdwg.mxu0
    %4404 = vmatpush.bf16.xpose.msra.mxu0 %v4363
    %4405 = vmatpush.bf16.xpose.msra.mxu0 %v4360
    %4406 = vmatpush.bf16.xpose.msra.mxu0 %v4357
    %4407 = vmatpush.bf16.xpose.msra.mxu0 %v4354
    %4408 = vmatpush.bf16.xpose.msra.mxu0 %v4351
    %4409 = vmatpush.bf16.xpose.msra.mxu0 %v4348
    %4410 = vmatpush.bf16.xpose.msra.mxu0 %v4345
    %4411 = vmatpush.bf16.xpose.msra.mxu0 %v4342
    %4412 = vmatmul.bf16.gmra.mxu0 %v4267
    %v4413 = vpop.f32.mrf.mxu0
    %v4414 = vadd.f32 0.0, %v4413
    %v4415 = vpop.f32.mrf.mxu0
    %4416 = vdwg.mxu0
    %v4417 = vadd.f32 %v4375, %v4388
    %v4418 = vadd.f32 %v4417, %v4401
    %v4419 = vadd.f32 %v4418, %v4414
    %4420 = vadd.xlane.f32.xlu0 %v4419
    %v4421 = vpop.xlane.xlu0 %4420
    %v4422 = vrcp.pop 512.0
    %v4423 = vmul.f32 512.0, %v4422
    %v4424 = vsub.f32 1.0, %v4423
    %v4425 = vmul.f32 %v4422, %v4424
    %v4426 = vadd.f32 %v4422, %v4425
    %vm4427 = vweird.f32 %v4422
    %v4428 = vsel %vm4427, %v4422, %v4426
    %v4429 = vmul.f32 %v4421, %v4428
    %v4430 = vsub.f32 %v4375, %v4429
    %v4431 = vsub.f32 %v4388, %v4429
    %v4432 = vsub.f32 %v4401, %v4429
    %v4433 = vsub.f32 %v4414, %v4429
    %v4434 = vmul.f32 %v4430, %v4430
    %v4435 = vmul.f32 %v4431, %v4431
    %v4436 = vmul.f32 %v4432, %v4432
    %v4437 = vmul.f32 %v4433, %v4433
    %v4438 = vadd.f32 %v4434, %v4435
    %v4439 = vadd.f32 %v4438, %v4436
    %v4440 = vadd.f32 %v4439, %v4437
    %4441 = vadd.xlane.f32.xlu0 %v4440
    %v4442 = vpop.xlane.xlu0 %4441
    %v4443 = vmul.f32 %v4442, %v4428
    %v4444 = vadd.f32 %v4443, 1e-05
    %v4445 = vrsqrt.pop %v4444
    %v4446 = vmul.f32 %v4445, %v4444
    %v4447 = vmul.f32 %v4446, %v4445
    %v4448 = vmul.f32 0.5, %v4447
    %v4449 = vsub.f32 1.5, %v4448
    %v4450 = vmul.f32 %v4445, %v4449
    %vm4451 = vweird.f32 %v4444
    %vm4452 = vweird.f32 %v4445
    %vm4453 = vmor %vm4451, %vm4452
    %v4454 = vsel %vm4453, %v4445, %v4450
    %v4455 = vmul.f32 %v4430, %v4454
    %v4456 = vmul.f32 %v4431, %v4454
    %v4457 = vmul.f32 %v4432, %v4454
    %v4458 = vmul.f32 %v4433, %v4454
    %v4459 = vld [vmem:[%s7] sm:$0xff]
    %4461 = vset.pattern.permute.xlu0 0
    %4462 = vperm.xlu0 %4461, %v4459
    %v4463 = vpop.permute.xlu0 %4462
    %v4465 = vmul.f32 %v4455, %v4463
    %v4466 = vmul.f32 %v4456, %v4463
    %v4467 = vmul.f32 %v4457, %v4463
    %v4468 = vmul.f32 %v4458, %v4463
    %v4469 = vld [vmem:[%s8] sm:$0xff]
    %4471 = vset.pattern.permute.xlu0 0
    %4472 = vperm.xlu0 %4471, %v4469
    %v4473 = vpop.permute.xlu0 %4472
    %v4475 = vadd.f32 %v4465, %v4473
    %v4476 = vadd.f32 %v4466, %v4473
    %v4477 = vadd.f32 %v4467, %v4473
    %v4478 = vadd.f32 %v4468, %v4473
    %v4479 = vmax.f32 %v4475, 0.0
    %v4480 = vmax.f32 %v4476, 0.0
    %v4481 = vmax.f32 %v4477, 0.0
    %v4482 = vmax.f32 %v4478, 0.0
    %4483 = vst [vmem:[%s9] sm:$0xff] %v4479
    %4484 = vst [vmem:[%s9 + $0x8] sm:$0xff] %v4480
    %4485 = vst [vmem:[%s9 + $0x10] sm:$0xff] %v4481
    %4486 = vst [vmem:[%s9 + $0x18] sm:$0xff] %v4482
    // Predicated region
    $region38: #{_lambda_.1} parent=1 // pred_check
      _
    $region39: #{_lambda_.1} parent=1 // pred_check_branch
      %4488 = sbr.rel (0) target = $region41
    $region40: #{_lambda_.1} parent=1 // pred_region
      _
    $region41: #{_lambda_.1} parent=1 // pred_fallthru
      _
    // Predicated region
    $region42: #{_lambda_.1} parent=1 // pred_check
      _
    $region43: #{_lambda_.1} parent=1 // pred_check_branch
      %4490 = sbr.rel (0) target = $region45
    $region44: #{_lambda_.1} parent=1 // pred_region
      %4492 = vsyncadd [#allocation5], 0
      %s4493 = sshll.u32 [#allocation4], 4
      %s4494 = int_to_ptr.vmem [resolvable:$true] %s4493
      %s4495 = sshll.u32 %s10, 4
      %s4496 = int_to_ptr.hbm [resolvable:$true] %s4495
      %4501 = dma.vmem_to_hbm [thread:$0]  %s4494, 512, %s4496, [#allocation5], 128, 128, 8
    $region45: #{_lambda_.1} parent=1 // pred_fallthru
      _
    // Predicated region
    $region46: #{_lambda_.1} parent=1 // pred_check
      _
    $region47: #{_lambda_.1} parent=1 // pred_check_branch
      %4503 = sbr.rel (0) target = $region49
    $region48: #{_lambda_.1} parent=1 // pred_region
      _
    $region49: #{_lambda_.1} parent=1 // pred_fallthru
      _
    // Predicated region
    $region50: #{_lambda_.1} parent=1 // pred_check
      _
    $region51: #{_lambda_.1} parent=1 // pred_check_branch
      %4505 = sbr.rel (0) target = $region53
    $region52: #{_lambda_.1} parent=1 // pred_region
      %4507 = dma.done [#allocation5], 512
    $region53: #{_lambda_.1} parent=1 // pred_fallthru
      _
    %4508 = vsyncpa [#allocation5], 1

</llo_original>
